<compile_context>
chip_gen: v6e
topology: v6e:2x2x1
jax: 0.10.0
libtpu: 0.0.40
codegen_flags: <defaults>
</compile_context>

<pallas_src>
import math

import jax
import jax.numpy as jnp
from jax.experimental import pallas as pl
from jax.experimental.pallas import tpu as pltpu


DIM = 196         # token dimension (hard-coded in the module: dim = 196)
HIDDEN = 512      # hidden_dim = 512
LN_EPS = 1e-5     # nn.LayerNorm default eps


def _gelu_exact(x):
    # PyTorch nn.GELU() default = exact erf formulation.
    return 0.5 * x * (1.0 + jax.lax.erf(x * (1.0 / math.sqrt(2.0))))


def tokenmix_kernel(x_ref, gamma_ref, beta_ref,
                    w1_ref, b1_ref, w2_ref, b2_ref, w3_ref, b3_ref,
                    o_ref):
    """One grid step: `bt` batch elements in native (bt, P=196, C) layout.

    Per batch element b:
      xn = LayerNorm_C(x[b])                       (P, C), C on lanes
      y  = W3 @ gelu(W2 @ gelu(W1 @ xn + b1) + b2) + b3   (P, C)
      o[b] = x[b] + y
    Weights keep the PyTorch (out_features, in_features) layout, i.e. the
    MXU-natural (M, K) layout, so there are no transposes at all.
    """
    bt = x_ref.shape[0]
    mm_dtype = w1_ref.dtype

    # Loop-invariant parameter loads (hoisted out of the batch loop).
    gamma = gamma_ref[...]            # (1, C)      f32
    beta = beta_ref[...]              # (1, C)      f32
    w1 = w1_ref[...]                  # (512, 196)  mm_dtype
    w2 = w2_ref[...]                  # (512, 512)  mm_dtype
    w3 = w3_ref[...]                  # (196, 512)  mm_dtype
    b1 = b1_ref[...]                  # (512, 1)    f32
    b2 = b2_ref[...]                  # (512, 1)    f32
    b3 = b3_ref[...]                  # (196, 1)    f32

    @pl.loop(0, bt)
    def _(b):
        x = x_ref[b]                                       # (196, C) f32

        # ---- LayerNorm over the channel (lane) axis ------------------------
        mu = jnp.mean(x, axis=-1, keepdims=True)           # (196, 1)
        d = x - mu
        var = jnp.mean(d * d, axis=-1, keepdims=True)      # biased variance
        xn = d * jax.lax.rsqrt(var + LN_EPS) * gamma + beta  # (196, C) f32

        # ---- token-mixing MLP: left-multiplies, N = C on lanes -------------
        h = jnp.dot(w1, xn.astype(mm_dtype),
                    preferred_element_type=jnp.float32) + b1   # (512, C) f32
        h = _gelu_exact(h)
        h = jnp.dot(w2, h.astype(mm_dtype),
                    preferred_element_type=jnp.float32) + b2   # (512, C) f32
        h = _gelu_exact(h)
        y = jnp.dot(w3, h.astype(mm_dtype),
                    preferred_element_type=jnp.float32) + b3   # (196, C) f32

        # ---- residual in f32, lane-dense store ------------------------------
        o_ref[b] = (x + y).astype(o_ref.dtype)


def _pick_block_batch(B, C):
    """Batch block: enough rows of work per step to amortize grid overhead,
    while keeping >=2 grid steps when possible (megacore / pipelining)."""
    divs = [d for d in range(1, B + 1) if B % d == 0]
    bt = divs[-1]
    for d in divs:
        if d * C >= 256:
            bt = d
            break
    if B // bt < 2:
        two_step = [d for d in divs if B // d >= 2]
        if two_step:
            bt = two_step[-1]
    return bt


def _pad2(shape, itemsize):
    """(8,128)-padded VMEM footprint of a 2-D array (estimate)."""
    r = ((shape[0] + 7) // 8) * 8
    c = ((shape[1] + 127) // 128) * 128
    return r * c * itemsize


def tokenmix_forward(x, params, *, matmul_dtype=jnp.bfloat16, block_batch=None):
    """x: (B, P=196, C) float32.  params: dict of weights (see init_params)."""
    B, P, C = x.shape
    assert P == DIM, f"token axis must be {DIM}, got {P}"
    x = x.astype(jnp.float32)

    gamma = params["gamma"].astype(jnp.float32).reshape(1, C)
    beta = params["beta"].astype(jnp.float32).reshape(1, C)
    # Weights stay in the PyTorch (out_features, in_features) layout.
    w1 = params["w1"].astype(matmul_dtype)                 # (512, 196)
    w2 = params["w2"].astype(matmul_dtype)                 # (512, 512)
    w3 = params["w3"].astype(matmul_dtype)                 # (196, 512)
    b1 = params["b1"].astype(jnp.float32).reshape(HIDDEN, 1)
    b2 = params["b2"].astype(jnp.float32).reshape(HIDDEN, 1)
    b3 = params["b3"].astype(jnp.float32).reshape(DIM, 1)

    bt = block_batch if block_batch is not None else _pick_block_batch(B, C)
    assert B % bt == 0
    grid = (B // bt,)

    # Explicit VMEM budget: double-buffered in/out blocks + (double-buffered)
    # params + per-batch-iteration intermediates, plus headroom; clamped to
    # stay inside every chip's physical VMEM.
    ms = jnp.dtype(matmul_dtype).itemsize
    x_block = bt * _pad2((DIM, C), 4)
    w_bytes = (_pad2((HIDDEN, DIM), ms) + _pad2((HIDDEN, HIDDEN), ms)
               + _pad2((DIM, HIDDEN), ms))
    small = 2 * _pad2((1, C), 4) + 2 * _pad2((HIDDEN, 1), 4) + _pad2((DIM, 1), 4)
    interm = (4 * _pad2((DIM, C), 4) + 4 * _pad2((HIDDEN, C), 4)
              + _pad2((DIM, C), ms) + 2 * _pad2((HIDDEN, C), ms))
    vmem_need = 4 * x_block + 2 * (w_bytes + small) + interm
    vmem_limit = int(min(max(vmem_need + (8 << 20), 16 << 20), 56 << 20))

    const2 = lambda i: (0, 0)

    return pl.pallas_call(
        tokenmix_kernel,
        out_shape=jax.ShapeDtypeStruct((B, DIM, C), jnp.float32),
        grid_spec=pltpu.PrefetchScalarGridSpec(
            num_scalar_prefetch=0,
            grid=grid,
            in_specs=[
                pl.BlockSpec((bt, DIM, C), lambda i: (i, 0, 0)),   # x (native layout)
                pl.BlockSpec((1, C), const2),                      # gamma
                pl.BlockSpec((1, C), const2),                      # beta
                pl.BlockSpec((HIDDEN, DIM), const2),               # W1 (512, 196)
                pl.BlockSpec((HIDDEN, 1), const2),                 # b1
                pl.BlockSpec((HIDDEN, HIDDEN), const2),            # W2 (512, 512)
                pl.BlockSpec((HIDDEN, 1), const2),                 # b2
                pl.BlockSpec((DIM, HIDDEN), const2),               # W3 (196, 512)
                pl.BlockSpec((DIM, 1), const2),                    # b3
            ],
            out_specs=pl.BlockSpec((bt, DIM, C), lambda i: (i, 0, 0)),
        ),
        compiler_params=pltpu.CompilerParams(
            dimension_semantics=("parallel",),
            vmem_limit_bytes=vmem_limit,
        ),
    )(x, gamma, beta, w1, b1, w2, b2, w3, b3)


def init_params(key, n_patch_channels):
    """Deterministic synthetic init (shapes match the PyTorch module)."""
    ks = jax.random.split(key, 8)
    scale = 0.02
    return {
        "gamma": jnp.ones((n_patch_channels,), jnp.float32),
        "beta": jnp.zeros((n_patch_channels,), jnp.float32),
        "w1": scale * jax.random.normal(ks[0], (HIDDEN, DIM), jnp.float32),
        "b1": scale * jax.random.normal(ks[1], (HIDDEN,), jnp.float32),
        "w2": scale * jax.random.normal(ks[2], (HIDDEN, HIDDEN), jnp.float32),
        "b2": scale * jax.random.normal(ks[3], (HIDDEN,), jnp.float32),
        "w3": scale * jax.random.normal(ks[4], (DIM, HIDDEN), jnp.float32),
        "b3": scale * jax.random.normal(ks[5], (DIM,), jnp.float32),
    }


def tokenmix_reference(x, params):
    """Pure-JAX reference replicating the PyTorch forward (all f32)."""
    mu = jnp.mean(x, axis=-1, keepdims=True)
    var = jnp.mean((x - mu) ** 2, axis=-1, keepdims=True)
    xn = (x - mu) / jnp.sqrt(var + LN_EPS)
    xn = xn * params["gamma"] + params["beta"]
    xt = jnp.swapaxes(xn, 1, 2)                            # (B, C, P)
    h = _gelu_exact(xt @ params["w1"].T + params["b1"])
    h = _gelu_exact(h @ params["w2"].T + params["b2"])
    y = h @ params["w3"].T + params["b3"]                  # (B, C, P)
    return x + jnp.swapaxes(y, 1, 2)


if __name__ == "__main__":
    key = jax.random.PRNGKey(0)
    k_x, k_p = jax.random.split(key)

    B = 2
    C = 32            # `np` argument of the module (LayerNorm dim); small test size
    x = jax.random.normal(k_x, (B, DIM, C), jnp.float32)   # (2, 196, 32)
    params = init_params(k_p, C)

    ref = tokenmix_reference(x, params)

    # Strict-parity path: f32 matmuls, must closely match the f32 reference.
    out_f32 = jax.block_until_ready(
        tokenmix_forward(x, params, matmul_dtype=jnp.float32))
    assert out_f32.shape == (B, DIM, C)
    assert jnp.allclose(out_f32, ref, atol=2e-4, rtol=2e-4)

    # Fast path (default): bf16 matmul inputs, f32 accumulation.  Looser
    # tolerance only because of the bf16 cast of weights/activations.
    out_bf16 = jax.block_until_ready(tokenmix_forward(x, params))
    assert out_bf16.shape == (B, DIM, C)
    assert jnp.allclose(out_bf16, ref, atol=3e-2, rtol=3e-2)

    print("KERNEL_OK")
</pallas_src>

<mosaic_0001>
module attributes {stable_mosaic.version = 11 : i64} {
  func.func @tokenmix_kernel(%arg0: i32, %arg1: memref<1x196x32xf32, #tpu.memory_space<vmem>>, %arg2: memref<1x32xf32, #tpu.memory_space<vmem>>, %arg3: memref<1x32xf32, #tpu.memory_space<vmem>>, %arg4: memref<512x196xf32, #tpu.memory_space<vmem>>, %arg5: memref<512x1xf32, #tpu.memory_space<vmem>>, %arg6: memref<512x512xf32, #tpu.memory_space<vmem>>, %arg7: memref<512x1xf32, #tpu.memory_space<vmem>>, %arg8: memref<196x512xf32, #tpu.memory_space<vmem>>, %arg9: memref<196x1xf32, #tpu.memory_space<vmem>>, %arg10: memref<1x196x32xf32, #tpu.memory_space<vmem>>) attributes {dimension_semantics = [#tpu.dimension_semantics<parallel>], iteration_bounds = array<i64: 2>, scalar_prefetch = 0 : i64, scratch_operands = 0 : i64, tpu.core_type = #tpu.core_type<tc>, window_params = [{transform_indices = @transform_0, window_bounds = array<i64: 1, 196, 32>}, {pipeline_mode = #tpu.pipeline_mode<synchronous>, transform_indices = @transform_1, window_bounds = array<i64: 1, 32>}, {pipeline_mode = #tpu.pipeline_mode<synchronous>, transform_indices = @transform_2, window_bounds = array<i64: 1, 32>}, {pipeline_mode = #tpu.pipeline_mode<synchronous>, transform_indices = @transform_3, window_bounds = array<i64: 512, 196>}, {pipeline_mode = #tpu.pipeline_mode<synchronous>, transform_indices = @transform_4, window_bounds = array<i64: 512, 1>}, {pipeline_mode = #tpu.pipeline_mode<synchronous>, transform_indices = @transform_5, window_bounds = array<i64: 512, 512>}, {pipeline_mode = #tpu.pipeline_mode<synchronous>, transform_indices = @transform_6, window_bounds = array<i64: 512, 1>}, {pipeline_mode = #tpu.pipeline_mode<synchronous>, transform_indices = @transform_7, window_bounds = array<i64: 196, 512>}, {pipeline_mode = #tpu.pipeline_mode<synchronous>, transform_indices = @transform_8, window_bounds = array<i64: 196, 1>}, {transform_indices = @transform_9, window_bounds = array<i64: 1, 196, 32>}]} {
    %c0 = arith.constant 0 : index
    %c0_0 = arith.constant 0 : index
    %0 = vector.load %arg2[%c0, %c0_0] : memref<1x32xf32, #tpu.memory_space<vmem>>, vector<1x32xf32>
    %c0_1 = arith.constant 0 : index
    %c0_2 = arith.constant 0 : index
    %1 = vector.load %arg3[%c0_1, %c0_2] : memref<1x32xf32, #tpu.memory_space<vmem>>, vector<1x32xf32>
    %c0_3 = arith.constant 0 : index
    %c0_4 = arith.constant 0 : index
    %2 = vector.load %arg4[%c0_3, %c0_4] : memref<512x196xf32, #tpu.memory_space<vmem>>, vector<512x196xf32>
    %c0_5 = arith.constant 0 : index
    %c0_6 = arith.constant 0 : index
    %3 = vector.load %arg6[%c0_5, %c0_6] : memref<512x512xf32, #tpu.memory_space<vmem>>, vector<512x512xf32>
    %c0_7 = arith.constant 0 : index
    %c0_8 = arith.constant 0 : index
    %4 = vector.load %arg8[%c0_7, %c0_8] : memref<196x512xf32, #tpu.memory_space<vmem>>, vector<196x512xf32>
    %c0_9 = arith.constant 0 : index
    %c0_10 = arith.constant 0 : index
    %5 = vector.load %arg5[%c0_9, %c0_10] : memref<512x1xf32, #tpu.memory_space<vmem>>, vector<512x1xf32>
    %c0_11 = arith.constant 0 : index
    %c0_12 = arith.constant 0 : index
    %6 = vector.load %arg7[%c0_11, %c0_12] : memref<512x1xf32, #tpu.memory_space<vmem>>, vector<512x1xf32>
    %c0_13 = arith.constant 0 : index
    %c0_14 = arith.constant 0 : index
    %7 = vector.load %arg9[%c0_13, %c0_14] : memref<196x1xf32, #tpu.memory_space<vmem>>, vector<196x1xf32>
    %c0_i32 = arith.constant 0 : i32
    %c1_i32 = arith.constant 1 : i32
    %8 = arith.muli %c0_i32, %c1_i32 : i32
    %c0_i32_15 = arith.constant 0 : i32
    %9 = arith.addi %c0_i32_15, %8 : i32
    %10 = arith.index_cast %9 : i32 to index
    %c0_16 = arith.constant 0 : index
    %c0_17 = arith.constant 0 : index
    %11 = vector.load %arg1[%10, %c0_16, %c0_17] : memref<1x196x32xf32, #tpu.memory_space<vmem>>, vector<1x196x32xf32>
    %12 = vector.shape_cast %11 : vector<1x196x32xf32> to vector<196x32xf32>
    %cst = arith.constant dense<0.000000e+00> : vector<196xf32>
    %13 = vector.multi_reduction <add>, %12, %cst [1] : vector<196x32xf32> to vector<196xf32>
    %14 = vector.shape_cast %13 : vector<196xf32> to vector<196x1xf32>
    %cst_18 = arith.constant 3.200000e+01 : f32
    %15 = vector.broadcast %cst_18 : f32 to vector<196x1xf32>
    %16 = arith.divf %14, %15 : vector<196x1xf32>
    %17 = vector.broadcast %16 : vector<196x1xf32> to vector<196x32xf32>
    %18 = arith.subf %12, %17 : vector<196x32xf32>
    %19 = arith.mulf %18, %18 : vector<196x32xf32>
    %cst_19 = arith.constant dense<0.000000e+00> : vector<196xf32>
    %20 = vector.multi_reduction <add>, %19, %cst_19 [1] : vector<196x32xf32> to vector<196xf32>
    %21 = vector.shape_cast %20 : vector<196xf32> to vector<196x1xf32>
    %cst_20 = arith.constant 3.200000e+01 : f32
    %22 = vector.broadcast %cst_20 : f32 to vector<196x1xf32>
    %23 = arith.divf %21, %22 : vector<196x1xf32>
    %cst_21 = arith.constant 9.99999974E-6 : f32
    %24 = vector.broadcast %cst_21 : f32 to vector<196x1xf32>
    %25 = arith.addf %23, %24 : vector<196x1xf32>
    %26 = math.rsqrt %25 : vector<196x1xf32>
    %27 = vector.broadcast %26 : vector<196x1xf32> to vector<196x32xf32>
    %28 = arith.mulf %18, %27 : vector<196x32xf32>
    %29 = vector.broadcast %0 : vector<1x32xf32> to vector<196x32xf32>
    %30 = arith.mulf %28, %29 : vector<196x32xf32>
    %31 = vector.broadcast %1 : vector<1x32xf32> to vector<196x32xf32>
    %32 = arith.addf %30, %31 : vector<196x32xf32>
    %cst_22 = arith.constant dense<0.000000e+00> : vector<512x32xf32>
    %33 = tpu.matmul %2, %32, %cst_22 {dimension_numbers = #tpu.dot_dimension_numbers<[1], [0], [0], [1], [0, 0, 1, 1], [], []>} : vector<512x196xf32>, vector<196x32xf32>, vector<512x32xf32> -> vector<512x32xf32>
    %34 = vector.broadcast %5 : vector<512x1xf32> to vector<512x32xf32>
    %35 = arith.addf %33, %34 : vector<512x32xf32>
    %cst_23 = arith.constant 5.000000e-01 : f32
    %36 = vector.broadcast %cst_23 : f32 to vector<512x32xf32>
    %37 = arith.mulf %36, %35 : vector<512x32xf32>
    %cst_24 = arith.constant 0.707106769 : f32
    %38 = vector.broadcast %cst_24 : f32 to vector<512x32xf32>
    %39 = arith.mulf %35, %38 : vector<512x32xf32>
    %40 = math.erf %39 : vector<512x32xf32>
    %cst_25 = arith.constant 1.000000e+00 : f32
    %41 = vector.broadcast %cst_25 : f32 to vector<512x32xf32>
    %42 = arith.addf %41, %40 : vector<512x32xf32>
    %43 = arith.mulf %37, %42 : vector<512x32xf32>
    %cst_26 = arith.constant dense<0.000000e+00> : vector<512x32xf32>
    %44 = tpu.matmul %3, %43, %cst_26 {dimension_numbers = #tpu.dot_dimension_numbers<[1], [0], [0], [1], [0, 0, 1, 1], [], []>} : vector<512x512xf32>, vector<512x32xf32>, vector<512x32xf32> -> vector<512x32xf32>
    %45 = vector.broadcast %6 : vector<512x1xf32> to vector<512x32xf32>
    %46 = arith.addf %44, %45 : vector<512x32xf32>
    %cst_27 = arith.constant 5.000000e-01 : f32
    %47 = vector.broadcast %cst_27 : f32 to vector<512x32xf32>
    %48 = arith.mulf %47, %46 : vector<512x32xf32>
    %cst_28 = arith.constant 0.707106769 : f32
    %49 = vector.broadcast %cst_28 : f32 to vector<512x32xf32>
    %50 = arith.mulf %46, %49 : vector<512x32xf32>
    %51 = math.erf %50 : vector<512x32xf32>
    %cst_29 = arith.constant 1.000000e+00 : f32
    %52 = vector.broadcast %cst_29 : f32 to vector<512x32xf32>
    %53 = arith.addf %52, %51 : vector<512x32xf32>
    %54 = arith.mulf %48, %53 : vector<512x32xf32>
    %cst_30 = arith.constant dense<0.000000e+00> : vector<196x32xf32>
    %55 = tpu.matmul %4, %54, %cst_30 {dimension_numbers = #tpu.dot_dimension_numbers<[1], [0], [0], [1], [0, 0, 1, 1], [], []>} : vector<196x512xf32>, vector<512x32xf32>, vector<196x32xf32> -> vector<196x32xf32>
    %56 = vector.broadcast %7 : vector<196x1xf32> to vector<196x32xf32>
    %57 = arith.addf %55, %56 : vector<196x32xf32>
    %58 = arith.addf %12, %57 : vector<196x32xf32>
    %59 = arith.index_cast %9 : i32 to index
    %c0_31 = arith.constant 0 : index
    %c0_32 = arith.constant 0 : index
    %60 = vector.load %arg10[%59, %c0_31, %c0_32] : memref<1x196x32xf32, #tpu.memory_space<vmem>>, vector<1x196x32xf32>
    %61 = vector.shape_cast %60 : vector<1x196x32xf32> to vector<196x32xf32>
    %62 = vector.shape_cast %58 : vector<196x32xf32> to vector<1x196x32xf32>
    tpu.vector_store %arg10[%59, %c0_31, %c0_32], %62 {strides = array<i32>} : memref<1x196x32xf32, #tpu.memory_space<vmem>>, vector<1x196x32xf32>,
    %c1_i32_33 = arith.constant 1 : i32
    return
  }
  func.func @transform_0(%arg0: i32) -> (i32, i32, i32) {
    %c0_i32 = arith.constant 0 : i32
    %c0_i32_0 = arith.constant 0 : i32
    %c0_i32_1 = arith.constant 0 : i32
    return %arg0, %c0_i32, %c0_i32_0 : i32, i32, i32
  }
  func.func @transform_1(%arg0: i32) -> (i32, i32) {
    %c0_i32 = arith.constant 0 : i32
    %c0_i32_0 = arith.constant 0 : i32
    %c0_i32_1 = arith.constant 0 : i32
    return %c0_i32, %c0_i32_0 : i32, i32
  }
  func.func @transform_2(%arg0: i32) -> (i32, i32) {
    %c0_i32 = arith.constant 0 : i32
    %c0_i32_0 = arith.constant 0 : i32
    %c0_i32_1 = arith.constant 0 : i32
    return %c0_i32, %c0_i32_0 : i32, i32
  }
  func.func @transform_3(%arg0: i32) -> (i32, i32) {
    %c0_i32 = arith.constant 0 : i32
    %c0_i32_0 = arith.constant 0 : i32
    %c0_i32_1 = arith.constant 0 : i32
    return %c0_i32, %c0_i32_0 : i32, i32
  }
  func.func @transform_4(%arg0: i32) -> (i32, i32) {
    %c0_i32 = arith.constant 0 : i32
    %c0_i32_0 = arith.constant 0 : i32
    %c0_i32_1 = arith.constant 0 : i32
    return %c0_i32, %c0_i32_0 : i32, i32
  }
  func.func @transform_5(%arg0: i32) -> (i32, i32) {
    %c0_i32 = arith.constant 0 : i32
    %c0_i32_0 = arith.constant 0 : i32
    %c0_i32_1 = arith.constant 0 : i32
    return %c0_i32, %c0_i32_0 : i32, i32
  }
  func.func @transform_6(%arg0: i32) -> (i32, i32) {
    %c0_i32 = arith.constant 0 : i32
    %c0_i32_0 = arith.constant 0 : i32
    %c0_i32_1 = arith.constant 0 : i32
    return %c0_i32, %c0_i32_0 : i32, i32
  }
  func.func @transform_7(%arg0: i32) -> (i32, i32) {
    %c0_i32 = arith.constant 0 : i32
    %c0_i32_0 = arith.constant 0 : i32
    %c0_i32_1 = arith.constant 0 : i32
    return %c0_i32, %c0_i32_0 : i32, i32
  }
  func.func @transform_8(%arg0: i32) -> (i32, i32) {
    %c0_i32 = arith.constant 0 : i32
    %c0_i32_0 = arith.constant 0 : i32
    %c0_i32_1 = arith.constant 0 : i32
    return %c0_i32, %c0_i32_0 : i32, i32
  }
  func.func @transform_9(%arg0: i32) -> (i32, i32, i32) {
    %c0_i32 = arith.constant 0 : i32
    %c0_i32_0 = arith.constant 0 : i32
    %c0_i32_1 = arith.constant 0 : i32
    return %arg0, %c0_i32, %c0_i32_0 : i32, i32, i32
  }
}

</mosaic_0001>

<llo_original>
// kernel: tpu_custom_call.1
$region0: #{tpu_custom_call.1}
  #allocation0 [shape = 'u32[]', space=smem, size = 0x4, offset = 0x4, fixed_abs, tag = 'smem constant byte address 0x4 - core index']
  #allocation1 [shape = 'u32[144,128]{1,0:T(1,128)}', space=vmem, size = 0x12000, scoped, tag = 'internal scratch']
  %s0 = inlined_call_operand.vmem [shape: f32[2,196,32], index: 0, kind: input, shape index: {}]
  %s1 = inlined_call_operand.vmem [shape: f32[1,32], index: 1, kind: input, shape index: {}]
  %s2 = inlined_call_operand.vmem [shape: f32[1,32], index: 2, kind: input, shape index: {}]
  %s3 = inlined_call_operand.vmem [shape: f32[512,196], index: 3, kind: input, shape index: {}]
  %s4 = inlined_call_operand.vmem [shape: f32[512,1], index: 4, kind: input, shape index: {}]
  %s5 = inlined_call_operand.vmem [shape: f32[512,512], index: 5, kind: input, shape index: {}]
  %s6 = inlined_call_operand.vmem [shape: f32[512,1], index: 6, kind: input, shape index: {}]
  %s7 = inlined_call_operand.vmem [shape: f32[196,512], index: 7, kind: input, shape index: {}]
  %s8 = inlined_call_operand.vmem [shape: f32[196,1], index: 8, kind: input, shape index: {}]
  %s9 = inlined_call_operand.vmem [shape: f32[2,196,32], index: 9, kind: output, shape index: {}]
  %s10 = sld [smem:[#allocation0]]
  $region69: #{tpu_custom_call.1} parent=0
    _
  %s12 = ssub.s32 1, %s10
  %s13 = scalar_select 0, %s12, %s10
  loop: start=0, step=1, limit=4
  $region2: #{tpu_custom_call.1} parent=0 // loop_pre_header
    _
  $region3: #{tpu_custom_call.1} parent=0 // loop_header
    %s15 = sphi 0, %s19
    %p16 = scmp.ge.s32.totalorder %s15, 4
    %s25 = sphi 0, %s27
    %s28 = sphi 0, %s25
    %s29 = sphi 0, %s28
    %s45 = sphi 0, %s29
    %s49 = sphi 0, %s49
    %s51 = sphi 0, %s49
    %s52 = sphi 0, %s51
    %s66 = sphi 0, %s52
    %s70 = sphi 0, %s70
    %s72 = sphi 0, %s70
    %s73 = sphi 0, %s72
    %s87 = sphi 0, %s73
    %s91 = sphi 0, %s91
    %s93 = sphi 0, %s91
    %s94 = sphi 0, %s93
    %s108 = sphi 0, %s94
    %s112 = sphi 0, %s112
    %s114 = sphi 0, %s112
    %s115 = sphi 0, %s114
    %s129 = sphi 0, %s115
    %s133 = sphi 0, %s133
    %s135 = sphi 0, %s133
    %s136 = sphi 0, %s135
    %s150 = sphi 0, %s136
    %s154 = sphi 0, %s154
    %s156 = sphi 0, %s154
    %s157 = sphi 0, %s156
    %s171 = sphi 0, %s157
    %s175 = sphi 0, %s175
    %s177 = sphi 0, %s175
    %s178 = sphi 0, %s177
    %s192 = sphi 0, %s178
    %s196 = sphi 0, %s196
    %s198 = sphi 0, %s196
    %s199 = sphi 0, %s198
    %s213 = sphi 0, %s199
    %s219 = sphi 0, %s221
    %s222 = sphi 0, %s219
    %s223 = sphi 0, %s222
    %s239 = sphi 0, %s223
  $region4: #{tpu_custom_call.1} parent=0 // loop_header_branch
    %18 = sbr.rel (%p16) target = $region8
  $region5: #{tpu_custom_call.1} parent=0 // loop_body
    %s20 = ssub.s32 %s15, 1
    %s21 = ssub.s32 %s15, 2
    %s22 = sadd.s32 %s15, 1
    %s23 = ssub.s32 %s15, %s22
    %p24 = scmp.eq.s32.totalorder %s23, 0
    %s26 = sadd.s32 %s25, 1
    %s27 = scalar_select %p24, %s25, %s26
    %p30 = pneg %p24
    %p31 = scmp.eq.s32.totalorder %s15, 1
    %p32 = por %p30, %p31
    %p33 = scmp.ne.s32.totalorder %s25, %s28
    %p34 = scmp.eq.s32.totalorder %s15, 0
    %p35 = por %p33, %p34
    %p36 = scmp.ne.s32.totalorder %s25, %s28
    %p37 = scmp.eq.s32.totalorder %s20, 1
    %p38 = por %p36, %p37
    %p39 = scmp.ne.s32.totalorder %s28, %s29
    %p40 = scmp.eq.s32.totalorder %s20, 0
    %p41 = por %p39, %p40
    %p42 = scmp.ne.s32.totalorder %s28, %s29
    %p43 = scmp.eq.s32.totalorder %s21, 1
    %p44 = por %p42, %p43
    %p46 = scmp.ne.s32.totalorder %s29, %s45
    %p47 = scmp.eq.s32.totalorder %s21, 0
    %p48 = por %p46, %p47
    %s50 = sadd.s32 %s49, 1
    %p53 = scmp.eq.s32.totalorder %s15, 1
    %p54 = scmp.ne.s32.totalorder %s49, %s51
    %p55 = scmp.eq.s32.totalorder %s15, 0
    %p56 = por %p54, %p55
    %p57 = scmp.ne.s32.totalorder %s49, %s51
    %p58 = scmp.eq.s32.totalorder %s20, 1
    %p59 = por %p57, %p58
    %p60 = scmp.ne.s32.totalorder %s51, %s52
    %p61 = scmp.eq.s32.totalorder %s20, 0
    %p62 = por %p60, %p61
    %p63 = scmp.ne.s32.totalorder %s51, %s52
    %p64 = scmp.eq.s32.totalorder %s21, 1
    %p65 = por %p63, %p64
    %p67 = scmp.ne.s32.totalorder %s52, %s66
    %p68 = scmp.eq.s32.totalorder %s21, 0
    %p69 = por %p67, %p68
    %s71 = sadd.s32 %s70, 1
    %p74 = scmp.eq.s32.totalorder %s15, 1
    %p75 = scmp.ne.s32.totalorder %s70, %s72
    %p76 = scmp.eq.s32.totalorder %s15, 0
    %p77 = por %p75, %p76
    %p78 = scmp.ne.s32.totalorder %s70, %s72
    %p79 = scmp.eq.s32.totalorder %s20, 1
    %p80 = por %p78, %p79
    %p81 = scmp.ne.s32.totalorder %s72, %s73
    %p82 = scmp.eq.s32.totalorder %s20, 0
    %p83 = por %p81, %p82
    %p84 = scmp.ne.s32.totalorder %s72, %s73
    %p85 = scmp.eq.s32.totalorder %s21, 1
    %p86 = por %p84, %p85
    %p88 = scmp.ne.s32.totalorder %s73, %s87
    %p89 = scmp.eq.s32.totalorder %s21, 0
    %p90 = por %p88, %p89
    %s92 = sadd.s32 %s91, 1
    %p95 = scmp.eq.s32.totalorder %s15, 1
    %p96 = scmp.ne.s32.totalorder %s91, %s93
    %p97 = scmp.eq.s32.totalorder %s15, 0
    %p98 = por %p96, %p97
    %p99 = scmp.ne.s32.totalorder %s91, %s93
    %p100 = scmp.eq.s32.totalorder %s20, 1
    %p101 = por %p99, %p100
    %p102 = scmp.ne.s32.totalorder %s93, %s94
    %p103 = scmp.eq.s32.totalorder %s20, 0
    %p104 = por %p102, %p103
    %p105 = scmp.ne.s32.totalorder %s93, %s94
    %p106 = scmp.eq.s32.totalorder %s21, 1
    %p107 = por %p105, %p106
    %p109 = scmp.ne.s32.totalorder %s94, %s108
    %p110 = scmp.eq.s32.totalorder %s21, 0
    %p111 = por %p109, %p110
    %s113 = sadd.s32 %s112, 1
    %p116 = scmp.eq.s32.totalorder %s15, 1
    %p117 = scmp.ne.s32.totalorder %s112, %s114
    %p118 = scmp.eq.s32.totalorder %s15, 0
    %p119 = por %p117, %p118
    %p120 = scmp.ne.s32.totalorder %s112, %s114
    %p121 = scmp.eq.s32.totalorder %s20, 1
    %p122 = por %p120, %p121
    %p123 = scmp.ne.s32.totalorder %s114, %s115
    %p124 = scmp.eq.s32.totalorder %s20, 0
    %p125 = por %p123, %p124
    %p126 = scmp.ne.s32.totalorder %s114, %s115
    %p127 = scmp.eq.s32.totalorder %s21, 1
    %p128 = por %p126, %p127
    %p130 = scmp.ne.s32.totalorder %s115, %s129
    %p131 = scmp.eq.s32.totalorder %s21, 0
    %p132 = por %p130, %p131
    %s134 = sadd.s32 %s133, 1
    %p137 = scmp.eq.s32.totalorder %s15, 1
    %p138 = scmp.ne.s32.totalorder %s133, %s135
    %p139 = scmp.eq.s32.totalorder %s15, 0
    %p140 = por %p138, %p139
    %p141 = scmp.ne.s32.totalorder %s133, %s135
    %p142 = scmp.eq.s32.totalorder %s20, 1
    %p143 = por %p141, %p142
    %p144 = scmp.ne.s32.totalorder %s135, %s136
    %p145 = scmp.eq.s32.totalorder %s20, 0
    %p146 = por %p144, %p145
    %p147 = scmp.ne.s32.totalorder %s135, %s136
    %p148 = scmp.eq.s32.totalorder %s21, 1
    %p149 = por %p147, %p148
    %p151 = scmp.ne.s32.totalorder %s136, %s150
    %p152 = scmp.eq.s32.totalorder %s21, 0
    %p153 = por %p151, %p152
    %s155 = sadd.s32 %s154, 1
    %p158 = scmp.eq.s32.totalorder %s15, 1
    %p159 = scmp.ne.s32.totalorder %s154, %s156
    %p160 = scmp.eq.s32.totalorder %s15, 0
    %p161 = por %p159, %p160
    %p162 = scmp.ne.s32.totalorder %s154, %s156
    %p163 = scmp.eq.s32.totalorder %s20, 1
    %p164 = por %p162, %p163
    %p165 = scmp.ne.s32.totalorder %s156, %s157
    %p166 = scmp.eq.s32.totalorder %s20, 0
    %p167 = por %p165, %p166
    %p168 = scmp.ne.s32.totalorder %s156, %s157
    %p169 = scmp.eq.s32.totalorder %s21, 1
    %p170 = por %p168, %p169
    %p172 = scmp.ne.s32.totalorder %s157, %s171
    %p173 = scmp.eq.s32.totalorder %s21, 0
    %p174 = por %p172, %p173
    %s176 = sadd.s32 %s175, 1
    %p179 = scmp.eq.s32.totalorder %s15, 1
    %p180 = scmp.ne.s32.totalorder %s175, %s177
    %p181 = scmp.eq.s32.totalorder %s15, 0
    %p182 = por %p180, %p181
    %p183 = scmp.ne.s32.totalorder %s175, %s177
    %p184 = scmp.eq.s32.totalorder %s20, 1
    %p185 = por %p183, %p184
    %p186 = scmp.ne.s32.totalorder %s177, %s178
    %p187 = scmp.eq.s32.totalorder %s20, 0
    %p188 = por %p186, %p187
    %p189 = scmp.ne.s32.totalorder %s177, %s178
    %p190 = scmp.eq.s32.totalorder %s21, 1
    %p191 = por %p189, %p190
    %p193 = scmp.ne.s32.totalorder %s178, %s192
    %p194 = scmp.eq.s32.totalorder %s21, 0
    %p195 = por %p193, %p194
    %s197 = sadd.s32 %s196, 1
    %p200 = scmp.eq.s32.totalorder %s15, 1
    %p201 = scmp.ne.s32.totalorder %s196, %s198
    %p202 = scmp.eq.s32.totalorder %s15, 0
    %p203 = por %p201, %p202
    %p204 = scmp.ne.s32.totalorder %s196, %s198
    %p205 = scmp.eq.s32.totalorder %s20, 1
    %p206 = por %p204, %p205
    %p207 = scmp.ne.s32.totalorder %s198, %s199
    %p208 = scmp.eq.s32.totalorder %s20, 0
    %p209 = por %p207, %p208
    %p210 = scmp.ne.s32.totalorder %s198, %s199
    %p211 = scmp.eq.s32.totalorder %s21, 1
    %p212 = por %p210, %p211
    %p214 = scmp.ne.s32.totalorder %s199, %s213
    %p215 = scmp.eq.s32.totalorder %s21, 0
    %p216 = por %p214, %p215
    %s217 = ssub.s32 %s15, %s22
    %p218 = scmp.eq.s32.totalorder %s217, 0
    %s220 = sadd.s32 %s219, 1
    %s221 = scalar_select %p218, %s219, %s220
    %p224 = pneg %p218
    %p225 = scmp.eq.s32.totalorder %s15, 1
    %p226 = por %p224, %p225
    %p227 = scmp.ne.s32.totalorder %s219, %s222
    %p228 = scmp.eq.s32.totalorder %s15, 0
    %p229 = por %p227, %p228
    %p230 = scmp.ne.s32.totalorder %s219, %s222
    %p231 = scmp.eq.s32.totalorder %s20, 1
    %p232 = por %p230, %p231
    %p233 = scmp.ne.s32.totalorder %s222, %s223
    %p234 = scmp.eq.s32.totalorder %s20, 0
    %p235 = por %p233, %p234
    %p236 = scmp.ne.s32.totalorder %s222, %s223
    %p237 = scmp.eq.s32.totalorder %s21, 1
    %p238 = por %p236, %p237
    %p240 = scmp.ne.s32.totalorder %s223, %s239
    %p241 = scmp.eq.s32.totalorder %s21, 0
    %p242 = por %p240, %p241
    %p243 = scmp.le.s32.totalorder 1, %s15
    %p244 = scmp.lt.s32.totalorder %s15, 3
    %p245 = pnand %p243, %p244
    %p246 = pneg %p245
    // Predicated region
    $region9: #{tpu_custom_call.1} parent=5 // pred_check
      _
    $region10: #{tpu_custom_call.1} parent=5 // pred_check_branch
      %248 = sbr.rel (%p245) target = $region12
    $region11: #{tpu_custom_call.1} parent=5 // pred_region
      %s249 = ssub.s32 %s15, 1
      // Predicated region
      $region13: #{tpu_custom_call.1} parent=11 // pred_check
        %p250 = pneg %p62
      $region14: #{tpu_custom_call.1} parent=11 // pred_check_branch
        %252 = sbr.rel (%p250) target = $region16
      $region15: #{tpu_custom_call.1} parent=11 // pred_region
        _
      $region16: #{tpu_custom_call.1} parent=11 // pred_fallthru
        _
      // Predicated region
      $region17: #{tpu_custom_call.1} parent=11 // pred_check
        %p253 = pneg %p83
      $region18: #{tpu_custom_call.1} parent=11 // pred_check_branch
        %255 = sbr.rel (%p253) target = $region20
      $region19: #{tpu_custom_call.1} parent=11 // pred_region
        _
      $region20: #{tpu_custom_call.1} parent=11 // pred_fallthru
        _
      // Predicated region
      $region21: #{tpu_custom_call.1} parent=11 // pred_check
        %p256 = pneg %p104
      $region22: #{tpu_custom_call.1} parent=11 // pred_check_branch
        %258 = sbr.rel (%p256) target = $region24
      $region23: #{tpu_custom_call.1} parent=11 // pred_region
        _
      $region24: #{tpu_custom_call.1} parent=11 // pred_fallthru
        _
      // Predicated region
      $region25: #{tpu_custom_call.1} parent=11 // pred_check
        %p259 = pneg %p125
      $region26: #{tpu_custom_call.1} parent=11 // pred_check_branch
        %261 = sbr.rel (%p259) target = $region28
      $region27: #{tpu_custom_call.1} parent=11 // pred_region
        _
      $region28: #{tpu_custom_call.1} parent=11 // pred_fallthru
        _
      // Predicated region
      $region29: #{tpu_custom_call.1} parent=11 // pred_check
        %p262 = pneg %p146
      $region30: #{tpu_custom_call.1} parent=11 // pred_check_branch
        %264 = sbr.rel (%p262) target = $region32
      $region31: #{tpu_custom_call.1} parent=11 // pred_region
        _
      $region32: #{tpu_custom_call.1} parent=11 // pred_fallthru
        _
      // Predicated region
      $region33: #{tpu_custom_call.1} parent=11 // pred_check
        %p265 = pneg %p167
      $region34: #{tpu_custom_call.1} parent=11 // pred_check_branch
        %267 = sbr.rel (%p265) target = $region36
      $region35: #{tpu_custom_call.1} parent=11 // pred_region
        _
      $region36: #{tpu_custom_call.1} parent=11 // pred_fallthru
        _
      // Predicated region
      $region37: #{tpu_custom_call.1} parent=11 // pred_check
        %p268 = pneg %p188
      $region38: #{tpu_custom_call.1} parent=11 // pred_check_branch
        %270 = sbr.rel (%p268) target = $region40
      $region39: #{tpu_custom_call.1} parent=11 // pred_region
        _
      $region40: #{tpu_custom_call.1} parent=11 // pred_fallthru
        _
      // Predicated region
      $region41: #{tpu_custom_call.1} parent=11 // pred_check
        %p271 = pneg %p209
      $region42: #{tpu_custom_call.1} parent=11 // pred_check_branch
        %273 = sbr.rel (%p271) target = $region44
      $region43: #{tpu_custom_call.1} parent=11 // pred_region
        _
      $region44: #{tpu_custom_call.1} parent=11 // pred_fallthru
        _
    $region12: #{tpu_custom_call.1} parent=5 // pred_fallthru
      _
    %p274 = scmp.lt.s32.totalorder %s15, 2
    // Predicated region
    $region45: #{tpu_custom_call.1} parent=5 // pred_check
      %p275 = pneg %p274
    $region46: #{tpu_custom_call.1} parent=5 // pred_check_branch
      %277 = sbr.rel (%p275) target = $region48
    $region47: #{tpu_custom_call.1} parent=5 // pred_region
      // Predicated region
      $region49: #{tpu_custom_call.1} parent=47 // pred_check
        %p278 = pneg %p35
      $region50: #{tpu_custom_call.1} parent=47 // pred_check_branch
        %280 = sbr.rel (%p278) target = $region52
      $region51: #{tpu_custom_call.1} parent=47 // pred_region
        %p281 = scmp.lt.s32.totalorder %s15, 1
        %s282 = scalar_select %p281, %s15, 1
        %s283 = smul.addr %s282, 25
        %s284 = smul.addr %s283, 8
        %s285 = scalar_lea.vmem %s0, %s284
      $region52: #{tpu_custom_call.1} parent=47 // pred_fallthru
        _
    $region48: #{tpu_custom_call.1} parent=5 // pred_fallthru
      _
    %p286 = scmp.le.s32.totalorder 1, %s15
    %p287 = scmp.lt.s32.totalorder %s15, 3
    %p288 = pnand %p286, %p287
    %p289 = pneg %p288
    // Predicated region
    $region53: #{tpu_custom_call.1} parent=5 // pred_check
      _
    $region54: #{tpu_custom_call.1} parent=5 // pred_check_branch
      %291 = sbr.rel (%p288) target = $region56
    $region55: #{tpu_custom_call.1} parent=5 // pred_region
      %s292 = ssub.s32 %s15, 1
      %p293 = scmp.lt.s32.totalorder %s20, 1
      %s294 = scalar_select %p293, %s20, 1
      %s295 = smul.addr %s294, 25
      %s296 = smul.addr %s295, 8
      %s297 = scalar_lea.vmem %s0, %s296
      %p298 = pneg %p41
      %p299 = pneg %p38
      %p300 = pneg %p62
      %p301 = pneg %p59
      %p302 = pneg %p83
      %p303 = pneg %p80
      %p304 = pneg %p104
      %p305 = pneg %p101
      %p306 = pneg %p125
      %p307 = pneg %p122
      %p308 = pneg %p146
      %p309 = pneg %p143
      %p310 = pneg %p167
      %p311 = pneg %p164
      %p312 = pneg %p188
      %p313 = pneg %p185
      %p314 = pneg %p209
      %p315 = pneg %p206
      %p316 = pneg %p235
      %p317 = pneg %p232
      %p318 = scmp.lt.s32.totalorder %s20, 1
      %s319 = scalar_select %p318, %s20, 1
      %s320 = smul.addr %s319, 25
      %s321 = smul.addr %s320, 8
      %s322 = scalar_lea.vmem %s9, %s321
      %p323 = scmp.lt.s32.totalorder %s20, 1
      %s324 = scalar_select %p323, %s20, 1
      %s325 = smul.addr %s324, 25
      %s326 = smul.addr %s325, 8
      %s327 = scalar_lea.vmem %s0, %s326
      %p328 = scmp.lt.s32.totalorder %s20, 1
      %s329 = scalar_select %p328, %s20, 1
      %s330 = smul.addr %s329, 25
      %s331 = smul.addr %s330, 8
      %s332 = scalar_lea.vmem %s9, %s331
      %v333 = vld [vmem:[%s1] sm:$0x1]
      %v334 = vld [vmem:[%s2] sm:$0x1]
      %v335 = vld [vmem:[%s3] sm:$0xff]
      %v336 = vld [vmem:[%s3 + $0x8] sm:$0xff]
      %v337 = vld [vmem:[%s3 + $0x10] sm:$0xff]
      %v338 = vld [vmem:[%s3 + $0x18] sm:$0xff]
      %v339 = vld [vmem:[%s3 + $0x20] sm:$0xff]
      %v340 = vld [vmem:[%s3 + $0x28] sm:$0xff]
      %v341 = vld [vmem:[%s3 + $0x30] sm:$0xff]
      %v342 = vld [vmem:[%s3 + $0x38] sm:$0xff]
      %v343 = vld [vmem:[%s3 + $0x40] sm:$0xff]
      %v344 = vld [vmem:[%s3 + $0x48] sm:$0xff]
      %v345 = vld [vmem:[%s3 + $0x50] sm:$0xff]
      %v346 = vld [vmem:[%s3 + $0x58] sm:$0xff]
      %v347 = vld [vmem:[%s3 + $0x60] sm:$0xff]
      %v348 = vld [vmem:[%s3 + $0x68] sm:$0xff]
      %v349 = vld [vmem:[%s3 + $0x70] sm:$0xff]
      %v350 = vld [vmem:[%s3 + $0x78] sm:$0xff]
      %v351 = vld [vmem:[%s3 + $0x80] sm:$0xff]
      %v352 = vld [vmem:[%s3 + $0x88] sm:$0xff]
      %v353 = vld [vmem:[%s3 + $0x90] sm:$0xff]
      %v354 = vld [vmem:[%s3 + $0x98] sm:$0xff]
      %v355 = vld [vmem:[%s3 + $0xa0] sm:$0xff]
      %v356 = vld [vmem:[%s3 + $0xa8] sm:$0xff]
      %v357 = vld [vmem:[%s3 + $0xb0] sm:$0xff]
      %v358 = vld [vmem:[%s3 + $0xb8] sm:$0xff]
      %v359 = vld [vmem:[%s3 + $0xc0] sm:$0xff]
      %v360 = vld [vmem:[%s3 + $0xc8] sm:$0xff]
      %v361 = vld [vmem:[%s3 + $0xd0] sm:$0xff]
      %v362 = vld [vmem:[%s3 + $0xd8] sm:$0xff]
      %v363 = vld [vmem:[%s3 + $0xe0] sm:$0xff]
      %v364 = vld [vmem:[%s3 + $0xe8] sm:$0xff]
      %v365 = vld [vmem:[%s3 + $0xf0] sm:$0xff]
      %v366 = vld [vmem:[%s3 + $0xf8] sm:$0xff]
      %v367 = vld [vmem:[%s3 + $0x100] sm:$0xff]
      %v368 = vld [vmem:[%s3 + $0x108] sm:$0xff]
      %v369 = vld [vmem:[%s3 + $0x110] sm:$0xff]
      %v370 = vld [vmem:[%s3 + $0x118] sm:$0xff]
      %v371 = vld [vmem:[%s3 + $0x120] sm:$0xff]
      %v372 = vld [vmem:[%s3 + $0x128] sm:$0xff]
      %v373 = vld [vmem:[%s3 + $0x130] sm:$0xff]
      %v374 = vld [vmem:[%s3 + $0x138] sm:$0xff]
      %v375 = vld [vmem:[%s3 + $0x140] sm:$0xff]
      %v376 = vld [vmem:[%s3 + $0x148] sm:$0xff]
      %v377 = vld [vmem:[%s3 + $0x150] sm:$0xff]
      %v378 = vld [vmem:[%s3 + $0x158] sm:$0xff]
      %v379 = vld [vmem:[%s3 + $0x160] sm:$0xff]
      %v380 = vld [vmem:[%s3 + $0x168] sm:$0xff]
      %v381 = vld [vmem:[%s3 + $0x170] sm:$0xff]
      %v382 = vld [vmem:[%s3 + $0x178] sm:$0xff]
      %v383 = vld [vmem:[%s3 + $0x180] sm:$0xff]
      %v384 = vld [vmem:[%s3 + $0x188] sm:$0xff]
      %v385 = vld [vmem:[%s3 + $0x190] sm:$0xff]
      %v386 = vld [vmem:[%s3 + $0x198] sm:$0xff]
      %v387 = vld [vmem:[%s3 + $0x1a0] sm:$0xff]
      %v388 = vld [vmem:[%s3 + $0x1a8] sm:$0xff]
      %v389 = vld [vmem:[%s3 + $0x1b0] sm:$0xff]
      %v390 = vld [vmem:[%s3 + $0x1b8] sm:$0xff]
      %v391 = vld [vmem:[%s3 + $0x1c0] sm:$0xff]
      %v392 = vld [vmem:[%s3 + $0x1c8] sm:$0xff]
      %v393 = vld [vmem:[%s3 + $0x1d0] sm:$0xff]
      %v394 = vld [vmem:[%s3 + $0x1d8] sm:$0xff]
      %v395 = vld [vmem:[%s3 + $0x1e0] sm:$0xff]
      %v396 = vld [vmem:[%s3 + $0x1e8] sm:$0xff]
      %v397 = vld [vmem:[%s3 + $0x1f0] sm:$0xff]
      %v398 = vld [vmem:[%s3 + $0x1f8] sm:$0xff]
      %v399 = vld [vmem:[%s3 + $0x200] sm:$0xff]
      %v400 = vld [vmem:[%s3 + $0x208] sm:$0xff]
      %v401 = vld [vmem:[%s3 + $0x210] sm:$0xff]
      %v402 = vld [vmem:[%s3 + $0x218] sm:$0xff]
      %v403 = vld [vmem:[%s3 + $0x220] sm:$0xff]
      %v404 = vld [vmem:[%s3 + $0x228] sm:$0xff]
      %v405 = vld [vmem:[%s3 + $0x230] sm:$0xff]
      %v406 = vld [vmem:[%s3 + $0x238] sm:$0xff]
      %v407 = vld [vmem:[%s3 + $0x240] sm:$0xff]
      %v408 = vld [vmem:[%s3 + $0x248] sm:$0xff]
      %v409 = vld [vmem:[%s3 + $0x250] sm:$0xff]
      %v410 = vld [vmem:[%s3 + $0x258] sm:$0xff]
      %v411 = vld [vmem:[%s3 + $0x260] sm:$0xff]
      %v412 = vld [vmem:[%s3 + $0x268] sm:$0xff]
      %v413 = vld [vmem:[%s3 + $0x270] sm:$0xff]
      %v414 = vld [vmem:[%s3 + $0x278] sm:$0xff]
      %v415 = vld [vmem:[%s3 + $0x280] sm:$0xff]
      %v416 = vld [vmem:[%s3 + $0x288] sm:$0xff]
      %v417 = vld [vmem:[%s3 + $0x290] sm:$0xff]
      %v418 = vld [vmem:[%s3 + $0x298] sm:$0xff]
      %v419 = vld [vmem:[%s3 + $0x2a0] sm:$0xff]
      %v420 = vld [vmem:[%s3 + $0x2a8] sm:$0xff]
      %v421 = vld [vmem:[%s3 + $0x2b0] sm:$0xff]
      %v422 = vld [vmem:[%s3 + $0x2b8] sm:$0xff]
      %v423 = vld [vmem:[%s3 + $0x2c0] sm:$0xff]
      %v424 = vld [vmem:[%s3 + $0x2c8] sm:$0xff]
      %v425 = vld [vmem:[%s3 + $0x2d0] sm:$0xff]
      %v426 = vld [vmem:[%s3 + $0x2d8] sm:$0xff]
      %v427 = vld [vmem:[%s3 + $0x2e0] sm:$0xff]
      %v428 = vld [vmem:[%s3 + $0x2e8] sm:$0xff]
      %v429 = vld [vmem:[%s3 + $0x2f0] sm:$0xff]
      %v430 = vld [vmem:[%s3 + $0x2f8] sm:$0xff]
      %v431 = vld [vmem:[%s3 + $0x300] sm:$0xff]
      %v432 = vld [vmem:[%s3 + $0x308] sm:$0xff]
      %v433 = vld [vmem:[%s3 + $0x310] sm:$0xff]
      %v434 = vld [vmem:[%s3 + $0x318] sm:$0xff]
      %v435 = vld [vmem:[%s3 + $0x320] sm:$0xff]
      %v436 = vld [vmem:[%s3 + $0x328] sm:$0xff]
      %v437 = vld [vmem:[%s3 + $0x330] sm:$0xff]
      %v438 = vld [vmem:[%s3 + $0x338] sm:$0xff]
      %v439 = vld [vmem:[%s3 + $0x340] sm:$0xff]
      %v440 = vld [vmem:[%s3 + $0x348] sm:$0xff]
      %v441 = vld [vmem:[%s3 + $0x350] sm:$0xff]
      %v442 = vld [vmem:[%s3 + $0x358] sm:$0xff]
      %v443 = vld [vmem:[%s3 + $0x360] sm:$0xff]
      %v444 = vld [vmem:[%s3 + $0x368] sm:$0xff]
      %v445 = vld [vmem:[%s3 + $0x370] sm:$0xff]
      %v446 = vld [vmem:[%s3 + $0x378] sm:$0xff]
      %v447 = vld [vmem:[%s3 + $0x380] sm:$0xff]
      %v448 = vld [vmem:[%s3 + $0x388] sm:$0xff]
      %v449 = vld [vmem:[%s3 + $0x390] sm:$0xff]
      %v450 = vld [vmem:[%s3 + $0x398] sm:$0xff]
      %v451 = vld [vmem:[%s3 + $0x3a0] sm:$0xff]
      %v452 = vld [vmem:[%s3 + $0x3a8] sm:$0xff]
      %v453 = vld [vmem:[%s3 + $0x3b0] sm:$0xff]
      %v454 = vld [vmem:[%s3 + $0x3b8] sm:$0xff]
      %v455 = vld [vmem:[%s3 + $0x3c0] sm:$0xff]
      %v456 = vld [vmem:[%s3 + $0x3c8] sm:$0xff]
      %v457 = vld [vmem:[%s3 + $0x3d0] sm:$0xff]
      %v458 = vld [vmem:[%s3 + $0x3d8] sm:$0xff]
      %v459 = vld [vmem:[%s3 + $0x3e0] sm:$0xff]
      %v460 = vld [vmem:[%s3 + $0x3e8] sm:$0xff]
      %v461 = vld [vmem:[%s3 + $0x3f0] sm:$0xff]
      %v462 = vld [vmem:[%s3 + $0x3f8] sm:$0xff]
      %v463 = vld [vmem:[%s5] sm:$0xff]
      %v464 = vld [vmem:[%s5 + $0x8] sm:$0xff]
      %v465 = vld [vmem:[%s5 + $0x10] sm:$0xff]
      %v466 = vld [vmem:[%s5 + $0x18] sm:$0xff]
      %v467 = vld [vmem:[%s5 + $0x20] sm:$0xff]
      %v468 = vld [vmem:[%s5 + $0x28] sm:$0xff]
      %v469 = vld [vmem:[%s5 + $0x30] sm:$0xff]
      %v470 = vld [vmem:[%s5 + $0x38] sm:$0xff]
      %v471 = vld [vmem:[%s5 + $0x40] sm:$0xff]
      %v472 = vld [vmem:[%s5 + $0x48] sm:$0xff]
      %v473 = vld [vmem:[%s5 + $0x50] sm:$0xff]
      %v474 = vld [vmem:[%s5 + $0x58] sm:$0xff]
      %v475 = vld [vmem:[%s5 + $0x60] sm:$0xff]
      %v476 = vld [vmem:[%s5 + $0x68] sm:$0xff]
      %v477 = vld [vmem:[%s5 + $0x70] sm:$0xff]
      %v478 = vld [vmem:[%s5 + $0x78] sm:$0xff]
      %v479 = vld [vmem:[%s5 + $0x80] sm:$0xff]
      %v480 = vld [vmem:[%s5 + $0x88] sm:$0xff]
      %v481 = vld [vmem:[%s5 + $0x90] sm:$0xff]
      %v482 = vld [vmem:[%s5 + $0x98] sm:$0xff]
      %v483 = vld [vmem:[%s5 + $0xa0] sm:$0xff]
      %v484 = vld [vmem:[%s5 + $0xa8] sm:$0xff]
      %v485 = vld [vmem:[%s5 + $0xb0] sm:$0xff]
      %v486 = vld [vmem:[%s5 + $0xb8] sm:$0xff]
      %v487 = vld [vmem:[%s5 + $0xc0] sm:$0xff]
      %v488 = vld [vmem:[%s5 + $0xc8] sm:$0xff]
      %v489 = vld [vmem:[%s5 + $0xd0] sm:$0xff]
      %v490 = vld [vmem:[%s5 + $0xd8] sm:$0xff]
      %v491 = vld [vmem:[%s5 + $0xe0] sm:$0xff]
      %v492 = vld [vmem:[%s5 + $0xe8] sm:$0xff]
      %v493 = vld [vmem:[%s5 + $0xf0] sm:$0xff]
      %v494 = vld [vmem:[%s5 + $0xf8] sm:$0xff]
      %v495 = vld [vmem:[%s5 + $0x100] sm:$0xff]
      %v496 = vld [vmem:[%s5 + $0x108] sm:$0xff]
      %v497 = vld [vmem:[%s5 + $0x110] sm:$0xff]
      %v498 = vld [vmem:[%s5 + $0x118] sm:$0xff]
      %v499 = vld [vmem:[%s5 + $0x120] sm:$0xff]
      %v500 = vld [vmem:[%s5 + $0x128] sm:$0xff]
      %v501 = vld [vmem:[%s5 + $0x130] sm:$0xff]
      %v502 = vld [vmem:[%s5 + $0x138] sm:$0xff]
      %v503 = vld [vmem:[%s5 + $0x140] sm:$0xff]
      %v504 = vld [vmem:[%s5 + $0x148] sm:$0xff]
      %v505 = vld [vmem:[%s5 + $0x150] sm:$0xff]
      %v506 = vld [vmem:[%s5 + $0x158] sm:$0xff]
      %v507 = vld [vmem:[%s5 + $0x160] sm:$0xff]
      %v508 = vld [vmem:[%s5 + $0x168] sm:$0xff]
      %v509 = vld [vmem:[%s5 + $0x170] sm:$0xff]
      %v510 = vld [vmem:[%s5 + $0x178] sm:$0xff]
      %v511 = vld [vmem:[%s5 + $0x180] sm:$0xff]
      %v512 = vld [vmem:[%s5 + $0x188] sm:$0xff]
      %v513 = vld [vmem:[%s5 + $0x190] sm:$0xff]
      %v514 = vld [vmem:[%s5 + $0x198] sm:$0xff]
      %v515 = vld [vmem:[%s5 + $0x1a0] sm:$0xff]
      %v516 = vld [vmem:[%s5 + $0x1a8] sm:$0xff]
      %v517 = vld [vmem:[%s5 + $0x1b0] sm:$0xff]
      %v518 = vld [vmem:[%s5 + $0x1b8] sm:$0xff]
      %v519 = vld [vmem:[%s5 + $0x1c0] sm:$0xff]
      %v520 = vld [vmem:[%s5 + $0x1c8] sm:$0xff]
      %v521 = vld [vmem:[%s5 + $0x1d0] sm:$0xff]
      %v522 = vld [vmem:[%s5 + $0x1d8] sm:$0xff]
      %v523 = vld [vmem:[%s5 + $0x1e0] sm:$0xff]
      %v524 = vld [vmem:[%s5 + $0x1e8] sm:$0xff]
      %v525 = vld [vmem:[%s5 + $0x1f0] sm:$0xff]
      %v526 = vld [vmem:[%s5 + $0x1f8] sm:$0xff]
      %v527 = vld [vmem:[%s5 + $0x200] sm:$0xff]
      %v528 = vld [vmem:[%s5 + $0x208] sm:$0xff]
      %v529 = vld [vmem:[%s5 + $0x210] sm:$0xff]
      %v530 = vld [vmem:[%s5 + $0x218] sm:$0xff]
      %v531 = vld [vmem:[%s5 + $0x220] sm:$0xff]
      %v532 = vld [vmem:[%s5 + $0x228] sm:$0xff]
      %v533 = vld [vmem:[%s5 + $0x230] sm:$0xff]
      %v534 = vld [vmem:[%s5 + $0x238] sm:$0xff]
      %v535 = vld [vmem:[%s5 + $0x240] sm:$0xff]
      %v536 = vld [vmem:[%s5 + $0x248] sm:$0xff]
      %v537 = vld [vmem:[%s5 + $0x250] sm:$0xff]
      %v538 = vld [vmem:[%s5 + $0x258] sm:$0xff]
      %v539 = vld [vmem:[%s5 + $0x260] sm:$0xff]
      %v540 = vld [vmem:[%s5 + $0x268] sm:$0xff]
      %v541 = vld [vmem:[%s5 + $0x270] sm:$0xff]
      %v542 = vld [vmem:[%s5 + $0x278] sm:$0xff]
      %v543 = vld [vmem:[%s5 + $0x280] sm:$0xff]
      %v544 = vld [vmem:[%s5 + $0x288] sm:$0xff]
      %v545 = vld [vmem:[%s5 + $0x290] sm:$0xff]
      %v546 = vld [vmem:[%s5 + $0x298] sm:$0xff]
      %v547 = vld [vmem:[%s5 + $0x2a0] sm:$0xff]
      %v548 = vld [vmem:[%s5 + $0x2a8] sm:$0xff]
      %v549 = vld [vmem:[%s5 + $0x2b0] sm:$0xff]
      %v550 = vld [vmem:[%s5 + $0x2b8] sm:$0xff]
      %v551 = vld [vmem:[%s5 + $0x2c0] sm:$0xff]
      %v552 = vld [vmem:[%s5 + $0x2c8] sm:$0xff]
      %v553 = vld [vmem:[%s5 + $0x2d0] sm:$0xff]
      %v554 = vld [vmem:[%s5 + $0x2d8] sm:$0xff]
      %v555 = vld [vmem:[%s5 + $0x2e0] sm:$0xff]
      %v556 = vld [vmem:[%s5 + $0x2e8] sm:$0xff]
      %v557 = vld [vmem:[%s5 + $0x2f0] sm:$0xff]
      %v558 = vld [vmem:[%s5 + $0x2f8] sm:$0xff]
      %v559 = vld [vmem:[%s5 + $0x300] sm:$0xff]
      %v560 = vld [vmem:[%s5 + $0x308] sm:$0xff]
      %v561 = vld [vmem:[%s5 + $0x310] sm:$0xff]
      %v562 = vld [vmem:[%s5 + $0x318] sm:$0xff]
      %v563 = vld [vmem:[%s5 + $0x320] sm:$0xff]
      %v564 = vld [vmem:[%s5 + $0x328] sm:$0xff]
      %v565 = vld [vmem:[%s5 + $0x330] sm:$0xff]
      %v566 = vld [vmem:[%s5 + $0x338] sm:$0xff]
      %v567 = vld [vmem:[%s5 + $0x340] sm:$0xff]
      %v568 = vld [vmem:[%s5 + $0x348] sm:$0xff]
      %v569 = vld [vmem:[%s5 + $0x350] sm:$0xff]
      %v570 = vld [vmem:[%s5 + $0x358] sm:$0xff]
      %v571 = vld [vmem:[%s5 + $0x360] sm:$0xff]
      %v572 = vld [vmem:[%s5 + $0x368] sm:$0xff]
      %v573 = vld [vmem:[%s5 + $0x370] sm:$0xff]
      %v574 = vld [vmem:[%s5 + $0x378] sm:$0xff]
      %v575 = vld [vmem:[%s5 + $0x380] sm:$0xff]
      %v576 = vld [vmem:[%s5 + $0x388] sm:$0xff]
      %v577 = vld [vmem:[%s5 + $0x390] sm:$0xff]
      %v578 = vld [vmem:[%s5 + $0x398] sm:$0xff]
      %v579 = vld [vmem:[%s5 + $0x3a0] sm:$0xff]
      %v580 = vld [vmem:[%s5 + $0x3a8] sm:$0xff]
      %v581 = vld [vmem:[%s5 + $0x3b0] sm:$0xff]
      %v582 = vld [vmem:[%s5 + $0x3b8] sm:$0xff]
      %v583 = vld [vmem:[%s5 + $0x3c0] sm:$0xff]
      %v584 = vld [vmem:[%s5 + $0x3c8] sm:$0xff]
      %v585 = vld [vmem:[%s5 + $0x3d0] sm:$0xff]
      %v586 = vld [vmem:[%s5 + $0x3d8] sm:$0xff]
      %v587 = vld [vmem:[%s5 + $0x3e0] sm:$0xff]
      %v588 = vld [vmem:[%s5 + $0x3e8] sm:$0xff]
      %v589 = vld [vmem:[%s5 + $0x3f0] sm:$0xff]
      %v590 = vld [vmem:[%s5 + $0x3f8] sm:$0xff]
      %v591 = vld [vmem:[%s5 + $0x400] sm:$0xff]
      %v592 = vld [vmem:[%s5 + $0x408] sm:$0xff]
      %v593 = vld [vmem:[%s5 + $0x410] sm:$0xff]
      %v594 = vld [vmem:[%s5 + $0x418] sm:$0xff]
      %v595 = vld [vmem:[%s5 + $0x420] sm:$0xff]
      %v596 = vld [vmem:[%s5 + $0x428] sm:$0xff]
      %v597 = vld [vmem:[%s5 + $0x430] sm:$0xff]
      %v598 = vld [vmem:[%s5 + $0x438] sm:$0xff]
      %v599 = vld [vmem:[%s5 + $0x440] sm:$0xff]
      %v600 = vld [vmem:[%s5 + $0x448] sm:$0xff]
      %v601 = vld [vmem:[%s5 + $0x450] sm:$0xff]
      %v602 = vld [vmem:[%s5 + $0x458] sm:$0xff]
      %v603 = vld [vmem:[%s5 + $0x460] sm:$0xff]
      %v604 = vld [vmem:[%s5 + $0x468] sm:$0xff]
      %v605 = vld [vmem:[%s5 + $0x470] sm:$0xff]
      %v606 = vld [vmem:[%s5 + $0x478] sm:$0xff]
      %v607 = vld [vmem:[%s5 + $0x480] sm:$0xff]
      %v608 = vld [vmem:[%s5 + $0x488] sm:$0xff]
      %v609 = vld [vmem:[%s5 + $0x490] sm:$0xff]
      %v610 = vld [vmem:[%s5 + $0x498] sm:$0xff]
      %v611 = vld [vmem:[%s5 + $0x4a0] sm:$0xff]
      %v612 = vld [vmem:[%s5 + $0x4a8] sm:$0xff]
      %v613 = vld [vmem:[%s5 + $0x4b0] sm:$0xff]
      %v614 = vld [vmem:[%s5 + $0x4b8] sm:$0xff]
      %v615 = vld [vmem:[%s5 + $0x4c0] sm:$0xff]
      %v616 = vld [vmem:[%s5 + $0x4c8] sm:$0xff]
      %v617 = vld [vmem:[%s5 + $0x4d0] sm:$0xff]
      %v618 = vld [vmem:[%s5 + $0x4d8] sm:$0xff]
      %v619 = vld [vmem:[%s5 + $0x4e0] sm:$0xff]
      %v620 = vld [vmem:[%s5 + $0x4e8] sm:$0xff]
      %v621 = vld [vmem:[%s5 + $0x4f0] sm:$0xff]
      %v622 = vld [vmem:[%s5 + $0x4f8] sm:$0xff]
      %v623 = vld [vmem:[%s5 + $0x500] sm:$0xff]
      %v624 = vld [vmem:[%s5 + $0x508] sm:$0xff]
      %v625 = vld [vmem:[%s5 + $0x510] sm:$0xff]
      %v626 = vld [vmem:[%s5 + $0x518] sm:$0xff]
      %v627 = vld [vmem:[%s5 + $0x520] sm:$0xff]
      %v628 = vld [vmem:[%s5 + $0x528] sm:$0xff]
      %v629 = vld [vmem:[%s5 + $0x530] sm:$0xff]
      %v630 = vld [vmem:[%s5 + $0x538] sm:$0xff]
      %v631 = vld [vmem:[%s5 + $0x540] sm:$0xff]
      %v632 = vld [vmem:[%s5 + $0x548] sm:$0xff]
      %v633 = vld [vmem:[%s5 + $0x550] sm:$0xff]
      %v634 = vld [vmem:[%s5 + $0x558] sm:$0xff]
      %v635 = vld [vmem:[%s5 + $0x560] sm:$0xff]
      %v636 = vld [vmem:[%s5 + $0x568] sm:$0xff]
      %v637 = vld [vmem:[%s5 + $0x570] sm:$0xff]
      %v638 = vld [vmem:[%s5 + $0x578] sm:$0xff]
      %v639 = vld [vmem:[%s5 + $0x580] sm:$0xff]
      %v640 = vld [vmem:[%s5 + $0x588] sm:$0xff]
      %v641 = vld [vmem:[%s5 + $0x590] sm:$0xff]
      %v642 = vld [vmem:[%s5 + $0x598] sm:$0xff]
      %v643 = vld [vmem:[%s5 + $0x5a0] sm:$0xff]
      %v644 = vld [vmem:[%s5 + $0x5a8] sm:$0xff]
      %v645 = vld [vmem:[%s5 + $0x5b0] sm:$0xff]
      %v646 = vld [vmem:[%s5 + $0x5b8] sm:$0xff]
      %v647 = vld [vmem:[%s5 + $0x5c0] sm:$0xff]
      %v648 = vld [vmem:[%s5 + $0x5c8] sm:$0xff]
      %v649 = vld [vmem:[%s5 + $0x5d0] sm:$0xff]
      %v650 = vld [vmem:[%s5 + $0x5d8] sm:$0xff]
      %v651 = vld [vmem:[%s5 + $0x5e0] sm:$0xff]
      %v652 = vld [vmem:[%s5 + $0x5e8] sm:$0xff]
      %v653 = vld [vmem:[%s5 + $0x5f0] sm:$0xff]
      %v654 = vld [vmem:[%s5 + $0x5f8] sm:$0xff]
      %v655 = vld [vmem:[%s5 + $0x600] sm:$0xff]
      %v656 = vld [vmem:[%s5 + $0x608] sm:$0xff]
      %v657 = vld [vmem:[%s5 + $0x610] sm:$0xff]
      %v658 = vld [vmem:[%s5 + $0x618] sm:$0xff]
      %v659 = vld [vmem:[%s5 + $0x620] sm:$0xff]
      %v660 = vld [vmem:[%s5 + $0x628] sm:$0xff]
      %v661 = vld [vmem:[%s5 + $0x630] sm:$0xff]
      %v662 = vld [vmem:[%s5 + $0x638] sm:$0xff]
      %v663 = vld [vmem:[%s5 + $0x640] sm:$0xff]
      %v664 = vld [vmem:[%s5 + $0x648] sm:$0xff]
      %v665 = vld [vmem:[%s5 + $0x650] sm:$0xff]
      %v666 = vld [vmem:[%s5 + $0x658] sm:$0xff]
      %v667 = vld [vmem:[%s5 + $0x660] sm:$0xff]
      %v668 = vld [vmem:[%s5 + $0x668] sm:$0xff]
      %v669 = vld [vmem:[%s5 + $0x670] sm:$0xff]
      %v670 = vld [vmem:[%s5 + $0x678] sm:$0xff]
      %v671 = vld [vmem:[%s5 + $0x680] sm:$0xff]
      %v672 = vld [vmem:[%s5 + $0x688] sm:$0xff]
      %v673 = vld [vmem:[%s5 + $0x690] sm:$0xff]
      %v674 = vld [vmem:[%s5 + $0x698] sm:$0xff]
      %v675 = vld [vmem:[%s5 + $0x6a0] sm:$0xff]
      %v676 = vld [vmem:[%s5 + $0x6a8] sm:$0xff]
      %v677 = vld [vmem:[%s5 + $0x6b0] sm:$0xff]
      %v678 = vld [vmem:[%s5 + $0x6b8] sm:$0xff]
      %v679 = vld [vmem:[%s5 + $0x6c0] sm:$0xff]
      %v680 = vld [vmem:[%s5 + $0x6c8] sm:$0xff]
      %v681 = vld [vmem:[%s5 + $0x6d0] sm:$0xff]
      %v682 = vld [vmem:[%s5 + $0x6d8] sm:$0xff]
      %v683 = vld [vmem:[%s5 + $0x6e0] sm:$0xff]
      %v684 = vld [vmem:[%s5 + $0x6e8] sm:$0xff]
      %v685 = vld [vmem:[%s5 + $0x6f0] sm:$0xff]
      %v686 = vld [vmem:[%s5 + $0x6f8] sm:$0xff]
      %v687 = vld [vmem:[%s5 + $0x700] sm:$0xff]
      %v688 = vld [vmem:[%s5 + $0x708] sm:$0xff]
      %v689 = vld [vmem:[%s5 + $0x710] sm:$0xff]
      %v690 = vld [vmem:[%s5 + $0x718] sm:$0xff]
      %v691 = vld [vmem:[%s5 + $0x720] sm:$0xff]
      %v692 = vld [vmem:[%s5 + $0x728] sm:$0xff]
      %v693 = vld [vmem:[%s5 + $0x730] sm:$0xff]
      %v694 = vld [vmem:[%s5 + $0x738] sm:$0xff]
      %v695 = vld [vmem:[%s5 + $0x740] sm:$0xff]
      %v696 = vld [vmem:[%s5 + $0x748] sm:$0xff]
      %v697 = vld [vmem:[%s5 + $0x750] sm:$0xff]
      %v698 = vld [vmem:[%s5 + $0x758] sm:$0xff]
      %v699 = vld [vmem:[%s5 + $0x760] sm:$0xff]
      %v700 = vld [vmem:[%s5 + $0x768] sm:$0xff]
      %v701 = vld [vmem:[%s5 + $0x770] sm:$0xff]
      %v702 = vld [vmem:[%s5 + $0x778] sm:$0xff]
      %v703 = vld [vmem:[%s5 + $0x780] sm:$0xff]
      %v704 = vld [vmem:[%s5 + $0x788] sm:$0xff]
      %v705 = vld [vmem:[%s5 + $0x790] sm:$0xff]
      %v706 = vld [vmem:[%s5 + $0x798] sm:$0xff]
      %v707 = vld [vmem:[%s5 + $0x7a0] sm:$0xff]
      %v708 = vld [vmem:[%s5 + $0x7a8] sm:$0xff]
      %v709 = vld [vmem:[%s5 + $0x7b0] sm:$0xff]
      %v710 = vld [vmem:[%s5 + $0x7b8] sm:$0xff]
      %v711 = vld [vmem:[%s5 + $0x7c0] sm:$0xff]
      %v712 = vld [vmem:[%s5 + $0x7c8] sm:$0xff]
      %v713 = vld [vmem:[%s5 + $0x7d0] sm:$0xff]
      %v714 = vld [vmem:[%s5 + $0x7d8] sm:$0xff]
      %v715 = vld [vmem:[%s5 + $0x7e0] sm:$0xff]
      %v716 = vld [vmem:[%s5 + $0x7e8] sm:$0xff]
      %v717 = vld [vmem:[%s5 + $0x7f0] sm:$0xff]
      %v718 = vld [vmem:[%s5 + $0x7f8] sm:$0xff]
      %v719 = vld [vmem:[%s7] sm:$0xff]
      %v720 = vld [vmem:[%s7 + $0x8] sm:$0xff]
      %v721 = vld [vmem:[%s7 + $0x10] sm:$0xff]
      %v722 = vld [vmem:[%s7 + $0x18] sm:$0xff]
      %v723 = vld [vmem:[%s7 + $0x20] sm:$0xff]
      %v724 = vld [vmem:[%s7 + $0x28] sm:$0xff]
      %v725 = vld [vmem:[%s7 + $0x30] sm:$0xff]
      %v726 = vld [vmem:[%s7 + $0x38] sm:$0xff]
      %v727 = vld [vmem:[%s7 + $0x40] sm:$0xff]
      %v728 = vld [vmem:[%s7 + $0x48] sm:$0xff]
      %v729 = vld [vmem:[%s7 + $0x50] sm:$0xff]
      %v730 = vld [vmem:[%s7 + $0x58] sm:$0xff]
      %v731 = vld [vmem:[%s7 + $0x60] sm:$0xff]
      %v732 = vld [vmem:[%s7 + $0x68] sm:$0xff]
      %v733 = vld [vmem:[%s7 + $0x70] sm:$0xff]
      %v734 = vld [vmem:[%s7 + $0x78] sm:$0xff]
      %v735 = vld [vmem:[%s7 + $0x80] sm:$0xff]
      %v736 = vld [vmem:[%s7 + $0x88] sm:$0xff]
      %v737 = vld [vmem:[%s7 + $0x90] sm:$0xff]
      %v738 = vld [vmem:[%s7 + $0x98] sm:$0xff]
      %v739 = vld [vmem:[%s7 + $0xa0] sm:$0xff]
      %v740 = vld [vmem:[%s7 + $0xa8] sm:$0xff]
      %v741 = vld [vmem:[%s7 + $0xb0] sm:$0xff]
      %v742 = vld [vmem:[%s7 + $0xb8] sm:$0xff]
      %v743 = vld [vmem:[%s7 + $0xc0] sm:$0xff]
      %v744 = vld [vmem:[%s7 + $0xc8] sm:$0xff]
      %v745 = vld [vmem:[%s7 + $0xd0] sm:$0xff]
      %v746 = vld [vmem:[%s7 + $0xd8] sm:$0xff]
      %v747 = vld [vmem:[%s7 + $0xe0] sm:$0xff]
      %v748 = vld [vmem:[%s7 + $0xe8] sm:$0xff]
      %v749 = vld [vmem:[%s7 + $0xf0] sm:$0xff]
      %v750 = vld [vmem:[%s7 + $0xf8] sm:$0xff]
      %v751 = vld [vmem:[%s7 + $0x100] sm:$0xff]
      %v752 = vld [vmem:[%s7 + $0x108] sm:$0xff]
      %v753 = vld [vmem:[%s7 + $0x110] sm:$0xff]
      %v754 = vld [vmem:[%s7 + $0x118] sm:$0xff]
      %v755 = vld [vmem:[%s7 + $0x120] sm:$0xff]
      %v756 = vld [vmem:[%s7 + $0x128] sm:$0xff]
      %v757 = vld [vmem:[%s7 + $0x130] sm:$0xff]
      %v758 = vld [vmem:[%s7 + $0x138] sm:$0xff]
      %v759 = vld [vmem:[%s7 + $0x140] sm:$0xff]
      %v760 = vld [vmem:[%s7 + $0x148] sm:$0xff]
      %v761 = vld [vmem:[%s7 + $0x150] sm:$0xff]
      %v762 = vld [vmem:[%s7 + $0x158] sm:$0xff]
      %v763 = vld [vmem:[%s7 + $0x160] sm:$0xff]
      %v764 = vld [vmem:[%s7 + $0x168] sm:$0xff]
      %v765 = vld [vmem:[%s7 + $0x170] sm:$0xff]
      %v766 = vld [vmem:[%s7 + $0x178] sm:$0xff]
      %v767 = vld [vmem:[%s7 + $0x180] sm:$0xff]
      %v768 = vld [vmem:[%s7 + $0x188] sm:$0xff]
      %v769 = vld [vmem:[%s7 + $0x190] sm:$0xff]
      %v770 = vld [vmem:[%s7 + $0x198] sm:$0xff]
      %v771 = vld [vmem:[%s7 + $0x1a0] sm:$0xff]
      %v772 = vld [vmem:[%s7 + $0x1a8] sm:$0xff]
      %v773 = vld [vmem:[%s7 + $0x1b0] sm:$0xff]
      %v774 = vld [vmem:[%s7 + $0x1b8] sm:$0xff]
      %v775 = vld [vmem:[%s7 + $0x1c0] sm:$0xff]
      %v776 = vld [vmem:[%s7 + $0x1c8] sm:$0xff]
      %v777 = vld [vmem:[%s7 + $0x1d0] sm:$0xff]
      %v778 = vld [vmem:[%s7 + $0x1d8] sm:$0xff]
      %v779 = vld [vmem:[%s7 + $0x1e0] sm:$0xff]
      %v780 = vld [vmem:[%s7 + $0x1e8] sm:$0xff]
      %v781 = vld [vmem:[%s7 + $0x1f0] sm:$0xff]
      %v782 = vld [vmem:[%s7 + $0x1f8] sm:$0xff]
      %v783 = vld [vmem:[%s7 + $0x200] sm:$0xff]
      %v784 = vld [vmem:[%s7 + $0x208] sm:$0xff]
      %v785 = vld [vmem:[%s7 + $0x210] sm:$0xff]
      %v786 = vld [vmem:[%s7 + $0x218] sm:$0xff]
      %v787 = vld [vmem:[%s7 + $0x220] sm:$0xff]
      %v788 = vld [vmem:[%s7 + $0x228] sm:$0xff]
      %v789 = vld [vmem:[%s7 + $0x230] sm:$0xff]
      %v790 = vld [vmem:[%s7 + $0x238] sm:$0xff]
      %v791 = vld [vmem:[%s7 + $0x240] sm:$0xff]
      %v792 = vld [vmem:[%s7 + $0x248] sm:$0xff]
      %v793 = vld [vmem:[%s7 + $0x250] sm:$0xff]
      %v794 = vld [vmem:[%s7 + $0x258] sm:$0xff]
      %v795 = vld [vmem:[%s7 + $0x260] sm:$0xff]
      %v796 = vld [vmem:[%s7 + $0x268] sm:$0xff]
      %v797 = vld [vmem:[%s7 + $0x270] sm:$0xff]
      %v798 = vld [vmem:[%s7 + $0x278] sm:$0xff]
      %v799 = vld [vmem:[%s7 + $0x280] sm:$0xff]
      %v800 = vld [vmem:[%s7 + $0x288] sm:$0xff]
      %v801 = vld [vmem:[%s7 + $0x290] sm:$0xff]
      %v802 = vld [vmem:[%s7 + $0x298] sm:$0xff]
      %v803 = vld [vmem:[%s7 + $0x2a0] sm:$0xff]
      %v804 = vld [vmem:[%s7 + $0x2a8] sm:$0xff]
      %v805 = vld [vmem:[%s7 + $0x2b0] sm:$0xff]
      %v806 = vld [vmem:[%s7 + $0x2b8] sm:$0xff]
      %v807 = vld [vmem:[%s7 + $0x2c0] sm:$0xff]
      %v808 = vld [vmem:[%s7 + $0x2c8] sm:$0xff]
      %v809 = vld [vmem:[%s7 + $0x2d0] sm:$0xff]
      %v810 = vld [vmem:[%s7 + $0x2d8] sm:$0xff]
      %v811 = vld [vmem:[%s7 + $0x2e0] sm:$0xff]
      %v812 = vld [vmem:[%s7 + $0x2e8] sm:$0xff]
      %v813 = vld [vmem:[%s7 + $0x2f0] sm:$0xff]
      %v814 = vld [vmem:[%s7 + $0x2f8] sm:$0xff]
      %v815 = vld [vmem:[%s7 + $0x300] sm:$0xf]
      %v816 = vld [vmem:[%s7 + $0x308] sm:$0xf]
      %v817 = vld [vmem:[%s7 + $0x310] sm:$0xf]
      %v818 = vld [vmem:[%s7 + $0x318] sm:$0xf]
      %v819 = vld [vmem:[%s4] sm:$0xff]
      %v820 = vld [vmem:[%s4 + $0x8] sm:$0xff]
      %v821 = vld [vmem:[%s4 + $0x10] sm:$0xff]
      %v822 = vld [vmem:[%s4 + $0x18] sm:$0xff]
      %v823 = vld [vmem:[%s4 + $0x20] sm:$0xff]
      %v824 = vld [vmem:[%s4 + $0x28] sm:$0xff]
      %v825 = vld [vmem:[%s4 + $0x30] sm:$0xff]
      %v826 = vld [vmem:[%s4 + $0x38] sm:$0xff]
      %v827 = vld [vmem:[%s4 + $0x40] sm:$0xff]
      %v828 = vld [vmem:[%s4 + $0x48] sm:$0xff]
      %v829 = vld [vmem:[%s4 + $0x50] sm:$0xff]
      %v830 = vld [vmem:[%s4 + $0x58] sm:$0xff]
      %v831 = vld [vmem:[%s4 + $0x60] sm:$0xff]
      %v832 = vld [vmem:[%s4 + $0x68] sm:$0xff]
      %v833 = vld [vmem:[%s4 + $0x70] sm:$0xff]
      %v834 = vld [vmem:[%s4 + $0x78] sm:$0xff]
      %v835 = vld [vmem:[%s4 + $0x80] sm:$0xff]
      %v836 = vld [vmem:[%s4 + $0x88] sm:$0xff]
      %v837 = vld [vmem:[%s4 + $0x90] sm:$0xff]
      %v838 = vld [vmem:[%s4 + $0x98] sm:$0xff]
      %v839 = vld [vmem:[%s4 + $0xa0] sm:$0xff]
      %v840 = vld [vmem:[%s4 + $0xa8] sm:$0xff]
      %v841 = vld [vmem:[%s4 + $0xb0] sm:$0xff]
      %v842 = vld [vmem:[%s4 + $0xb8] sm:$0xff]
      %v843 = vld [vmem:[%s4 + $0xc0] sm:$0xff]
      %v844 = vld [vmem:[%s4 + $0xc8] sm:$0xff]
      %v845 = vld [vmem:[%s4 + $0xd0] sm:$0xff]
      %v846 = vld [vmem:[%s4 + $0xd8] sm:$0xff]
      %v847 = vld [vmem:[%s4 + $0xe0] sm:$0xff]
      %v848 = vld [vmem:[%s4 + $0xe8] sm:$0xff]
      %v849 = vld [vmem:[%s4 + $0xf0] sm:$0xff]
      %v850 = vld [vmem:[%s4 + $0xf8] sm:$0xff]
      %v851 = vld [vmem:[%s4 + $0x100] sm:$0xff]
      %v852 = vld [vmem:[%s4 + $0x108] sm:$0xff]
      %v853 = vld [vmem:[%s4 + $0x110] sm:$0xff]
      %v854 = vld [vmem:[%s4 + $0x118] sm:$0xff]
      %v855 = vld [vmem:[%s4 + $0x120] sm:$0xff]
      %v856 = vld [vmem:[%s4 + $0x128] sm:$0xff]
      %v857 = vld [vmem:[%s4 + $0x130] sm:$0xff]
      %v858 = vld [vmem:[%s4 + $0x138] sm:$0xff]
      %v859 = vld [vmem:[%s4 + $0x140] sm:$0xff]
      %v860 = vld [vmem:[%s4 + $0x148] sm:$0xff]
      %v861 = vld [vmem:[%s4 + $0x150] sm:$0xff]
      %v862 = vld [vmem:[%s4 + $0x158] sm:$0xff]
      %v863 = vld [vmem:[%s4 + $0x160] sm:$0xff]
      %v864 = vld [vmem:[%s4 + $0x168] sm:$0xff]
      %v865 = vld [vmem:[%s4 + $0x170] sm:$0xff]
      %v866 = vld [vmem:[%s4 + $0x178] sm:$0xff]
      %v867 = vld [vmem:[%s4 + $0x180] sm:$0xff]
      %v868 = vld [vmem:[%s4 + $0x188] sm:$0xff]
      %v869 = vld [vmem:[%s4 + $0x190] sm:$0xff]
      %v870 = vld [vmem:[%s4 + $0x198] sm:$0xff]
      %v871 = vld [vmem:[%s4 + $0x1a0] sm:$0xff]
      %v872 = vld [vmem:[%s4 + $0x1a8] sm:$0xff]
      %v873 = vld [vmem:[%s4 + $0x1b0] sm:$0xff]
      %v874 = vld [vmem:[%s4 + $0x1b8] sm:$0xff]
      %v875 = vld [vmem:[%s4 + $0x1c0] sm:$0xff]
      %v876 = vld [vmem:[%s4 + $0x1c8] sm:$0xff]
      %v877 = vld [vmem:[%s4 + $0x1d0] sm:$0xff]
      %v878 = vld [vmem:[%s4 + $0x1d8] sm:$0xff]
      %v879 = vld [vmem:[%s4 + $0x1e0] sm:$0xff]
      %v880 = vld [vmem:[%s4 + $0x1e8] sm:$0xff]
      %v881 = vld [vmem:[%s4 + $0x1f0] sm:$0xff]
      %v882 = vld [vmem:[%s4 + $0x1f8] sm:$0xff]
      %v883 = vld [vmem:[%s6] sm:$0xff]
      %v884 = vld [vmem:[%s6 + $0x8] sm:$0xff]
      %v885 = vld [vmem:[%s6 + $0x10] sm:$0xff]
      %v886 = vld [vmem:[%s6 + $0x18] sm:$0xff]
      %v887 = vld [vmem:[%s6 + $0x20] sm:$0xff]
      %v888 = vld [vmem:[%s6 + $0x28] sm:$0xff]
      %v889 = vld [vmem:[%s6 + $0x30] sm:$0xff]
      %v890 = vld [vmem:[%s6 + $0x38] sm:$0xff]
      %v891 = vld [vmem:[%s6 + $0x40] sm:$0xff]
      %v892 = vld [vmem:[%s6 + $0x48] sm:$0xff]
      %v893 = vld [vmem:[%s6 + $0x50] sm:$0xff]
      %v894 = vld [vmem:[%s6 + $0x58] sm:$0xff]
      %v895 = vld [vmem:[%s6 + $0x60] sm:$0xff]
      %v896 = vld [vmem:[%s6 + $0x68] sm:$0xff]
      %v897 = vld [vmem:[%s6 + $0x70] sm:$0xff]
      %v898 = vld [vmem:[%s6 + $0x78] sm:$0xff]
      %v899 = vld [vmem:[%s6 + $0x80] sm:$0xff]
      %v900 = vld [vmem:[%s6 + $0x88] sm:$0xff]
      %v901 = vld [vmem:[%s6 + $0x90] sm:$0xff]
      %v902 = vld [vmem:[%s6 + $0x98] sm:$0xff]
      %v903 = vld [vmem:[%s6 + $0xa0] sm:$0xff]
      %v904 = vld [vmem:[%s6 + $0xa8] sm:$0xff]
      %v905 = vld [vmem:[%s6 + $0xb0] sm:$0xff]
      %v906 = vld [vmem:[%s6 + $0xb8] sm:$0xff]
      %v907 = vld [vmem:[%s6 + $0xc0] sm:$0xff]
      %v908 = vld [vmem:[%s6 + $0xc8] sm:$0xff]
      %v909 = vld [vmem:[%s6 + $0xd0] sm:$0xff]
      %v910 = vld [vmem:[%s6 + $0xd8] sm:$0xff]
      %v911 = vld [vmem:[%s6 + $0xe0] sm:$0xff]
      %v912 = vld [vmem:[%s6 + $0xe8] sm:$0xff]
      %v913 = vld [vmem:[%s6 + $0xf0] sm:$0xff]
      %v914 = vld [vmem:[%s6 + $0xf8] sm:$0xff]
      %v915 = vld [vmem:[%s6 + $0x100] sm:$0xff]
      %v916 = vld [vmem:[%s6 + $0x108] sm:$0xff]
      %v917 = vld [vmem:[%s6 + $0x110] sm:$0xff]
      %v918 = vld [vmem:[%s6 + $0x118] sm:$0xff]
      %v919 = vld [vmem:[%s6 + $0x120] sm:$0xff]
      %v920 = vld [vmem:[%s6 + $0x128] sm:$0xff]
      %v921 = vld [vmem:[%s6 + $0x130] sm:$0xff]
      %v922 = vld [vmem:[%s6 + $0x138] sm:$0xff]
      %v923 = vld [vmem:[%s6 + $0x140] sm:$0xff]
      %v924 = vld [vmem:[%s6 + $0x148] sm:$0xff]
      %v925 = vld [vmem:[%s6 + $0x150] sm:$0xff]
      %v926 = vld [vmem:[%s6 + $0x158] sm:$0xff]
      %v927 = vld [vmem:[%s6 + $0x160] sm:$0xff]
      %v928 = vld [vmem:[%s6 + $0x168] sm:$0xff]
      %v929 = vld [vmem:[%s6 + $0x170] sm:$0xff]
      %v930 = vld [vmem:[%s6 + $0x178] sm:$0xff]
      %v931 = vld [vmem:[%s6 + $0x180] sm:$0xff]
      %v932 = vld [vmem:[%s6 + $0x188] sm:$0xff]
      %v933 = vld [vmem:[%s6 + $0x190] sm:$0xff]
      %v934 = vld [vmem:[%s6 + $0x198] sm:$0xff]
      %v935 = vld [vmem:[%s6 + $0x1a0] sm:$0xff]
      %v936 = vld [vmem:[%s6 + $0x1a8] sm:$0xff]
      %v937 = vld [vmem:[%s6 + $0x1b0] sm:$0xff]
      %v938 = vld [vmem:[%s6 + $0x1b8] sm:$0xff]
      %v939 = vld [vmem:[%s6 + $0x1c0] sm:$0xff]
      %v940 = vld [vmem:[%s6 + $0x1c8] sm:$0xff]
      %v941 = vld [vmem:[%s6 + $0x1d0] sm:$0xff]
      %v942 = vld [vmem:[%s6 + $0x1d8] sm:$0xff]
      %v943 = vld [vmem:[%s6 + $0x1e0] sm:$0xff]
      %v944 = vld [vmem:[%s6 + $0x1e8] sm:$0xff]
      %v945 = vld [vmem:[%s6 + $0x1f0] sm:$0xff]
      %v946 = vld [vmem:[%s6 + $0x1f8] sm:$0xff]
      %v947 = vld [vmem:[%s8] sm:$0xff]
      %v948 = vld [vmem:[%s8 + $0x8] sm:$0xff]
      %v949 = vld [vmem:[%s8 + $0x10] sm:$0xff]
      %v950 = vld [vmem:[%s8 + $0x18] sm:$0xff]
      %v951 = vld [vmem:[%s8 + $0x20] sm:$0xff]
      %v952 = vld [vmem:[%s8 + $0x28] sm:$0xff]
      %v953 = vld [vmem:[%s8 + $0x30] sm:$0xff]
      %v954 = vld [vmem:[%s8 + $0x38] sm:$0xff]
      %v955 = vld [vmem:[%s8 + $0x40] sm:$0xff]
      %v956 = vld [vmem:[%s8 + $0x48] sm:$0xff]
      %v957 = vld [vmem:[%s8 + $0x50] sm:$0xff]
      %v958 = vld [vmem:[%s8 + $0x58] sm:$0xff]
      %v959 = vld [vmem:[%s8 + $0x60] sm:$0xff]
      %v960 = vld [vmem:[%s8 + $0x68] sm:$0xff]
      %v961 = vld [vmem:[%s8 + $0x70] sm:$0xff]
      %v962 = vld [vmem:[%s8 + $0x78] sm:$0xff]
      %v963 = vld [vmem:[%s8 + $0x80] sm:$0xff]
      %v964 = vld [vmem:[%s8 + $0x88] sm:$0xff]
      %v965 = vld [vmem:[%s8 + $0x90] sm:$0xff]
      %v966 = vld [vmem:[%s8 + $0x98] sm:$0xff]
      %v967 = vld [vmem:[%s8 + $0xa0] sm:$0xff]
      %v968 = vld [vmem:[%s8 + $0xa8] sm:$0xff]
      %v969 = vld [vmem:[%s8 + $0xb0] sm:$0xff]
      %v970 = vld [vmem:[%s8 + $0xb8] sm:$0xff]
      %v971 = vld [vmem:[%s8 + $0xc0] sm:$0xf]
      %v972 = vld [vmem:[%s327] sm:$0xff]
      %v973 = vld [vmem:[%s327 + $0x8] sm:$0xff]
      %v974 = vld [vmem:[%s327 + $0x10] sm:$0xff]
      %v975 = vld [vmem:[%s327 + $0x18] sm:$0xff]
      %v976 = vld [vmem:[%s327 + $0x20] sm:$0xff]
      %v977 = vld [vmem:[%s327 + $0x28] sm:$0xff]
      %v978 = vld [vmem:[%s327 + $0x30] sm:$0xff]
      %v979 = vld [vmem:[%s327 + $0x38] sm:$0xff]
      %v980 = vld [vmem:[%s327 + $0x40] sm:$0xff]
      %v981 = vld [vmem:[%s327 + $0x48] sm:$0xff]
      %v982 = vld [vmem:[%s327 + $0x50] sm:$0xff]
      %v983 = vld [vmem:[%s327 + $0x58] sm:$0xff]
      %v984 = vld [vmem:[%s327 + $0x60] sm:$0xff]
      %v985 = vld [vmem:[%s327 + $0x68] sm:$0xff]
      %v986 = vld [vmem:[%s327 + $0x70] sm:$0xff]
      %v987 = vld [vmem:[%s327 + $0x78] sm:$0xff]
      %v988 = vld [vmem:[%s327 + $0x80] sm:$0xff]
      %v989 = vld [vmem:[%s327 + $0x88] sm:$0xff]
      %v990 = vld [vmem:[%s327 + $0x90] sm:$0xff]
      %v991 = vld [vmem:[%s327 + $0x98] sm:$0xff]
      %v992 = vld [vmem:[%s327 + $0xa0] sm:$0xff]
      %v993 = vld [vmem:[%s327 + $0xa8] sm:$0xff]
      %v994 = vld [vmem:[%s327 + $0xb0] sm:$0xff]
      %v995 = vld [vmem:[%s327 + $0xb8] sm:$0xff]
      %v996 = vld [vmem:[%s327 + $0xc0] sm:$0xf]
      %vm997 = vcmask 261120
      %v998 = vsel %vm997, %v972, 0.0
      %999 = vadd.xlane.f32.xlu0 %v998
      %v1000 = vpop.xlane.xlu0 %999
      %v1001 = vsel %vm997, %v973, 0.0
      %1002 = vadd.xlane.f32.xlu0 %v1001
      %v1003 = vpop.xlane.xlu0 %1002
      %v1004 = vsel %vm997, %v974, 0.0
      %1005 = vadd.xlane.f32.xlu0 %v1004
      %v1006 = vpop.xlane.xlu0 %1005
      %v1007 = vsel %vm997, %v975, 0.0
      %1008 = vadd.xlane.f32.xlu0 %v1007
      %v1009 = vpop.xlane.xlu0 %1008
      %v1010 = vsel %vm997, %v976, 0.0
      %1011 = vadd.xlane.f32.xlu0 %v1010
      %v1012 = vpop.xlane.xlu0 %1011
      %v1013 = vsel %vm997, %v977, 0.0
      %1014 = vadd.xlane.f32.xlu0 %v1013
      %v1015 = vpop.xlane.xlu0 %1014
      %v1016 = vsel %vm997, %v978, 0.0
      %1017 = vadd.xlane.f32.xlu0 %v1016
      %v1018 = vpop.xlane.xlu0 %1017
      %v1019 = vsel %vm997, %v979, 0.0
      %1020 = vadd.xlane.f32.xlu0 %v1019
      %v1021 = vpop.xlane.xlu0 %1020
      %v1022 = vsel %vm997, %v980, 0.0
      %1023 = vadd.xlane.f32.xlu0 %v1022
      %v1024 = vpop.xlane.xlu0 %1023
      %v1025 = vsel %vm997, %v981, 0.0
      %1026 = vadd.xlane.f32.xlu0 %v1025
      %v1027 = vpop.xlane.xlu0 %1026
      %v1028 = vsel %vm997, %v982, 0.0
      %1029 = vadd.xlane.f32.xlu0 %v1028
      %v1030 = vpop.xlane.xlu0 %1029
      %v1031 = vsel %vm997, %v983, 0.0
      %1032 = vadd.xlane.f32.xlu0 %v1031
      %v1033 = vpop.xlane.xlu0 %1032
      %v1034 = vsel %vm997, %v984, 0.0
      %1035 = vadd.xlane.f32.xlu0 %v1034
      %v1036 = vpop.xlane.xlu0 %1035
      %v1037 = vsel %vm997, %v985, 0.0
      %1038 = vadd.xlane.f32.xlu0 %v1037
      %v1039 = vpop.xlane.xlu0 %1038
      %v1040 = vsel %vm997, %v986, 0.0
      %1041 = vadd.xlane.f32.xlu0 %v1040
      %v1042 = vpop.xlane.xlu0 %1041
      %v1043 = vsel %vm997, %v987, 0.0
      %1044 = vadd.xlane.f32.xlu0 %v1043
      %v1045 = vpop.xlane.xlu0 %1044
      %v1046 = vsel %vm997, %v988, 0.0
      %1047 = vadd.xlane.f32.xlu0 %v1046
      %v1048 = vpop.xlane.xlu0 %1047
      %v1049 = vsel %vm997, %v989, 0.0
      %1050 = vadd.xlane.f32.xlu0 %v1049
      %v1051 = vpop.xlane.xlu0 %1050
      %v1052 = vsel %vm997, %v990, 0.0
      %1053 = vadd.xlane.f32.xlu0 %v1052
      %v1054 = vpop.xlane.xlu0 %1053
      %v1055 = vsel %vm997, %v991, 0.0
      %1056 = vadd.xlane.f32.xlu0 %v1055
      %v1057 = vpop.xlane.xlu0 %1056
      %v1058 = vsel %vm997, %v992, 0.0
      %1059 = vadd.xlane.f32.xlu0 %v1058
      %v1060 = vpop.xlane.xlu0 %1059
      %v1061 = vsel %vm997, %v993, 0.0
      %1062 = vadd.xlane.f32.xlu0 %v1061
      %v1063 = vpop.xlane.xlu0 %1062
      %v1064 = vsel %vm997, %v994, 0.0
      %1065 = vadd.xlane.f32.xlu0 %v1064
      %v1066 = vpop.xlane.xlu0 %1065
      %v1067 = vsel %vm997, %v995, 0.0
      %1068 = vadd.xlane.f32.xlu0 %v1067
      %v1069 = vpop.xlane.xlu0 %1068
      %vm1070 = vcmask 257024
      %v1071 = vsel %vm1070, %v996, 0.0
      %1072 = vadd.xlane.f32.xlu0 %v1071
      %v1073 = vpop.xlane.xlu0 %1072
      %v1074 = vrcp.pop 32.0
      %v1075 = vmul.f32 %v1000, %v1074
      %v1076 = vmul.f32 %v1003, %v1074
      %v1077 = vmul.f32 %v1006, %v1074
      %v1078 = vmul.f32 %v1009, %v1074
      %v1079 = vmul.f32 %v1012, %v1074
      %v1080 = vmul.f32 %v1015, %v1074
      %v1081 = vmul.f32 %v1018, %v1074
      %v1082 = vmul.f32 %v1021, %v1074
      %v1083 = vmul.f32 %v1024, %v1074
      %v1084 = vmul.f32 %v1027, %v1074
      %v1085 = vmul.f32 %v1030, %v1074
      %v1086 = vmul.f32 %v1033, %v1074
      %v1087 = vmul.f32 %v1036, %v1074
      %v1088 = vmul.f32 %v1039, %v1074
      %v1089 = vmul.f32 %v1042, %v1074
      %v1090 = vmul.f32 %v1045, %v1074
      %v1091 = vmul.f32 %v1048, %v1074
      %v1092 = vmul.f32 %v1051, %v1074
      %v1093 = vmul.f32 %v1054, %v1074
      %v1094 = vmul.f32 %v1057, %v1074
      %v1095 = vmul.f32 %v1060, %v1074
      %v1096 = vmul.f32 %v1063, %v1074
      %v1097 = vmul.f32 %v1066, %v1074
      %v1098 = vmul.f32 %v1069, %v1074
      %v1099 = vmul.f32 %v1073, %v1074
      %v1100 = vsub.f32 %v972, %v1075
      %v1101 = vsub.f32 %v973, %v1076
      %v1102 = vsub.f32 %v974, %v1077
      %v1103 = vsub.f32 %v975, %v1078
      %v1104 = vsub.f32 %v976, %v1079
      %v1105 = vsub.f32 %v977, %v1080
      %v1106 = vsub.f32 %v978, %v1081
      %v1107 = vsub.f32 %v979, %v1082
      %v1108 = vsub.f32 %v980, %v1083
      %v1109 = vsub.f32 %v981, %v1084
      %v1110 = vsub.f32 %v982, %v1085
      %v1111 = vsub.f32 %v983, %v1086
      %v1112 = vsub.f32 %v984, %v1087
      %v1113 = vsub.f32 %v985, %v1088
      %v1114 = vsub.f32 %v986, %v1089
      %v1115 = vsub.f32 %v987, %v1090
      %v1116 = vsub.f32 %v988, %v1091
      %v1117 = vsub.f32 %v989, %v1092
      %v1118 = vsub.f32 %v990, %v1093
      %v1119 = vsub.f32 %v991, %v1094
      %v1120 = vsub.f32 %v992, %v1095
      %v1121 = vsub.f32 %v993, %v1096
      %v1122 = vsub.f32 %v994, %v1097
      %v1123 = vsub.f32 %v995, %v1098
      %v1124 = vsub.f32 %v996, %v1099
      %v1125 = vmul.f32 %v1100, %v1100
      %v1126 = vmul.f32 %v1101, %v1101
      %v1127 = vmul.f32 %v1102, %v1102
      %v1128 = vmul.f32 %v1103, %v1103
      %v1129 = vmul.f32 %v1104, %v1104
      %v1130 = vmul.f32 %v1105, %v1105
      %v1131 = vmul.f32 %v1106, %v1106
      %v1132 = vmul.f32 %v1107, %v1107
      %v1133 = vmul.f32 %v1108, %v1108
      %v1134 = vmul.f32 %v1109, %v1109
      %v1135 = vmul.f32 %v1110, %v1110
      %v1136 = vmul.f32 %v1111, %v1111
      %v1137 = vmul.f32 %v1112, %v1112
      %v1138 = vmul.f32 %v1113, %v1113
      %v1139 = vmul.f32 %v1114, %v1114
      %v1140 = vmul.f32 %v1115, %v1115
      %v1141 = vmul.f32 %v1116, %v1116
      %v1142 = vmul.f32 %v1117, %v1117
      %v1143 = vmul.f32 %v1118, %v1118
      %v1144 = vmul.f32 %v1119, %v1119
      %v1145 = vmul.f32 %v1120, %v1120
      %v1146 = vmul.f32 %v1121, %v1121
      %v1147 = vmul.f32 %v1122, %v1122
      %v1148 = vmul.f32 %v1123, %v1123
      %v1149 = vmul.f32 %v1124, %v1124
      %v1150 = vsel %vm997, %v1125, 0.0
      %1151 = vadd.xlane.f32.xlu0 %v1150
      %v1152 = vpop.xlane.xlu0 %1151
      %v1153 = vsel %vm997, %v1126, 0.0
      %1154 = vadd.xlane.f32.xlu0 %v1153
      %v1155 = vpop.xlane.xlu0 %1154
      %v1156 = vsel %vm997, %v1127, 0.0
      %1157 = vadd.xlane.f32.xlu0 %v1156
      %v1158 = vpop.xlane.xlu0 %1157
      %v1159 = vsel %vm997, %v1128, 0.0
      %1160 = vadd.xlane.f32.xlu0 %v1159
      %v1161 = vpop.xlane.xlu0 %1160
      %v1162 = vsel %vm997, %v1129, 0.0
      %1163 = vadd.xlane.f32.xlu0 %v1162
      %v1164 = vpop.xlane.xlu0 %1163
      %v1165 = vsel %vm997, %v1130, 0.0
      %1166 = vadd.xlane.f32.xlu0 %v1165
      %v1167 = vpop.xlane.xlu0 %1166
      %v1168 = vsel %vm997, %v1131, 0.0
      %1169 = vadd.xlane.f32.xlu0 %v1168
      %v1170 = vpop.xlane.xlu0 %1169
      %v1171 = vsel %vm997, %v1132, 0.0
      %1172 = vadd.xlane.f32.xlu0 %v1171
      %v1173 = vpop.xlane.xlu0 %1172
      %v1174 = vsel %vm997, %v1133, 0.0
      %1175 = vadd.xlane.f32.xlu0 %v1174
      %v1176 = vpop.xlane.xlu0 %1175
      %v1177 = vsel %vm997, %v1134, 0.0
      %1178 = vadd.xlane.f32.xlu0 %v1177
      %v1179 = vpop.xlane.xlu0 %1178
      %v1180 = vsel %vm997, %v1135, 0.0
      %1181 = vadd.xlane.f32.xlu0 %v1180
      %v1182 = vpop.xlane.xlu0 %1181
      %v1183 = vsel %vm997, %v1136, 0.0
      %1184 = vadd.xlane.f32.xlu0 %v1183
      %v1185 = vpop.xlane.xlu0 %1184
      %v1186 = vsel %vm997, %v1137, 0.0
      %1187 = vadd.xlane.f32.xlu0 %v1186
      %v1188 = vpop.xlane.xlu0 %1187
      %v1189 = vsel %vm997, %v1138, 0.0
      %1190 = vadd.xlane.f32.xlu0 %v1189
      %v1191 = vpop.xlane.xlu0 %1190
      %v1192 = vsel %vm997, %v1139, 0.0
      %1193 = vadd.xlane.f32.xlu0 %v1192
      %v1194 = vpop.xlane.xlu0 %1193
      %v1195 = vsel %vm997, %v1140, 0.0
      %1196 = vadd.xlane.f32.xlu0 %v1195
      %v1197 = vpop.xlane.xlu0 %1196
      %v1198 = vsel %vm997, %v1141, 0.0
      %1199 = vadd.xlane.f32.xlu0 %v1198
      %v1200 = vpop.xlane.xlu0 %1199
      %v1201 = vsel %vm997, %v1142, 0.0
      %1202 = vadd.xlane.f32.xlu0 %v1201
      %v1203 = vpop.xlane.xlu0 %1202
      %v1204 = vsel %vm997, %v1143, 0.0
      %1205 = vadd.xlane.f32.xlu0 %v1204
      %v1206 = vpop.xlane.xlu0 %1205
      %v1207 = vsel %vm997, %v1144, 0.0
      %1208 = vadd.xlane.f32.xlu0 %v1207
      %v1209 = vpop.xlane.xlu0 %1208
      %v1210 = vsel %vm997, %v1145, 0.0
      %1211 = vadd.xlane.f32.xlu0 %v1210
      %v1212 = vpop.xlane.xlu0 %1211
      %v1213 = vsel %vm997, %v1146, 0.0
      %1214 = vadd.xlane.f32.xlu0 %v1213
      %v1215 = vpop.xlane.xlu0 %1214
      %v1216 = vsel %vm997, %v1147, 0.0
      %1217 = vadd.xlane.f32.xlu0 %v1216
      %v1218 = vpop.xlane.xlu0 %1217
      %v1219 = vsel %vm997, %v1148, 0.0
      %1220 = vadd.xlane.f32.xlu0 %v1219
      %v1221 = vpop.xlane.xlu0 %1220
      %v1222 = vsel %vm1070, %v1149, 0.0
      %1223 = vadd.xlane.f32.xlu0 %v1222
      %v1224 = vpop.xlane.xlu0 %1223
      %v1225 = vmul.f32 %v1152, %v1074
      %v1226 = vmul.f32 %v1155, %v1074
      %v1227 = vmul.f32 %v1158, %v1074
      %v1228 = vmul.f32 %v1161, %v1074
      %v1229 = vmul.f32 %v1164, %v1074
      %v1230 = vmul.f32 %v1167, %v1074
      %v1231 = vmul.f32 %v1170, %v1074
      %v1232 = vmul.f32 %v1173, %v1074
      %v1233 = vmul.f32 %v1176, %v1074
      %v1234 = vmul.f32 %v1179, %v1074
      %v1235 = vmul.f32 %v1182, %v1074
      %v1236 = vmul.f32 %v1185, %v1074
      %v1237 = vmul.f32 %v1188, %v1074
      %v1238 = vmul.f32 %v1191, %v1074
      %v1239 = vmul.f32 %v1194, %v1074
      %v1240 = vmul.f32 %v1197, %v1074
      %v1241 = vmul.f32 %v1200, %v1074
      %v1242 = vmul.f32 %v1203, %v1074
      %v1243 = vmul.f32 %v1206, %v1074
      %v1244 = vmul.f32 %v1209, %v1074
      %v1245 = vmul.f32 %v1212, %v1074
      %v1246 = vmul.f32 %v1215, %v1074
      %v1247 = vmul.f32 %v1218, %v1074
      %v1248 = vmul.f32 %v1221, %v1074
      %v1249 = vmul.f32 %v1224, %v1074
      %v1250 = vadd.f32 %v1225, 1e-05
      %v1251 = vadd.f32 %v1226, 1e-05
      %v1252 = vadd.f32 %v1227, 1e-05
      %v1253 = vadd.f32 %v1228, 1e-05
      %v1254 = vadd.f32 %v1229, 1e-05
      %v1255 = vadd.f32 %v1230, 1e-05
      %v1256 = vadd.f32 %v1231, 1e-05
      %v1257 = vadd.f32 %v1232, 1e-05
      %v1258 = vadd.f32 %v1233, 1e-05
      %v1259 = vadd.f32 %v1234, 1e-05
      %v1260 = vadd.f32 %v1235, 1e-05
      %v1261 = vadd.f32 %v1236, 1e-05
      %v1262 = vadd.f32 %v1237, 1e-05
      %v1263 = vadd.f32 %v1238, 1e-05
      %v1264 = vadd.f32 %v1239, 1e-05
      %v1265 = vadd.f32 %v1240, 1e-05
      %v1266 = vadd.f32 %v1241, 1e-05
      %v1267 = vadd.f32 %v1242, 1e-05
      %v1268 = vadd.f32 %v1243, 1e-05
      %v1269 = vadd.f32 %v1244, 1e-05
      %v1270 = vadd.f32 %v1245, 1e-05
      %v1271 = vadd.f32 %v1246, 1e-05
      %v1272 = vadd.f32 %v1247, 1e-05
      %v1273 = vadd.f32 %v1248, 1e-05
      %v1274 = vadd.f32 %v1249, 1e-05
      %v1275 = vrsqrt.pop %v1250
      %v1276 = vrsqrt.pop %v1251
      %v1277 = vrsqrt.pop %v1252
      %v1278 = vrsqrt.pop %v1253
      %v1279 = vrsqrt.pop %v1254
      %v1280 = vrsqrt.pop %v1255
      %v1281 = vrsqrt.pop %v1256
      %v1282 = vrsqrt.pop %v1257
      %v1283 = vrsqrt.pop %v1258
      %v1284 = vrsqrt.pop %v1259
      %v1285 = vrsqrt.pop %v1260
      %v1286 = vrsqrt.pop %v1261
      %v1287 = vrsqrt.pop %v1262
      %v1288 = vrsqrt.pop %v1263
      %v1289 = vrsqrt.pop %v1264
      %v1290 = vrsqrt.pop %v1265
      %v1291 = vrsqrt.pop %v1266
      %v1292 = vrsqrt.pop %v1267
      %v1293 = vrsqrt.pop %v1268
      %v1294 = vrsqrt.pop %v1269
      %v1295 = vrsqrt.pop %v1270
      %v1296 = vrsqrt.pop %v1271
      %v1297 = vrsqrt.pop %v1272
      %v1298 = vrsqrt.pop %v1273
      %v1299 = vrsqrt.pop %v1274
      %v1300 = vmul.f32 %v1100, %v1275
      %v1301 = vmul.f32 %v1101, %v1276
      %v1302 = vmul.f32 %v1102, %v1277
      %v1303 = vmul.f32 %v1103, %v1278
      %v1304 = vmul.f32 %v1104, %v1279
      %v1305 = vmul.f32 %v1105, %v1280
      %v1306 = vmul.f32 %v1106, %v1281
      %v1307 = vmul.f32 %v1107, %v1282
      %v1308 = vmul.f32 %v1108, %v1283
      %v1309 = vmul.f32 %v1109, %v1284
      %v1310 = vmul.f32 %v1110, %v1285
      %v1311 = vmul.f32 %v1111, %v1286
      %v1312 = vmul.f32 %v1112, %v1287
      %v1313 = vmul.f32 %v1113, %v1288
      %v1314 = vmul.f32 %v1114, %v1289
      %v1315 = vmul.f32 %v1115, %v1290
      %v1316 = vmul.f32 %v1116, %v1291
      %v1317 = vmul.f32 %v1117, %v1292
      %v1318 = vmul.f32 %v1118, %v1293
      %v1319 = vmul.f32 %v1119, %v1294
      %v1320 = vmul.f32 %v1120, %v1295
      %v1321 = vmul.f32 %v1121, %v1296
      %v1322 = vmul.f32 %v1122, %v1297
      %v1323 = vmul.f32 %v1123, %v1298
      %v1324 = vmul.f32 %v1124, %v1299
      %v1326 = vlaneseq
      %v1327 = vshrl.u32 %v1326, 7
      %v1328 = vsub.s32 0, %v1327
      %v1329 = vrot.slane %v333, %v1328
      %v1331 = vmul.f32 %v1300, %v1329
      %v1332 = vmul.f32 %v1301, %v1329
      %v1333 = vmul.f32 %v1302, %v1329
      %v1334 = vmul.f32 %v1303, %v1329
      %v1335 = vmul.f32 %v1304, %v1329
      %v1336 = vmul.f32 %v1305, %v1329
      %v1337 = vmul.f32 %v1306, %v1329
      %v1338 = vmul.f32 %v1307, %v1329
      %v1339 = vmul.f32 %v1308, %v1329
      %v1340 = vmul.f32 %v1309, %v1329
      %v1341 = vmul.f32 %v1310, %v1329
      %v1342 = vmul.f32 %v1311, %v1329
      %v1343 = vmul.f32 %v1312, %v1329
      %v1344 = vmul.f32 %v1313, %v1329
      %v1345 = vmul.f32 %v1314, %v1329
      %v1346 = vmul.f32 %v1315, %v1329
      %v1347 = vmul.f32 %v1316, %v1329
      %v1348 = vmul.f32 %v1317, %v1329
      %v1349 = vmul.f32 %v1318, %v1329
      %v1350 = vmul.f32 %v1319, %v1329
      %v1351 = vmul.f32 %v1320, %v1329
      %v1352 = vmul.f32 %v1321, %v1329
      %v1353 = vmul.f32 %v1322, %v1329
      %v1354 = vmul.f32 %v1323, %v1329
      %v1355 = vmul.f32 %v1324, %v1329
      %v1357 = vlaneseq
      %v1358 = vshrl.u32 %v1357, 7
      %v1359 = vsub.s32 0, %v1358
      %v1360 = vrot.slane %v334, %v1359
      %v1362 = vadd.f32 %v1331, %v1360
      %v1363 = vadd.f32 %v1332, %v1360
      %v1364 = vadd.f32 %v1333, %v1360
      %v1365 = vadd.f32 %v1334, %v1360
      %v1366 = vadd.f32 %v1335, %v1360
      %v1367 = vadd.f32 %v1336, %v1360
      %v1368 = vadd.f32 %v1337, %v1360
      %v1369 = vadd.f32 %v1338, %v1360
      %v1370 = vadd.f32 %v1339, %v1360
      %v1371 = vadd.f32 %v1340, %v1360
      %v1372 = vadd.f32 %v1341, %v1360
      %v1373 = vadd.f32 %v1342, %v1360
      %v1374 = vadd.f32 %v1343, %v1360
      %v1375 = vadd.f32 %v1344, %v1360
      %v1376 = vadd.f32 %v1345, %v1360
      %v1377 = vadd.f32 %v1346, %v1360
      %v1378 = vadd.f32 %v1347, %v1360
      %v1379 = vadd.f32 %v1348, %v1360
      %v1380 = vadd.f32 %v1349, %v1360
      %v1381 = vadd.f32 %v1350, %v1360
      %v1382 = vadd.f32 %v1351, %v1360
      %v1383 = vadd.f32 %v1352, %v1360
      %v1384 = vadd.f32 %v1353, %v1360
      %v1385 = vadd.f32 %v1354, %v1360
      %v1386 = vadd.f32 %v1355, %v1360
      %1388 = vset.pattern.permute.xlu0 0
      %1389 = vperm.xlu0 %1388, %v819
      %v1390 = vpop.permute.xlu0 %1389
      %1393 = vset.pattern.permute.xlu0 0
      %1394 = vperm.xlu0 %1393, %v820
      %v1395 = vpop.permute.xlu0 %1394
      %1398 = vset.pattern.permute.xlu0 0
      %1399 = vperm.xlu0 %1398, %v821
      %v1400 = vpop.permute.xlu0 %1399
      %1403 = vset.pattern.permute.xlu0 0
      %1404 = vperm.xlu0 %1403, %v822
      %v1405 = vpop.permute.xlu0 %1404
      %1408 = vset.pattern.permute.xlu0 0
      %1409 = vperm.xlu0 %1408, %v823
      %v1410 = vpop.permute.xlu0 %1409
      %1413 = vset.pattern.permute.xlu0 0
      %1414 = vperm.xlu0 %1413, %v824
      %v1415 = vpop.permute.xlu0 %1414
      %1418 = vset.pattern.permute.xlu0 0
      %1419 = vperm.xlu0 %1418, %v825
      %v1420 = vpop.permute.xlu0 %1419
      %1423 = vset.pattern.permute.xlu0 0
      %1424 = vperm.xlu0 %1423, %v826
      %v1425 = vpop.permute.xlu0 %1424
      %1428 = vset.pattern.permute.xlu0 0
      %1429 = vperm.xlu0 %1428, %v827
      %v1430 = vpop.permute.xlu0 %1429
      %1433 = vset.pattern.permute.xlu0 0
      %1434 = vperm.xlu0 %1433, %v828
      %v1435 = vpop.permute.xlu0 %1434
      %1438 = vset.pattern.permute.xlu0 0
      %1439 = vperm.xlu0 %1438, %v829
      %v1440 = vpop.permute.xlu0 %1439
      %1443 = vset.pattern.permute.xlu0 0
      %1444 = vperm.xlu0 %1443, %v830
      %v1445 = vpop.permute.xlu0 %1444
      %1448 = vset.pattern.permute.xlu0 0
      %1449 = vperm.xlu0 %1448, %v831
      %v1450 = vpop.permute.xlu0 %1449
      %1453 = vset.pattern.permute.xlu0 0
      %1454 = vperm.xlu0 %1453, %v832
      %v1455 = vpop.permute.xlu0 %1454
      %1458 = vset.pattern.permute.xlu0 0
      %1459 = vperm.xlu0 %1458, %v833
      %v1460 = vpop.permute.xlu0 %1459
      %1463 = vset.pattern.permute.xlu0 0
      %1464 = vperm.xlu0 %1463, %v834
      %v1465 = vpop.permute.xlu0 %1464
      %1468 = vset.pattern.permute.xlu0 0
      %1469 = vperm.xlu0 %1468, %v835
      %v1470 = vpop.permute.xlu0 %1469
      %1473 = vset.pattern.permute.xlu0 0
      %1474 = vperm.xlu0 %1473, %v836
      %v1475 = vpop.permute.xlu0 %1474
      %1478 = vset.pattern.permute.xlu0 0
      %1479 = vperm.xlu0 %1478, %v837
      %v1480 = vpop.permute.xlu0 %1479
      %1483 = vset.pattern.permute.xlu0 0
      %1484 = vperm.xlu0 %1483, %v838
      %v1485 = vpop.permute.xlu0 %1484
      %1488 = vset.pattern.permute.xlu0 0
      %1489 = vperm.xlu0 %1488, %v839
      %v1490 = vpop.permute.xlu0 %1489
      %1493 = vset.pattern.permute.xlu0 0
      %1494 = vperm.xlu0 %1493, %v840
      %v1495 = vpop.permute.xlu0 %1494
      %1498 = vset.pattern.permute.xlu0 0
      %1499 = vperm.xlu0 %1498, %v841
      %v1500 = vpop.permute.xlu0 %1499
      %1503 = vset.pattern.permute.xlu0 0
      %1504 = vperm.xlu0 %1503, %v842
      %v1505 = vpop.permute.xlu0 %1504
      %1508 = vset.pattern.permute.xlu0 0
      %1509 = vperm.xlu0 %1508, %v843
      %v1510 = vpop.permute.xlu0 %1509
      %1513 = vset.pattern.permute.xlu0 0
      %1514 = vperm.xlu0 %1513, %v844
      %v1515 = vpop.permute.xlu0 %1514
      %1518 = vset.pattern.permute.xlu0 0
      %1519 = vperm.xlu0 %1518, %v845
      %v1520 = vpop.permute.xlu0 %1519
      %1523 = vset.pattern.permute.xlu0 0
      %1524 = vperm.xlu0 %1523, %v846
      %v1525 = vpop.permute.xlu0 %1524
      %1528 = vset.pattern.permute.xlu0 0
      %1529 = vperm.xlu0 %1528, %v847
      %v1530 = vpop.permute.xlu0 %1529
      %1533 = vset.pattern.permute.xlu0 0
      %1534 = vperm.xlu0 %1533, %v848
      %v1535 = vpop.permute.xlu0 %1534
      %1538 = vset.pattern.permute.xlu0 0
      %1539 = vperm.xlu0 %1538, %v849
      %v1540 = vpop.permute.xlu0 %1539
      %1543 = vset.pattern.permute.xlu0 0
      %1544 = vperm.xlu0 %1543, %v850
      %v1545 = vpop.permute.xlu0 %1544
      %1548 = vset.pattern.permute.xlu0 0
      %1549 = vperm.xlu0 %1548, %v851
      %v1550 = vpop.permute.xlu0 %1549
      %1553 = vset.pattern.permute.xlu0 0
      %1554 = vperm.xlu0 %1553, %v852
      %v1555 = vpop.permute.xlu0 %1554
      %1558 = vset.pattern.permute.xlu0 0
      %1559 = vperm.xlu0 %1558, %v853
      %v1560 = vpop.permute.xlu0 %1559
      %1563 = vset.pattern.permute.xlu0 0
      %1564 = vperm.xlu0 %1563, %v854
      %v1565 = vpop.permute.xlu0 %1564
      %1568 = vset.pattern.permute.xlu0 0
      %1569 = vperm.xlu0 %1568, %v855
      %v1570 = vpop.permute.xlu0 %1569
      %1573 = vset.pattern.permute.xlu0 0
      %1574 = vperm.xlu0 %1573, %v856
      %v1575 = vpop.permute.xlu0 %1574
      %1578 = vset.pattern.permute.xlu0 0
      %1579 = vperm.xlu0 %1578, %v857
      %v1580 = vpop.permute.xlu0 %1579
      %1583 = vset.pattern.permute.xlu0 0
      %1584 = vperm.xlu0 %1583, %v858
      %v1585 = vpop.permute.xlu0 %1584
      %1588 = vset.pattern.permute.xlu0 0
      %1589 = vperm.xlu0 %1588, %v859
      %v1590 = vpop.permute.xlu0 %1589
      %1593 = vset.pattern.permute.xlu0 0
      %1594 = vperm.xlu0 %1593, %v860
      %v1595 = vpop.permute.xlu0 %1594
      %1598 = vset.pattern.permute.xlu0 0
      %1599 = vperm.xlu0 %1598, %v861
      %v1600 = vpop.permute.xlu0 %1599
      %1603 = vset.pattern.permute.xlu0 0
      %1604 = vperm.xlu0 %1603, %v862
      %v1605 = vpop.permute.xlu0 %1604
      %1608 = vset.pattern.permute.xlu0 0
      %1609 = vperm.xlu0 %1608, %v863
      %v1610 = vpop.permute.xlu0 %1609
      %1613 = vset.pattern.permute.xlu0 0
      %1614 = vperm.xlu0 %1613, %v864
      %v1615 = vpop.permute.xlu0 %1614
      %1618 = vset.pattern.permute.xlu0 0
      %1619 = vperm.xlu0 %1618, %v865
      %v1620 = vpop.permute.xlu0 %1619
      %1623 = vset.pattern.permute.xlu0 0
      %1624 = vperm.xlu0 %1623, %v866
      %v1625 = vpop.permute.xlu0 %1624
      %1628 = vset.pattern.permute.xlu0 0
      %1629 = vperm.xlu0 %1628, %v867
      %v1630 = vpop.permute.xlu0 %1629
      %1633 = vset.pattern.permute.xlu0 0
      %1634 = vperm.xlu0 %1633, %v868
      %v1635 = vpop.permute.xlu0 %1634
      %1638 = vset.pattern.permute.xlu0 0
      %1639 = vperm.xlu0 %1638, %v869
      %v1640 = vpop.permute.xlu0 %1639
      %1643 = vset.pattern.permute.xlu0 0
      %1644 = vperm.xlu0 %1643, %v870
      %v1645 = vpop.permute.xlu0 %1644
      %1648 = vset.pattern.permute.xlu0 0
      %1649 = vperm.xlu0 %1648, %v871
      %v1650 = vpop.permute.xlu0 %1649
      %1653 = vset.pattern.permute.xlu0 0
      %1654 = vperm.xlu0 %1653, %v872
      %v1655 = vpop.permute.xlu0 %1654
      %1658 = vset.pattern.permute.xlu0 0
      %1659 = vperm.xlu0 %1658, %v873
      %v1660 = vpop.permute.xlu0 %1659
      %1663 = vset.pattern.permute.xlu0 0
      %1664 = vperm.xlu0 %1663, %v874
      %v1665 = vpop.permute.xlu0 %1664
      %1668 = vset.pattern.permute.xlu0 0
      %1669 = vperm.xlu0 %1668, %v875
      %v1670 = vpop.permute.xlu0 %1669
      %1673 = vset.pattern.permute.xlu0 0
      %1674 = vperm.xlu0 %1673, %v876
      %v1675 = vpop.permute.xlu0 %1674
      %1678 = vset.pattern.permute.xlu0 0
      %1679 = vperm.xlu0 %1678, %v877
      %v1680 = vpop.permute.xlu0 %1679
      %1683 = vset.pattern.permute.xlu0 0
      %1684 = vperm.xlu0 %1683, %v878
      %v1685 = vpop.permute.xlu0 %1684
      %1688 = vset.pattern.permute.xlu0 0
      %1689 = vperm.xlu0 %1688, %v879
      %v1690 = vpop.permute.xlu0 %1689
      %1693 = vset.pattern.permute.xlu0 0
      %1694 = vperm.xlu0 %1693, %v880
      %v1695 = vpop.permute.xlu0 %1694
      %1698 = vset.pattern.permute.xlu0 0
      %1699 = vperm.xlu0 %1698, %v881
      %v1700 = vpop.permute.xlu0 %1699
      %1703 = vset.pattern.permute.xlu0 0
      %1704 = vperm.xlu0 %1703, %v882
      %v1705 = vpop.permute.xlu0 %1704
      %vm1707 = vcmask 556032
      %v1709 = vsel %vm1707, %v336, 0
      %v1712 = vsel %vm1707, %v338, 0
      %v1715 = vsel %vm1707, %v340, 0
      %v1718 = vsel %vm1707, %v342, 0
      %v1721 = vsel %vm1707, %v344, 0
      %v1724 = vsel %vm1707, %v346, 0
      %v1727 = vsel %vm1707, %v348, 0
      %v1730 = vsel %vm1707, %v350, 0
      %v1733 = vsel %vm1707, %v352, 0
      %v1736 = vsel %vm1707, %v354, 0
      %v1739 = vsel %vm1707, %v356, 0
      %v1742 = vsel %vm1707, %v358, 0
      %v1745 = vsel %vm1707, %v360, 0
      %v1748 = vsel %vm1707, %v362, 0
      %v1751 = vsel %vm1707, %v364, 0
      %v1754 = vsel %vm1707, %v366, 0
      %v1757 = vsel %vm1707, %v368, 0
      %v1760 = vsel %vm1707, %v370, 0
      %v1763 = vsel %vm1707, %v372, 0
      %v1766 = vsel %vm1707, %v374, 0
      %v1769 = vsel %vm1707, %v376, 0
      %v1772 = vsel %vm1707, %v378, 0
      %v1775 = vsel %vm1707, %v380, 0
      %v1778 = vsel %vm1707, %v382, 0
      %v1781 = vsel %vm1707, %v384, 0
      %v1784 = vsel %vm1707, %v386, 0
      %v1787 = vsel %vm1707, %v388, 0
      %v1790 = vsel %vm1707, %v390, 0
      %v1793 = vsel %vm1707, %v392, 0
      %v1796 = vsel %vm1707, %v394, 0
      %v1799 = vsel %vm1707, %v396, 0
      %v1802 = vsel %vm1707, %v398, 0
      %v1805 = vsel %vm1707, %v400, 0
      %v1808 = vsel %vm1707, %v402, 0
      %v1811 = vsel %vm1707, %v404, 0
      %v1814 = vsel %vm1707, %v406, 0
      %v1817 = vsel %vm1707, %v408, 0
      %v1820 = vsel %vm1707, %v410, 0
      %v1823 = vsel %vm1707, %v412, 0
      %v1826 = vsel %vm1707, %v414, 0
      %v1829 = vsel %vm1707, %v416, 0
      %v1832 = vsel %vm1707, %v418, 0
      %v1835 = vsel %vm1707, %v420, 0
      %v1838 = vsel %vm1707, %v422, 0
      %v1841 = vsel %vm1707, %v424, 0
      %v1844 = vsel %vm1707, %v426, 0
      %v1847 = vsel %vm1707, %v428, 0
      %v1850 = vsel %vm1707, %v430, 0
      %v1853 = vsel %vm1707, %v432, 0
      %v1856 = vsel %vm1707, %v434, 0
      %v1859 = vsel %vm1707, %v436, 0
      %v1862 = vsel %vm1707, %v438, 0
      %v1865 = vsel %vm1707, %v440, 0
      %v1868 = vsel %vm1707, %v442, 0
      %v1871 = vsel %vm1707, %v444, 0
      %v1874 = vsel %vm1707, %v446, 0
      %v1877 = vsel %vm1707, %v448, 0
      %v1880 = vsel %vm1707, %v450, 0
      %v1883 = vsel %vm1707, %v452, 0
      %v1886 = vsel %vm1707, %v454, 0
      %v1889 = vsel %vm1707, %v456, 0
      %v1892 = vsel %vm1707, %v458, 0
      %v1895 = vsel %vm1707, %v460, 0
      %v1898 = vsel %vm1707, %v462, 0
      %vm1900 = vcmask 1043456
      %v1902 = vsel %vm1900, %v1386, 0
      %1904 = vmatprep.subr.mxu0 0.0
      %1905 = vmatpush1.msra.mxu0 %v1377
      %1906 = vmatprep.subr.mxu0 0.0
      %1907 = vmatpush1.msra.mxu0 %v1376
      %1908 = vmatprep.subr.mxu0 0.0
      %1909 = vmatpush1.msra.mxu0 %v1375
      %1910 = vmatprep.subr.mxu0 0.0
      %1911 = vmatpush1.msra.mxu0 %v1374
      %1912 = vmatprep.subr.mxu0 0.0
      %1913 = vmatpush1.msra.mxu0 %v1373
      %1914 = vmatprep.subr.mxu0 0.0
      %1915 = vmatpush1.msra.mxu0 %v1372
      %1916 = vmatprep.subr.mxu0 0.0
      %1917 = vmatpush1.msra.mxu0 %v1371
      %1918 = vmatprep.subr.mxu0 0.0
      %1919 = vmatpush1.msra.mxu0 %v1370
      %1920 = vmatprep.subr.mxu0 0.0
      %1921 = vmatpush1.msra.mxu0 %v1369
      %1922 = vmatprep.subr.mxu0 0.0
      %1923 = vmatpush1.msra.mxu0 %v1368
      %1924 = vmatprep.subr.mxu0 0.0
      %1925 = vmatpush1.msra.mxu0 %v1367
      %1926 = vmatprep.subr.mxu0 0.0
      %1927 = vmatpush1.msra.mxu0 %v1366
      %1928 = vmatprep.subr.mxu0 0.0
      %1929 = vmatpush1.msra.mxu0 %v1365
      %1930 = vmatprep.subr.mxu0 0.0
      %1931 = vmatpush1.msra.mxu0 %v1364
      %1932 = vmatprep.subr.mxu0 0.0
      %1933 = vmatpush1.msra.mxu0 %v1363
      %1934 = vmatprep.subr.mxu0 0.0
      %1935 = vmatpush1.msra.mxu0 %v1362
      %1936 = vmatprep.subr.mxu0 0.0
      %1937 = vmatpush2.msra.mxu0 0.0
      %1938 = vmatprep.subr.mxu0 0.0
      %1939 = vmatpush2.msra.mxu0 0.0
      %1940 = vmatprep.subr.mxu0 0.0
      %1941 = vmatpush2.msra.mxu0 0.0
      %1942 = vmatprep.subr.mxu0 0.0
      %1943 = vmatpush2.msra.mxu0 0.0
      %1944 = vmatprep.subr.mxu0 0.0
      %1945 = vmatpush2.msra.mxu0 0.0
      %1946 = vmatprep.subr.mxu0 0.0
      %1947 = vmatpush2.msra.mxu0 0.0
      %1948 = vmatprep.subr.mxu0 0.0
      %1949 = vmatpush2.msra.mxu0 0.0
      %1950 = vmatprep.subr.mxu0 0.0
      %1951 = vmatpush2.msra.mxu0 %v1902
      %1952 = vmatprep.subr.mxu0 0.0
      %1953 = vmatpush2.msra.mxu0 %v1385
      %1954 = vmatprep.subr.mxu0 0.0
      %1955 = vmatpush2.msra.mxu0 %v1384
      %1956 = vmatprep.subr.mxu0 0.0
      %1957 = vmatpush2.msra.mxu0 %v1383
      %1958 = vmatprep.subr.mxu0 0.0
      %1959 = vmatpush2.msra.mxu0 %v1382
      %1960 = vmatprep.subr.mxu0 0.0
      %1961 = vmatpush2.msra.mxu0 %v1381
      %1962 = vmatprep.subr.mxu0 0.0
      %1963 = vmatpush2.msra.mxu0 %v1380
      %1964 = vmatprep.subr.mxu0 0.0
      %1965 = vmatpush2.msra.mxu0 %v1379
      %1966 = vmatprep.subr.mxu0 0.0
      %1967 = vmatpush2.msra.mxu0 %v1378
      %1968 = vmatprep.mubr.f32.mxu0 %v1709
      %1969 = vmatmul.mubr.f32.gmra.mxu0 %v335
      %v1970 = vpop.f32.mrf.mxu0
      %v1971 = vadd.f32 %v1390, %v1970
      %v1972 = vpop.f32.mrf.mxu0
      %1973 = vmatprep.mubr.f32.mxu0 %v1712
      %1974 = vmatmul.mubr.f32.gmra.mxu0 %v337
      %v1975 = vpop.f32.mrf.mxu0
      %v1976 = vadd.f32 %v1395, %v1975
      %v1977 = vpop.f32.mrf.mxu0
      %1978 = vmatprep.mubr.f32.mxu0 %v1715
      %1979 = vmatmul.mubr.f32.gmra.mxu0 %v339
      %v1980 = vpop.f32.mrf.mxu0
      %v1981 = vadd.f32 %v1400, %v1980
      %v1982 = vpop.f32.mrf.mxu0
      %1983 = vmatprep.mubr.f32.mxu0 %v1718
      %1984 = vmatmul.mubr.f32.gmra.mxu0 %v341
      %v1985 = vpop.f32.mrf.mxu0
      %v1986 = vadd.f32 %v1405, %v1985
      %v1987 = vpop.f32.mrf.mxu0
      %1988 = vmatprep.mubr.f32.mxu0 %v1721
      %1989 = vmatmul.mubr.f32.gmra.mxu0 %v343
      %v1990 = vpop.f32.mrf.mxu0
      %v1991 = vadd.f32 %v1410, %v1990
      %v1992 = vpop.f32.mrf.mxu0
      %1993 = vmatprep.mubr.f32.mxu0 %v1724
      %1994 = vmatmul.mubr.f32.gmra.mxu0 %v345
      %v1995 = vpop.f32.mrf.mxu0
      %v1996 = vadd.f32 %v1415, %v1995
      %v1997 = vpop.f32.mrf.mxu0
      %1998 = vmatprep.mubr.f32.mxu0 %v1727
      %1999 = vmatmul.mubr.f32.gmra.mxu0 %v347
      %v2000 = vpop.f32.mrf.mxu0
      %v2001 = vadd.f32 %v1420, %v2000
      %v2002 = vpop.f32.mrf.mxu0
      %2003 = vmatprep.mubr.f32.mxu0 %v1730
      %2004 = vmatmul.mubr.f32.gmra.mxu0 %v349
      %v2005 = vpop.f32.mrf.mxu0
      %v2006 = vadd.f32 %v1425, %v2005
      %v2007 = vpop.f32.mrf.mxu0
      %2008 = vmatprep.mubr.f32.mxu0 %v1733
      %2009 = vmatmul.mubr.f32.gmra.mxu0 %v351
      %v2010 = vpop.f32.mrf.mxu0
      %v2011 = vadd.f32 %v1430, %v2010
      %v2012 = vpop.f32.mrf.mxu0
      %2013 = vmatprep.mubr.f32.mxu0 %v1736
      %2014 = vmatmul.mubr.f32.gmra.mxu0 %v353
      %v2015 = vpop.f32.mrf.mxu0
      %v2016 = vadd.f32 %v1435, %v2015
      %v2017 = vpop.f32.mrf.mxu0
      %2018 = vmatprep.mubr.f32.mxu0 %v1739
      %2019 = vmatmul.mubr.f32.gmra.mxu0 %v355
      %v2020 = vpop.f32.mrf.mxu0
      %v2021 = vadd.f32 %v1440, %v2020
      %v2022 = vpop.f32.mrf.mxu0
      %2023 = vmatprep.mubr.f32.mxu0 %v1742
      %2024 = vmatmul.mubr.f32.gmra.mxu0 %v357
      %v2025 = vpop.f32.mrf.mxu0
      %v2026 = vadd.f32 %v1445, %v2025
      %v2027 = vpop.f32.mrf.mxu0
      %2028 = vmatprep.mubr.f32.mxu0 %v1745
      %2029 = vmatmul.mubr.f32.gmra.mxu0 %v359
      %v2030 = vpop.f32.mrf.mxu0
      %v2031 = vadd.f32 %v1450, %v2030
      %v2032 = vpop.f32.mrf.mxu0
      %2033 = vmatprep.mubr.f32.mxu0 %v1748
      %2034 = vmatmul.mubr.f32.gmra.mxu0 %v361
      %v2035 = vpop.f32.mrf.mxu0
      %v2036 = vadd.f32 %v1455, %v2035
      %v2037 = vpop.f32.mrf.mxu0
      %2038 = vmatprep.mubr.f32.mxu0 %v1751
      %2039 = vmatmul.mubr.f32.gmra.mxu0 %v363
      %v2040 = vpop.f32.mrf.mxu0
      %v2041 = vadd.f32 %v1460, %v2040
      %v2042 = vpop.f32.mrf.mxu0
      %2043 = vmatprep.mubr.f32.mxu0 %v1754
      %2044 = vmatmul.mubr.f32.gmra.mxu0 %v365
      %v2045 = vpop.f32.mrf.mxu0
      %v2046 = vadd.f32 %v1465, %v2045
      %v2047 = vpop.f32.mrf.mxu0
      %2048 = vmatprep.mubr.f32.mxu0 %v1757
      %2049 = vmatmul.mubr.f32.gmra.mxu0 %v367
      %v2050 = vpop.f32.mrf.mxu0
      %v2051 = vadd.f32 %v1470, %v2050
      %v2052 = vpop.f32.mrf.mxu0
      %2053 = vmatprep.mubr.f32.mxu0 %v1760
      %2054 = vmatmul.mubr.f32.gmra.mxu0 %v369
      %v2055 = vpop.f32.mrf.mxu0
      %v2056 = vadd.f32 %v1475, %v2055
      %v2057 = vpop.f32.mrf.mxu0
      %2058 = vmatprep.mubr.f32.mxu0 %v1763
      %2059 = vmatmul.mubr.f32.gmra.mxu0 %v371
      %v2060 = vpop.f32.mrf.mxu0
      %v2061 = vadd.f32 %v1480, %v2060
      %v2062 = vpop.f32.mrf.mxu0
      %2063 = vmatprep.mubr.f32.mxu0 %v1766
      %2064 = vmatmul.mubr.f32.gmra.mxu0 %v373
      %v2065 = vpop.f32.mrf.mxu0
      %v2066 = vadd.f32 %v1485, %v2065
      %v2067 = vpop.f32.mrf.mxu0
      %2068 = vmatprep.mubr.f32.mxu0 %v1769
      %2069 = vmatmul.mubr.f32.gmra.mxu0 %v375
      %v2070 = vpop.f32.mrf.mxu0
      %v2071 = vadd.f32 %v1490, %v2070
      %v2072 = vpop.f32.mrf.mxu0
      %2073 = vmatprep.mubr.f32.mxu0 %v1772
      %2074 = vmatmul.mubr.f32.gmra.mxu0 %v377
      %v2075 = vpop.f32.mrf.mxu0
      %v2076 = vadd.f32 %v1495, %v2075
      %v2077 = vpop.f32.mrf.mxu0
      %2078 = vmatprep.mubr.f32.mxu0 %v1775
      %2079 = vmatmul.mubr.f32.gmra.mxu0 %v379
      %v2080 = vpop.f32.mrf.mxu0
      %v2081 = vadd.f32 %v1500, %v2080
      %v2082 = vpop.f32.mrf.mxu0
      %2083 = vmatprep.mubr.f32.mxu0 %v1778
      %2084 = vmatmul.mubr.f32.gmra.mxu0 %v381
      %v2085 = vpop.f32.mrf.mxu0
      %v2086 = vadd.f32 %v1505, %v2085
      %v2087 = vpop.f32.mrf.mxu0
      %2088 = vmatprep.mubr.f32.mxu0 %v1781
      %2089 = vmatmul.mubr.f32.gmra.mxu0 %v383
      %v2090 = vpop.f32.mrf.mxu0
      %v2091 = vadd.f32 %v1510, %v2090
      %v2092 = vpop.f32.mrf.mxu0
      %2093 = vmatprep.mubr.f32.mxu0 %v1784
      %2094 = vmatmul.mubr.f32.gmra.mxu0 %v385
      %v2095 = vpop.f32.mrf.mxu0
      %v2096 = vadd.f32 %v1515, %v2095
      %v2097 = vpop.f32.mrf.mxu0
      %2098 = vmatprep.mubr.f32.mxu0 %v1787
      %2099 = vmatmul.mubr.f32.gmra.mxu0 %v387
      %v2100 = vpop.f32.mrf.mxu0
      %v2101 = vadd.f32 %v1520, %v2100
      %v2102 = vpop.f32.mrf.mxu0
      %2103 = vmatprep.mubr.f32.mxu0 %v1790
      %2104 = vmatmul.mubr.f32.gmra.mxu0 %v389
      %v2105 = vpop.f32.mrf.mxu0
      %v2106 = vadd.f32 %v1525, %v2105
      %v2107 = vpop.f32.mrf.mxu0
      %2108 = vmatprep.mubr.f32.mxu0 %v1793
      %2109 = vmatmul.mubr.f32.gmra.mxu0 %v391
      %v2110 = vpop.f32.mrf.mxu0
      %v2111 = vadd.f32 %v1530, %v2110
      %v2112 = vpop.f32.mrf.mxu0
      %2113 = vmatprep.mubr.f32.mxu0 %v1796
      %2114 = vmatmul.mubr.f32.gmra.mxu0 %v393
      %v2115 = vpop.f32.mrf.mxu0
      %v2116 = vadd.f32 %v1535, %v2115
      %v2117 = vpop.f32.mrf.mxu0
      %2118 = vmatprep.mubr.f32.mxu0 %v1799
      %2119 = vmatmul.mubr.f32.gmra.mxu0 %v395
      %v2120 = vpop.f32.mrf.mxu0
      %v2121 = vadd.f32 %v1540, %v2120
      %v2122 = vpop.f32.mrf.mxu0
      %2123 = vmatprep.mubr.f32.mxu0 %v1802
      %2124 = vmatmul.mubr.f32.gmra.mxu0 %v397
      %v2125 = vpop.f32.mrf.mxu0
      %v2126 = vadd.f32 %v1545, %v2125
      %v2127 = vpop.f32.mrf.mxu0
      %2128 = vmatprep.mubr.f32.mxu0 %v1805
      %2129 = vmatmul.mubr.f32.gmra.mxu0 %v399
      %v2130 = vpop.f32.mrf.mxu0
      %v2131 = vadd.f32 %v1550, %v2130
      %v2132 = vpop.f32.mrf.mxu0
      %2133 = vmatprep.mubr.f32.mxu0 %v1808
      %2134 = vmatmul.mubr.f32.gmra.mxu0 %v401
      %v2135 = vpop.f32.mrf.mxu0
      %v2136 = vadd.f32 %v1555, %v2135
      %v2137 = vpop.f32.mrf.mxu0
      %2138 = vmatprep.mubr.f32.mxu0 %v1811
      %2139 = vmatmul.mubr.f32.gmra.mxu0 %v403
      %v2140 = vpop.f32.mrf.mxu0
      %v2141 = vadd.f32 %v1560, %v2140
      %v2142 = vpop.f32.mrf.mxu0
      %2143 = vmatprep.mubr.f32.mxu0 %v1814
      %2144 = vmatmul.mubr.f32.gmra.mxu0 %v405
      %v2145 = vpop.f32.mrf.mxu0
      %v2146 = vadd.f32 %v1565, %v2145
      %v2147 = vpop.f32.mrf.mxu0
      %2148 = vmatprep.mubr.f32.mxu0 %v1817
      %2149 = vmatmul.mubr.f32.gmra.mxu0 %v407
      %v2150 = vpop.f32.mrf.mxu0
      %v2151 = vadd.f32 %v1570, %v2150
      %v2152 = vpop.f32.mrf.mxu0
      %2153 = vmatprep.mubr.f32.mxu0 %v1820
      %2154 = vmatmul.mubr.f32.gmra.mxu0 %v409
      %v2155 = vpop.f32.mrf.mxu0
      %v2156 = vadd.f32 %v1575, %v2155
      %v2157 = vpop.f32.mrf.mxu0
      %2158 = vmatprep.mubr.f32.mxu0 %v1823
      %2159 = vmatmul.mubr.f32.gmra.mxu0 %v411
      %v2160 = vpop.f32.mrf.mxu0
      %v2161 = vadd.f32 %v1580, %v2160
      %v2162 = vpop.f32.mrf.mxu0
      %2163 = vmatprep.mubr.f32.mxu0 %v1826
      %2164 = vmatmul.mubr.f32.gmra.mxu0 %v413
      %v2165 = vpop.f32.mrf.mxu0
      %v2166 = vadd.f32 %v1585, %v2165
      %v2167 = vpop.f32.mrf.mxu0
      %2168 = vmatprep.mubr.f32.mxu0 %v1829
      %2169 = vmatmul.mubr.f32.gmra.mxu0 %v415
      %v2170 = vpop.f32.mrf.mxu0
      %v2171 = vadd.f32 %v1590, %v2170
      %v2172 = vpop.f32.mrf.mxu0
      %2173 = vmatprep.mubr.f32.mxu0 %v1832
      %2174 = vmatmul.mubr.f32.gmra.mxu0 %v417
      %v2175 = vpop.f32.mrf.mxu0
      %v2176 = vadd.f32 %v1595, %v2175
      %v2177 = vpop.f32.mrf.mxu0
      %2178 = vmatprep.mubr.f32.mxu0 %v1835
      %2179 = vmatmul.mubr.f32.gmra.mxu0 %v419
      %v2180 = vpop.f32.mrf.mxu0
      %v2181 = vadd.f32 %v1600, %v2180
      %v2182 = vpop.f32.mrf.mxu0
      %2183 = vmatprep.mubr.f32.mxu0 %v1838
      %2184 = vmatmul.mubr.f32.gmra.mxu0 %v421
      %v2185 = vpop.f32.mrf.mxu0
      %v2186 = vadd.f32 %v1605, %v2185
      %v2187 = vpop.f32.mrf.mxu0
      %2188 = vmatprep.mubr.f32.mxu0 %v1841
      %2189 = vmatmul.mubr.f32.gmra.mxu0 %v423
      %v2190 = vpop.f32.mrf.mxu0
      %v2191 = vadd.f32 %v1610, %v2190
      %v2192 = vpop.f32.mrf.mxu0
      %2193 = vmatprep.mubr.f32.mxu0 %v1844
      %2194 = vmatmul.mubr.f32.gmra.mxu0 %v425
      %v2195 = vpop.f32.mrf.mxu0
      %v2196 = vadd.f32 %v1615, %v2195
      %v2197 = vpop.f32.mrf.mxu0
      %2198 = vmatprep.mubr.f32.mxu0 %v1847
      %2199 = vmatmul.mubr.f32.gmra.mxu0 %v427
      %v2200 = vpop.f32.mrf.mxu0
      %v2201 = vadd.f32 %v1620, %v2200
      %v2202 = vpop.f32.mrf.mxu0
      %2203 = vmatprep.mubr.f32.mxu0 %v1850
      %2204 = vmatmul.mubr.f32.gmra.mxu0 %v429
      %v2205 = vpop.f32.mrf.mxu0
      %v2206 = vadd.f32 %v1625, %v2205
      %v2207 = vpop.f32.mrf.mxu0
      %2208 = vmatprep.mubr.f32.mxu0 %v1853
      %2209 = vmatmul.mubr.f32.gmra.mxu0 %v431
      %v2210 = vpop.f32.mrf.mxu0
      %v2211 = vadd.f32 %v1630, %v2210
      %v2212 = vpop.f32.mrf.mxu0
      %2213 = vmatprep.mubr.f32.mxu0 %v1856
      %2214 = vmatmul.mubr.f32.gmra.mxu0 %v433
      %v2215 = vpop.f32.mrf.mxu0
      %v2216 = vadd.f32 %v1635, %v2215
      %v2217 = vpop.f32.mrf.mxu0
      %2218 = vmatprep.mubr.f32.mxu0 %v1859
      %2219 = vmatmul.mubr.f32.gmra.mxu0 %v435
      %v2220 = vpop.f32.mrf.mxu0
      %v2221 = vadd.f32 %v1640, %v2220
      %v2222 = vpop.f32.mrf.mxu0
      %2223 = vmatprep.mubr.f32.mxu0 %v1862
      %2224 = vmatmul.mubr.f32.gmra.mxu0 %v437
      %v2225 = vpop.f32.mrf.mxu0
      %v2226 = vadd.f32 %v1645, %v2225
      %v2227 = vpop.f32.mrf.mxu0
      %2228 = vmatprep.mubr.f32.mxu0 %v1865
      %2229 = vmatmul.mubr.f32.gmra.mxu0 %v439
      %v2230 = vpop.f32.mrf.mxu0
      %v2231 = vadd.f32 %v1650, %v2230
      %v2232 = vpop.f32.mrf.mxu0
      %2233 = vmatprep.mubr.f32.mxu0 %v1868
      %2234 = vmatmul.mubr.f32.gmra.mxu0 %v441
      %v2235 = vpop.f32.mrf.mxu0
      %v2236 = vadd.f32 %v1655, %v2235
      %v2237 = vpop.f32.mrf.mxu0
      %2238 = vmatprep.mubr.f32.mxu0 %v1871
      %2239 = vmatmul.mubr.f32.gmra.mxu0 %v443
      %v2240 = vpop.f32.mrf.mxu0
      %v2241 = vadd.f32 %v1660, %v2240
      %v2242 = vpop.f32.mrf.mxu0
      %2243 = vmatprep.mubr.f32.mxu0 %v1874
      %2244 = vmatmul.mubr.f32.gmra.mxu0 %v445
      %v2245 = vpop.f32.mrf.mxu0
      %v2246 = vadd.f32 %v1665, %v2245
      %v2247 = vpop.f32.mrf.mxu0
      %2248 = vmatprep.mubr.f32.mxu0 %v1877
      %2249 = vmatmul.mubr.f32.gmra.mxu0 %v447
      %v2250 = vpop.f32.mrf.mxu0
      %v2251 = vadd.f32 %v1670, %v2250
      %v2252 = vpop.f32.mrf.mxu0
      %2253 = vmatprep.mubr.f32.mxu0 %v1880
      %2254 = vmatmul.mubr.f32.gmra.mxu0 %v449
      %v2255 = vpop.f32.mrf.mxu0
      %v2256 = vadd.f32 %v1675, %v2255
      %v2257 = vpop.f32.mrf.mxu0
      %2258 = vmatprep.mubr.f32.mxu0 %v1883
      %2259 = vmatmul.mubr.f32.gmra.mxu0 %v451
      %v2260 = vpop.f32.mrf.mxu0
      %v2261 = vadd.f32 %v1680, %v2260
      %v2262 = vpop.f32.mrf.mxu0
      %2263 = vmatprep.mubr.f32.mxu0 %v1886
      %2264 = vmatmul.mubr.f32.gmra.mxu0 %v453
      %v2265 = vpop.f32.mrf.mxu0
      %v2266 = vadd.f32 %v1685, %v2265
      %v2267 = vpop.f32.mrf.mxu0
      %2268 = vmatprep.mubr.f32.mxu0 %v1889
      %2269 = vmatmul.mubr.f32.gmra.mxu0 %v455
      %v2270 = vpop.f32.mrf.mxu0
      %v2271 = vadd.f32 %v1690, %v2270
      %v2272 = vpop.f32.mrf.mxu0
      %2273 = vmatprep.mubr.f32.mxu0 %v1892
      %2274 = vmatmul.mubr.f32.gmra.mxu0 %v457
      %v2275 = vpop.f32.mrf.mxu0
      %v2276 = vadd.f32 %v1695, %v2275
      %v2277 = vpop.f32.mrf.mxu0
      %2278 = vmatprep.mubr.f32.mxu0 %v1895
      %2279 = vmatmul.mubr.f32.gmra.mxu0 %v459
      %v2280 = vpop.f32.mrf.mxu0
      %v2281 = vadd.f32 %v1700, %v2280
      %v2282 = vpop.f32.mrf.mxu0
      %2283 = vmatprep.mubr.f32.mxu0 %v1898
      %2284 = vmatmul.mubr.f32.gmra.mxu0 %v461
      %v2285 = vpop.f32.mrf.mxu0
      %v2286 = vadd.f32 %v1705, %v2285
      %v2287 = vpop.f32.mrf.mxu0
      %2288 = vdwg.mxu0
      %v2289 = vmul.f32 %v1971, 0.5
      %v2290 = vmul.f32 %v1976, 0.5
      %v2291 = vmul.f32 %v1981, 0.5
      %v2292 = vmul.f32 %v1986, 0.5
      %v2293 = vmul.f32 %v1991, 0.5
      %v2294 = vmul.f32 %v1996, 0.5
      %v2295 = vmul.f32 %v2001, 0.5
      %v2296 = vmul.f32 %v2006, 0.5
      %v2297 = vmul.f32 %v2011, 0.5
      %v2298 = vmul.f32 %v2016, 0.5
      %v2299 = vmul.f32 %v2021, 0.5
      %v2300 = vmul.f32 %v2026, 0.5
      %v2301 = vmul.f32 %v2031, 0.5
      %v2302 = vmul.f32 %v2036, 0.5
      %v2303 = vmul.f32 %v2041, 0.5
      %v2304 = vmul.f32 %v2046, 0.5
      %v2305 = vmul.f32 %v2051, 0.5
      %v2306 = vmul.f32 %v2056, 0.5
      %v2307 = vmul.f32 %v2061, 0.5
      %v2308 = vmul.f32 %v2066, 0.5
      %v2309 = vmul.f32 %v2071, 0.5
      %v2310 = vmul.f32 %v2076, 0.5
      %v2311 = vmul.f32 %v2081, 0.5
      %v2312 = vmul.f32 %v2086, 0.5
      %v2313 = vmul.f32 %v2091, 0.5
      %v2314 = vmul.f32 %v2096, 0.5
      %v2315 = vmul.f32 %v2101, 0.5
      %v2316 = vmul.f32 %v2106, 0.5
      %v2317 = vmul.f32 %v2111, 0.5
      %v2318 = vmul.f32 %v2116, 0.5
      %v2319 = vmul.f32 %v2121, 0.5
      %v2320 = vmul.f32 %v2126, 0.5
      %v2321 = vmul.f32 %v2131, 0.5
      %v2322 = vmul.f32 %v2136, 0.5
      %v2323 = vmul.f32 %v2141, 0.5
      %v2324 = vmul.f32 %v2146, 0.5
      %v2325 = vmul.f32 %v2151, 0.5
      %v2326 = vmul.f32 %v2156, 0.5
      %v2327 = vmul.f32 %v2161, 0.5
      %v2328 = vmul.f32 %v2166, 0.5
      %v2329 = vmul.f32 %v2171, 0.5
      %v2330 = vmul.f32 %v2176, 0.5
      %v2331 = vmul.f32 %v2181, 0.5
      %v2332 = vmul.f32 %v2186, 0.5
      %v2333 = vmul.f32 %v2191, 0.5
      %v2334 = vmul.f32 %v2196, 0.5
      %v2335 = vmul.f32 %v2201, 0.5
      %v2336 = vmul.f32 %v2206, 0.5
      %v2337 = vmul.f32 %v2211, 0.5
      %v2338 = vmul.f32 %v2216, 0.5
      %v2339 = vmul.f32 %v2221, 0.5
      %v2340 = vmul.f32 %v2226, 0.5
      %v2341 = vmul.f32 %v2231, 0.5
      %v2342 = vmul.f32 %v2236, 0.5
      %v2343 = vmul.f32 %v2241, 0.5
      %v2344 = vmul.f32 %v2246, 0.5
      %v2345 = vmul.f32 %v2251, 0.5
      %v2346 = vmul.f32 %v2256, 0.5
      %v2347 = vmul.f32 %v2261, 0.5
      %v2348 = vmul.f32 %v2266, 0.5
      %v2349 = vmul.f32 %v2271, 0.5
      %v2350 = vmul.f32 %v2276, 0.5
      %v2351 = vmul.f32 %v2281, 0.5
      %v2352 = vmul.f32 %v2286, 0.5
      %v2353 = vmul.f32 %v1971, 0.70710677
      %v2354 = vmul.f32 %v1976, 0.70710677
      %v2355 = vmul.f32 %v1981, 0.70710677
      %v2356 = vmul.f32 %v1986, 0.70710677
      %v2357 = vmul.f32 %v1991, 0.70710677
      %v2358 = vmul.f32 %v1996, 0.70710677
      %v2359 = vmul.f32 %v2001, 0.70710677
      %v2360 = vmul.f32 %v2006, 0.70710677
      %v2361 = vmul.f32 %v2011, 0.70710677
      %v2362 = vmul.f32 %v2016, 0.70710677
      %v2363 = vmul.f32 %v2021, 0.70710677
      %v2364 = vmul.f32 %v2026, 0.70710677
      %v2365 = vmul.f32 %v2031, 0.70710677
      %v2366 = vmul.f32 %v2036, 0.70710677
      %v2367 = vmul.f32 %v2041, 0.70710677
      %v2368 = vmul.f32 %v2046, 0.70710677
      %v2369 = vmul.f32 %v2051, 0.70710677
      %v2370 = vmul.f32 %v2056, 0.70710677
      %v2371 = vmul.f32 %v2061, 0.70710677
      %v2372 = vmul.f32 %v2066, 0.70710677
      %v2373 = vmul.f32 %v2071, 0.70710677
      %v2374 = vmul.f32 %v2076, 0.70710677
      %v2375 = vmul.f32 %v2081, 0.70710677
      %v2376 = vmul.f32 %v2086, 0.70710677
      %v2377 = vmul.f32 %v2091, 0.70710677
      %v2378 = vmul.f32 %v2096, 0.70710677
      %v2379 = vmul.f32 %v2101, 0.70710677
      %v2380 = vmul.f32 %v2106, 0.70710677
      %v2381 = vmul.f32 %v2111, 0.70710677
      %v2382 = vmul.f32 %v2116, 0.70710677
      %v2383 = vmul.f32 %v2121, 0.70710677
      %v2384 = vmul.f32 %v2126, 0.70710677
      %v2385 = vmul.f32 %v2131, 0.70710677
      %v2386 = vmul.f32 %v2136, 0.70710677
      %v2387 = vmul.f32 %v2141, 0.70710677
      %v2388 = vmul.f32 %v2146, 0.70710677
      %v2389 = vmul.f32 %v2151, 0.70710677
      %v2390 = vmul.f32 %v2156, 0.70710677
      %v2391 = vmul.f32 %v2161, 0.70710677
      %v2392 = vmul.f32 %v2166, 0.70710677
      %v2393 = vmul.f32 %v2171, 0.70710677
      %v2394 = vmul.f32 %v2176, 0.70710677
      %v2395 = vmul.f32 %v2181, 0.70710677
      %v2396 = vmul.f32 %v2186, 0.70710677
      %v2397 = vmul.f32 %v2191, 0.70710677
      %v2398 = vmul.f32 %v2196, 0.70710677
      %v2399 = vmul.f32 %v2201, 0.70710677
      %v2400 = vmul.f32 %v2206, 0.70710677
      %v2401 = vmul.f32 %v2211, 0.70710677
      %v2402 = vmul.f32 %v2216, 0.70710677
      %v2403 = vmul.f32 %v2221, 0.70710677
      %v2404 = vmul.f32 %v2226, 0.70710677
      %v2405 = vmul.f32 %v2231, 0.70710677
      %v2406 = vmul.f32 %v2236, 0.70710677
      %v2407 = vmul.f32 %v2241, 0.70710677
      %v2408 = vmul.f32 %v2246, 0.70710677
      %v2409 = vmul.f32 %v2251, 0.70710677
      %v2410 = vmul.f32 %v2256, 0.70710677
      %v2411 = vmul.f32 %v2261, 0.70710677
      %v2412 = vmul.f32 %v2266, 0.70710677
      %v2413 = vmul.f32 %v2271, 0.70710677
      %v2414 = vmul.f32 %v2276, 0.70710677
      %v2415 = vmul.f32 %v2281, 0.70710677
      %v2416 = vmul.f32 %v2286, 0.70710677
      %v2417 = verf.f32.pop %v2353
      %v2418 = verf.f32.pop %v2354
      %v2419 = verf.f32.pop %v2355
      %v2420 = verf.f32.pop %v2356
      %v2421 = verf.f32.pop %v2357
      %v2422 = verf.f32.pop %v2358
      %v2423 = verf.f32.pop %v2359
      %v2424 = verf.f32.pop %v2360
      %v2425 = verf.f32.pop %v2361
      %v2426 = verf.f32.pop %v2362
      %v2427 = verf.f32.pop %v2363
      %v2428 = verf.f32.pop %v2364
      %v2429 = verf.f32.pop %v2365
      %v2430 = verf.f32.pop %v2366
      %v2431 = verf.f32.pop %v2367
      %v2432 = verf.f32.pop %v2368
      %v2433 = verf.f32.pop %v2369
      %v2434 = verf.f32.pop %v2370
      %v2435 = verf.f32.pop %v2371
      %v2436 = verf.f32.pop %v2372
      %v2437 = verf.f32.pop %v2373
      %v2438 = verf.f32.pop %v2374
      %v2439 = verf.f32.pop %v2375
      %v2440 = verf.f32.pop %v2376
      %v2441 = verf.f32.pop %v2377
      %v2442 = verf.f32.pop %v2378
      %v2443 = verf.f32.pop %v2379
      %v2444 = verf.f32.pop %v2380
      %v2445 = verf.f32.pop %v2381
      %v2446 = verf.f32.pop %v2382
      %v2447 = verf.f32.pop %v2383
      %v2448 = verf.f32.pop %v2384
      %v2449 = verf.f32.pop %v2385
      %v2450 = verf.f32.pop %v2386
      %v2451 = verf.f32.pop %v2387
      %v2452 = verf.f32.pop %v2388
      %v2453 = verf.f32.pop %v2389
      %v2454 = verf.f32.pop %v2390
      %v2455 = verf.f32.pop %v2391
      %v2456 = verf.f32.pop %v2392
      %v2457 = verf.f32.pop %v2393
      %v2458 = verf.f32.pop %v2394
      %v2459 = verf.f32.pop %v2395
      %v2460 = verf.f32.pop %v2396
      %v2461 = verf.f32.pop %v2397
      %v2462 = verf.f32.pop %v2398
      %v2463 = verf.f32.pop %v2399
      %v2464 = verf.f32.pop %v2400
      %v2465 = verf.f32.pop %v2401
      %v2466 = verf.f32.pop %v2402
      %v2467 = verf.f32.pop %v2403
      %v2468 = verf.f32.pop %v2404
      %v2469 = verf.f32.pop %v2405
      %v2470 = verf.f32.pop %v2406
      %v2471 = verf.f32.pop %v2407
      %v2472 = verf.f32.pop %v2408
      %v2473 = verf.f32.pop %v2409
      %v2474 = verf.f32.pop %v2410
      %v2475 = verf.f32.pop %v2411
      %v2476 = verf.f32.pop %v2412
      %v2477 = verf.f32.pop %v2413
      %v2478 = verf.f32.pop %v2414
      %v2479 = verf.f32.pop %v2415
      %v2480 = verf.f32.pop %v2416
      %v2481 = vadd.f32 %v2417, 1.0
      %v2482 = vadd.f32 %v2418, 1.0
      %v2483 = vadd.f32 %v2419, 1.0
      %v2484 = vadd.f32 %v2420, 1.0
      %v2485 = vadd.f32 %v2421, 1.0
      %v2486 = vadd.f32 %v2422, 1.0
      %v2487 = vadd.f32 %v2423, 1.0
      %v2488 = vadd.f32 %v2424, 1.0
      %v2489 = vadd.f32 %v2425, 1.0
      %v2490 = vadd.f32 %v2426, 1.0
      %v2491 = vadd.f32 %v2427, 1.0
      %v2492 = vadd.f32 %v2428, 1.0
      %v2493 = vadd.f32 %v2429, 1.0
      %v2494 = vadd.f32 %v2430, 1.0
      %v2495 = vadd.f32 %v2431, 1.0
      %v2496 = vadd.f32 %v2432, 1.0
      %v2497 = vadd.f32 %v2433, 1.0
      %v2498 = vadd.f32 %v2434, 1.0
      %v2499 = vadd.f32 %v2435, 1.0
      %v2500 = vadd.f32 %v2436, 1.0
      %v2501 = vadd.f32 %v2437, 1.0
      %v2502 = vadd.f32 %v2438, 1.0
      %v2503 = vadd.f32 %v2439, 1.0
      %v2504 = vadd.f32 %v2440, 1.0
      %v2505 = vadd.f32 %v2441, 1.0
      %v2506 = vadd.f32 %v2442, 1.0
      %v2507 = vadd.f32 %v2443, 1.0
      %v2508 = vadd.f32 %v2444, 1.0
      %v2509 = vadd.f32 %v2445, 1.0
      %v2510 = vadd.f32 %v2446, 1.0
      %v2511 = vadd.f32 %v2447, 1.0
      %v2512 = vadd.f32 %v2448, 1.0
      %v2513 = vadd.f32 %v2449, 1.0
      %v2514 = vadd.f32 %v2450, 1.0
      %v2515 = vadd.f32 %v2451, 1.0
      %v2516 = vadd.f32 %v2452, 1.0
      %v2517 = vadd.f32 %v2453, 1.0
      %v2518 = vadd.f32 %v2454, 1.0
      %v2519 = vadd.f32 %v2455, 1.0
      %v2520 = vadd.f32 %v2456, 1.0
      %v2521 = vadd.f32 %v2457, 1.0
      %v2522 = vadd.f32 %v2458, 1.0
      %v2523 = vadd.f32 %v2459, 1.0
      %v2524 = vadd.f32 %v2460, 1.0
      %v2525 = vadd.f32 %v2461, 1.0
      %v2526 = vadd.f32 %v2462, 1.0
      %v2527 = vadd.f32 %v2463, 1.0
      %v2528 = vadd.f32 %v2464, 1.0
      %v2529 = vadd.f32 %v2465, 1.0
      %v2530 = vadd.f32 %v2466, 1.0
      %v2531 = vadd.f32 %v2467, 1.0
      %v2532 = vadd.f32 %v2468, 1.0
      %v2533 = vadd.f32 %v2469, 1.0
      %v2534 = vadd.f32 %v2470, 1.0
      %v2535 = vadd.f32 %v2471, 1.0
      %v2536 = vadd.f32 %v2472, 1.0
      %v2537 = vadd.f32 %v2473, 1.0
      %v2538 = vadd.f32 %v2474, 1.0
      %v2539 = vadd.f32 %v2475, 1.0
      %v2540 = vadd.f32 %v2476, 1.0
      %v2541 = vadd.f32 %v2477, 1.0
      %v2542 = vadd.f32 %v2478, 1.0
      %v2543 = vadd.f32 %v2479, 1.0
      %v2544 = vadd.f32 %v2480, 1.0
      %v2545 = vmul.f32 %v2289, %v2481
      %v2546 = vmul.f32 %v2290, %v2482
      %v2547 = vmul.f32 %v2291, %v2483
      %v2548 = vmul.f32 %v2292, %v2484
      %v2549 = vmul.f32 %v2293, %v2485
      %v2550 = vmul.f32 %v2294, %v2486
      %v2551 = vmul.f32 %v2295, %v2487
      %v2552 = vmul.f32 %v2296, %v2488
      %v2553 = vmul.f32 %v2297, %v2489
      %v2554 = vmul.f32 %v2298, %v2490
      %v2555 = vmul.f32 %v2299, %v2491
      %v2556 = vmul.f32 %v2300, %v2492
      %v2557 = vmul.f32 %v2301, %v2493
      %v2558 = vmul.f32 %v2302, %v2494
      %v2559 = vmul.f32 %v2303, %v2495
      %v2560 = vmul.f32 %v2304, %v2496
      %v2561 = vmul.f32 %v2305, %v2497
      %v2562 = vmul.f32 %v2306, %v2498
      %v2563 = vmul.f32 %v2307, %v2499
      %v2564 = vmul.f32 %v2308, %v2500
      %v2565 = vmul.f32 %v2309, %v2501
      %v2566 = vmul.f32 %v2310, %v2502
      %v2567 = vmul.f32 %v2311, %v2503
      %v2568 = vmul.f32 %v2312, %v2504
      %v2569 = vmul.f32 %v2313, %v2505
      %v2570 = vmul.f32 %v2314, %v2506
      %v2571 = vmul.f32 %v2315, %v2507
      %v2572 = vmul.f32 %v2316, %v2508
      %v2573 = vmul.f32 %v2317, %v2509
      %v2574 = vmul.f32 %v2318, %v2510
      %v2575 = vmul.f32 %v2319, %v2511
      %v2576 = vmul.f32 %v2320, %v2512
      %v2577 = vmul.f32 %v2321, %v2513
      %v2578 = vmul.f32 %v2322, %v2514
      %v2579 = vmul.f32 %v2323, %v2515
      %v2580 = vmul.f32 %v2324, %v2516
      %v2581 = vmul.f32 %v2325, %v2517
      %v2582 = vmul.f32 %v2326, %v2518
      %v2583 = vmul.f32 %v2327, %v2519
      %v2584 = vmul.f32 %v2328, %v2520
      %v2585 = vmul.f32 %v2329, %v2521
      %v2586 = vmul.f32 %v2330, %v2522
      %v2587 = vmul.f32 %v2331, %v2523
      %v2588 = vmul.f32 %v2332, %v2524
      %v2589 = vmul.f32 %v2333, %v2525
      %v2590 = vmul.f32 %v2334, %v2526
      %v2591 = vmul.f32 %v2335, %v2527
      %v2592 = vmul.f32 %v2336, %v2528
      %v2593 = vmul.f32 %v2337, %v2529
      %v2594 = vmul.f32 %v2338, %v2530
      %v2595 = vmul.f32 %v2339, %v2531
      %v2596 = vmul.f32 %v2340, %v2532
      %v2597 = vmul.f32 %v2341, %v2533
      %v2598 = vmul.f32 %v2342, %v2534
      %v2599 = vmul.f32 %v2343, %v2535
      %v2600 = vmul.f32 %v2344, %v2536
      %v2601 = vmul.f32 %v2345, %v2537
      %v2602 = vmul.f32 %v2346, %v2538
      %v2603 = vmul.f32 %v2347, %v2539
      %v2604 = vmul.f32 %v2348, %v2540
      %v2605 = vmul.f32 %v2349, %v2541
      %v2606 = vmul.f32 %v2350, %v2542
      %v2607 = vmul.f32 %v2351, %v2543
      %v2608 = vmul.f32 %v2352, %v2544
      %2610 = vset.pattern.permute.xlu0 0
      %2611 = vperm.xlu0 %2610, %v883
      %v2612 = vpop.permute.xlu0 %2611
      %2615 = vset.pattern.permute.xlu0 0
      %2616 = vperm.xlu0 %2615, %v884
      %v2617 = vpop.permute.xlu0 %2616
      %2620 = vset.pattern.permute.xlu0 0
      %2621 = vperm.xlu0 %2620, %v885
      %v2622 = vpop.permute.xlu0 %2621
      %2625 = vset.pattern.permute.xlu0 0
      %2626 = vperm.xlu0 %2625, %v886
      %v2627 = vpop.permute.xlu0 %2626
      %2630 = vset.pattern.permute.xlu0 0
      %2631 = vperm.xlu0 %2630, %v887
      %v2632 = vpop.permute.xlu0 %2631
      %2635 = vset.pattern.permute.xlu0 0
      %2636 = vperm.xlu0 %2635, %v888
      %v2637 = vpop.permute.xlu0 %2636
      %2640 = vset.pattern.permute.xlu0 0
      %2641 = vperm.xlu0 %2640, %v889
      %v2642 = vpop.permute.xlu0 %2641
      %2645 = vset.pattern.permute.xlu0 0
      %2646 = vperm.xlu0 %2645, %v890
      %v2647 = vpop.permute.xlu0 %2646
      %2650 = vset.pattern.permute.xlu0 0
      %2651 = vperm.xlu0 %2650, %v891
      %v2652 = vpop.permute.xlu0 %2651
      %2655 = vset.pattern.permute.xlu0 0
      %2656 = vperm.xlu0 %2655, %v892
      %v2657 = vpop.permute.xlu0 %2656
      %2660 = vset.pattern.permute.xlu0 0
      %2661 = vperm.xlu0 %2660, %v893
      %v2662 = vpop.permute.xlu0 %2661
      %2665 = vset.pattern.permute.xlu0 0
      %2666 = vperm.xlu0 %2665, %v894
      %v2667 = vpop.permute.xlu0 %2666
      %2670 = vset.pattern.permute.xlu0 0
      %2671 = vperm.xlu0 %2670, %v895
      %v2672 = vpop.permute.xlu0 %2671
      %2675 = vset.pattern.permute.xlu0 0
      %2676 = vperm.xlu0 %2675, %v896
      %v2677 = vpop.permute.xlu0 %2676
      %2680 = vset.pattern.permute.xlu0 0
      %2681 = vperm.xlu0 %2680, %v897
      %v2682 = vpop.permute.xlu0 %2681
      %2685 = vset.pattern.permute.xlu0 0
      %2686 = vperm.xlu0 %2685, %v898
      %v2687 = vpop.permute.xlu0 %2686
      %2690 = vset.pattern.permute.xlu0 0
      %2691 = vperm.xlu0 %2690, %v899
      %v2692 = vpop.permute.xlu0 %2691
      %2695 = vset.pattern.permute.xlu0 0
      %2696 = vperm.xlu0 %2695, %v900
      %v2697 = vpop.permute.xlu0 %2696
      %2700 = vset.pattern.permute.xlu0 0
      %2701 = vperm.xlu0 %2700, %v901
      %v2702 = vpop.permute.xlu0 %2701
      %2705 = vset.pattern.permute.xlu0 0
      %2706 = vperm.xlu0 %2705, %v902
      %v2707 = vpop.permute.xlu0 %2706
      %2710 = vset.pattern.permute.xlu0 0
      %2711 = vperm.xlu0 %2710, %v903
      %v2712 = vpop.permute.xlu0 %2711
      %2715 = vset.pattern.permute.xlu0 0
      %2716 = vperm.xlu0 %2715, %v904
      %v2717 = vpop.permute.xlu0 %2716
      %2720 = vset.pattern.permute.xlu0 0
      %2721 = vperm.xlu0 %2720, %v905
      %v2722 = vpop.permute.xlu0 %2721
      %2725 = vset.pattern.permute.xlu0 0
      %2726 = vperm.xlu0 %2725, %v906
      %v2727 = vpop.permute.xlu0 %2726
      %2730 = vset.pattern.permute.xlu0 0
      %2731 = vperm.xlu0 %2730, %v907
      %v2732 = vpop.permute.xlu0 %2731
      %2735 = vset.pattern.permute.xlu0 0
      %2736 = vperm.xlu0 %2735, %v908
      %v2737 = vpop.permute.xlu0 %2736
      %2740 = vset.pattern.permute.xlu0 0
      %2741 = vperm.xlu0 %2740, %v909
      %v2742 = vpop.permute.xlu0 %2741
      %2745 = vset.pattern.permute.xlu0 0
      %2746 = vperm.xlu0 %2745, %v910
      %v2747 = vpop.permute.xlu0 %2746
      %2750 = vset.pattern.permute.xlu0 0
      %2751 = vperm.xlu0 %2750, %v911
      %v2752 = vpop.permute.xlu0 %2751
      %2755 = vset.pattern.permute.xlu0 0
      %2756 = vperm.xlu0 %2755, %v912
      %v2757 = vpop.permute.xlu0 %2756
      %2760 = vset.pattern.permute.xlu0 0
      %2761 = vperm.xlu0 %2760, %v913
      %v2762 = vpop.permute.xlu0 %2761
      %2765 = vset.pattern.permute.xlu0 0
      %2766 = vperm.xlu0 %2765, %v914
      %v2767 = vpop.permute.xlu0 %2766
      %2770 = vset.pattern.permute.xlu0 0
      %2771 = vperm.xlu0 %2770, %v915
      %v2772 = vpop.permute.xlu0 %2771
      %2775 = vset.pattern.permute.xlu0 0
      %2776 = vperm.xlu0 %2775, %v916
      %v2777 = vpop.permute.xlu0 %2776
      %2780 = vset.pattern.permute.xlu0 0
      %2781 = vperm.xlu0 %2780, %v917
      %v2782 = vpop.permute.xlu0 %2781
      %2785 = vset.pattern.permute.xlu0 0
      %2786 = vperm.xlu0 %2785, %v918
      %v2787 = vpop.permute.xlu0 %2786
      %2790 = vset.pattern.permute.xlu0 0
      %2791 = vperm.xlu0 %2790, %v919
      %v2792 = vpop.permute.xlu0 %2791
      %2795 = vset.pattern.permute.xlu0 0
      %2796 = vperm.xlu0 %2795, %v920
      %v2797 = vpop.permute.xlu0 %2796
      %2800 = vset.pattern.permute.xlu0 0
      %2801 = vperm.xlu0 %2800, %v921
      %v2802 = vpop.permute.xlu0 %2801
      %2805 = vset.pattern.permute.xlu0 0
      %2806 = vperm.xlu0 %2805, %v922
      %v2807 = vpop.permute.xlu0 %2806
      %2810 = vset.pattern.permute.xlu0 0
      %2811 = vperm.xlu0 %2810, %v923
      %v2812 = vpop.permute.xlu0 %2811
      %2815 = vset.pattern.permute.xlu0 0
      %2816 = vperm.xlu0 %2815, %v924
      %v2817 = vpop.permute.xlu0 %2816
      %2820 = vset.pattern.permute.xlu0 0
      %2821 = vperm.xlu0 %2820, %v925
      %v2822 = vpop.permute.xlu0 %2821
      %2825 = vset.pattern.permute.xlu0 0
      %2826 = vperm.xlu0 %2825, %v926
      %v2827 = vpop.permute.xlu0 %2826
      %2830 = vset.pattern.permute.xlu0 0
      %2831 = vperm.xlu0 %2830, %v927
      %v2832 = vpop.permute.xlu0 %2831
      %2835 = vset.pattern.permute.xlu0 0
      %2836 = vperm.xlu0 %2835, %v928
      %v2837 = vpop.permute.xlu0 %2836
      %2840 = vset.pattern.permute.xlu0 0
      %2841 = vperm.xlu0 %2840, %v929
      %v2842 = vpop.permute.xlu0 %2841
      %2845 = vset.pattern.permute.xlu0 0
      %2846 = vperm.xlu0 %2845, %v930
      %v2847 = vpop.permute.xlu0 %2846
      %2850 = vset.pattern.permute.xlu0 0
      %2851 = vperm.xlu0 %2850, %v931
      %v2852 = vpop.permute.xlu0 %2851
      %2855 = vset.pattern.permute.xlu0 0
      %2856 = vperm.xlu0 %2855, %v932
      %v2857 = vpop.permute.xlu0 %2856
      %2860 = vset.pattern.permute.xlu0 0
      %2861 = vperm.xlu0 %2860, %v933
      %v2862 = vpop.permute.xlu0 %2861
      %2865 = vset.pattern.permute.xlu0 0
      %2866 = vperm.xlu0 %2865, %v934
      %v2867 = vpop.permute.xlu0 %2866
      %2870 = vset.pattern.permute.xlu0 0
      %2871 = vperm.xlu0 %2870, %v935
      %v2872 = vpop.permute.xlu0 %2871
      %2875 = vset.pattern.permute.xlu0 0
      %2876 = vperm.xlu0 %2875, %v936
      %v2877 = vpop.permute.xlu0 %2876
      %2880 = vset.pattern.permute.xlu0 0
      %2881 = vperm.xlu0 %2880, %v937
      %v2882 = vpop.permute.xlu0 %2881
      %2885 = vset.pattern.permute.xlu0 0
      %2886 = vperm.xlu0 %2885, %v938
      %v2887 = vpop.permute.xlu0 %2886
      %2890 = vset.pattern.permute.xlu0 0
      %2891 = vperm.xlu0 %2890, %v939
      %v2892 = vpop.permute.xlu0 %2891
      %2895 = vset.pattern.permute.xlu0 0
      %2896 = vperm.xlu0 %2895, %v940
      %v2897 = vpop.permute.xlu0 %2896
      %2900 = vset.pattern.permute.xlu0 0
      %2901 = vperm.xlu0 %2900, %v941
      %v2902 = vpop.permute.xlu0 %2901
      %2905 = vset.pattern.permute.xlu0 0
      %2906 = vperm.xlu0 %2905, %v942
      %v2907 = vpop.permute.xlu0 %2906
      %2910 = vset.pattern.permute.xlu0 0
      %2911 = vperm.xlu0 %2910, %v943
      %v2912 = vpop.permute.xlu0 %2911
      %2915 = vset.pattern.permute.xlu0 0
      %2916 = vperm.xlu0 %2915, %v944
      %v2917 = vpop.permute.xlu0 %2916
      %2920 = vset.pattern.permute.xlu0 0
      %2921 = vperm.xlu0 %2920, %v945
      %v2922 = vpop.permute.xlu0 %2921
      %2925 = vset.pattern.permute.xlu0 0
      %2926 = vperm.xlu0 %2925, %v946
      %v2927 = vpop.permute.xlu0 %2926
      %2929 = vmatprep.subr.mxu0 0.0
      %2930 = vmatpush1.msra.mxu0 %v2560
      %2931 = vmatprep.subr.mxu0 0.0
      %2932 = vmatpush1.msra.mxu0 %v2559
      %2933 = vmatprep.subr.mxu0 0.0
      %2934 = vmatpush1.msra.mxu0 %v2558
      %2935 = vmatprep.subr.mxu0 0.0
      %2936 = vmatpush1.msra.mxu0 %v2557
      %2937 = vmatprep.subr.mxu0 0.0
      %2938 = vmatpush1.msra.mxu0 %v2556
      %2939 = vmatprep.subr.mxu0 0.0
      %2940 = vmatpush1.msra.mxu0 %v2555
      %2941 = vmatprep.subr.mxu0 0.0
      %2942 = vmatpush1.msra.mxu0 %v2554
      %2943 = vmatprep.subr.mxu0 0.0
      %2944 = vmatpush1.msra.mxu0 %v2553
      %2945 = vmatprep.subr.mxu0 0.0
      %2946 = vmatpush1.msra.mxu0 %v2552
      %2947 = vmatprep.subr.mxu0 0.0
      %2948 = vmatpush1.msra.mxu0 %v2551
      %2949 = vmatprep.subr.mxu0 0.0
      %2950 = vmatpush1.msra.mxu0 %v2550
      %2951 = vmatprep.subr.mxu0 0.0
      %2952 = vmatpush1.msra.mxu0 %v2549
      %2953 = vmatprep.subr.mxu0 0.0
      %2954 = vmatpush1.msra.mxu0 %v2548
      %2955 = vmatprep.subr.mxu0 0.0
      %2956 = vmatpush1.msra.mxu0 %v2547
      %2957 = vmatprep.subr.mxu0 0.0
      %2958 = vmatpush1.msra.mxu0 %v2546
      %2959 = vmatprep.subr.mxu0 0.0
      %2960 = vmatpush1.msra.mxu0 %v2545
      %2961 = vmatprep.subr.mxu0 0.0
      %2962 = vmatpush2.msra.mxu0 %v2576
      %2963 = vmatprep.subr.mxu0 0.0
      %2964 = vmatpush2.msra.mxu0 %v2575
      %2965 = vmatprep.subr.mxu0 0.0
      %2966 = vmatpush2.msra.mxu0 %v2574
      %2967 = vmatprep.subr.mxu0 0.0
      %2968 = vmatpush2.msra.mxu0 %v2573
      %2969 = vmatprep.subr.mxu0 0.0
      %2970 = vmatpush2.msra.mxu0 %v2572
      %2971 = vmatprep.subr.mxu0 0.0
      %2972 = vmatpush2.msra.mxu0 %v2571
      %2973 = vmatprep.subr.mxu0 0.0
      %2974 = vmatpush2.msra.mxu0 %v2570
      %2975 = vmatprep.subr.mxu0 0.0
      %2976 = vmatpush2.msra.mxu0 %v2569
      %2977 = vmatprep.subr.mxu0 0.0
      %2978 = vmatpush2.msra.mxu0 %v2568
      %2979 = vmatprep.subr.mxu0 0.0
      %2980 = vmatpush2.msra.mxu0 %v2567
      %2981 = vmatprep.subr.mxu0 0.0
      %2982 = vmatpush2.msra.mxu0 %v2566
      %2983 = vmatprep.subr.mxu0 0.0
      %2984 = vmatpush2.msra.mxu0 %v2565
      %2985 = vmatprep.subr.mxu0 0.0
      %2986 = vmatpush2.msra.mxu0 %v2564
      %2987 = vmatprep.subr.mxu0 0.0
      %2988 = vmatpush2.msra.mxu0 %v2563
      %2989 = vmatprep.subr.mxu0 0.0
      %2990 = vmatpush2.msra.mxu0 %v2562
      %2991 = vmatprep.subr.mxu0 0.0
      %2992 = vmatpush2.msra.mxu0 %v2561
      %2993 = vmatprep.mubr.f32.mxu0 %v464
      %2994 = vmatmul.mubr.f32.gmra.mxu0 %v463
      %v2995 = vpop.f32.mrf.mxu0
      %v2996 = vadd.f32 %v2612, %v2995
      %v2997 = vpop.f32.mrf.mxu0
      %2998 = vmatprep.mubr.f32.mxu0 %v468
      %2999 = vmatmul.mubr.f32.gmra.mxu0 %v467
      %v3000 = vpop.f32.mrf.mxu0
      %v3001 = vadd.f32 %v2617, %v3000
      %v3002 = vpop.f32.mrf.mxu0
      %3003 = vmatprep.mubr.f32.mxu0 %v472
      %3004 = vmatmul.mubr.f32.gmra.mxu0 %v471
      %v3005 = vpop.f32.mrf.mxu0
      %v3006 = vadd.f32 %v2622, %v3005
      %v3007 = vpop.f32.mrf.mxu0
      %3008 = vmatprep.mubr.f32.mxu0 %v476
      %3009 = vmatmul.mubr.f32.gmra.mxu0 %v475
      %v3010 = vpop.f32.mrf.mxu0
      %v3011 = vadd.f32 %v2627, %v3010
      %v3012 = vpop.f32.mrf.mxu0
      %3013 = vmatprep.mubr.f32.mxu0 %v480
      %3014 = vmatmul.mubr.f32.gmra.mxu0 %v479
      %v3015 = vpop.f32.mrf.mxu0
      %v3016 = vadd.f32 %v2632, %v3015
      %v3017 = vpop.f32.mrf.mxu0
      %3018 = vmatprep.mubr.f32.mxu0 %v484
      %3019 = vmatmul.mubr.f32.gmra.mxu0 %v483
      %v3020 = vpop.f32.mrf.mxu0
      %v3021 = vadd.f32 %v2637, %v3020
      %v3022 = vpop.f32.mrf.mxu0
      %3023 = vmatprep.mubr.f32.mxu0 %v488
      %3024 = vmatmul.mubr.f32.gmra.mxu0 %v487
      %v3025 = vpop.f32.mrf.mxu0
      %v3026 = vadd.f32 %v2642, %v3025
      %v3027 = vpop.f32.mrf.mxu0
      %3028 = vmatprep.mubr.f32.mxu0 %v492
      %3029 = vmatmul.mubr.f32.gmra.mxu0 %v491
      %v3030 = vpop.f32.mrf.mxu0
      %v3031 = vadd.f32 %v2647, %v3030
      %v3032 = vpop.f32.mrf.mxu0
      %3033 = vmatprep.mubr.f32.mxu0 %v496
      %3034 = vmatmul.mubr.f32.gmra.mxu0 %v495
      %v3035 = vpop.f32.mrf.mxu0
      %v3036 = vadd.f32 %v2652, %v3035
      %v3037 = vpop.f32.mrf.mxu0
      %3038 = vmatprep.mubr.f32.mxu0 %v500
      %3039 = vmatmul.mubr.f32.gmra.mxu0 %v499
      %v3040 = vpop.f32.mrf.mxu0
      %v3041 = vadd.f32 %v2657, %v3040
      %v3042 = vpop.f32.mrf.mxu0
      %3043 = vmatprep.mubr.f32.mxu0 %v504
      %3044 = vmatmul.mubr.f32.gmra.mxu0 %v503
      %v3045 = vpop.f32.mrf.mxu0
      %v3046 = vadd.f32 %v2662, %v3045
      %v3047 = vpop.f32.mrf.mxu0
      %3048 = vmatprep.mubr.f32.mxu0 %v508
      %3049 = vmatmul.mubr.f32.gmra.mxu0 %v507
      %v3050 = vpop.f32.mrf.mxu0
      %v3051 = vadd.f32 %v2667, %v3050
      %v3052 = vpop.f32.mrf.mxu0
      %3053 = vmatprep.mubr.f32.mxu0 %v512
      %3054 = vmatmul.mubr.f32.gmra.mxu0 %v511
      %v3055 = vpop.f32.mrf.mxu0
      %v3056 = vadd.f32 %v2672, %v3055
      %v3057 = vpop.f32.mrf.mxu0
      %3058 = vmatprep.mubr.f32.mxu0 %v516
      %3059 = vmatmul.mubr.f32.gmra.mxu0 %v515
      %v3060 = vpop.f32.mrf.mxu0
      %v3061 = vadd.f32 %v2677, %v3060
      %v3062 = vpop.f32.mrf.mxu0
      %3063 = vmatprep.mubr.f32.mxu0 %v520
      %3064 = vmatmul.mubr.f32.gmra.mxu0 %v519
      %v3065 = vpop.f32.mrf.mxu0
      %v3066 = vadd.f32 %v2682, %v3065
      %v3067 = vpop.f32.mrf.mxu0
      %3068 = vmatprep.mubr.f32.mxu0 %v524
      %3069 = vmatmul.mubr.f32.gmra.mxu0 %v523
      %v3070 = vpop.f32.mrf.mxu0
      %v3071 = vadd.f32 %v2687, %v3070
      %v3072 = vpop.f32.mrf.mxu0
      %3073 = vmatprep.mubr.f32.mxu0 %v528
      %3074 = vmatmul.mubr.f32.gmra.mxu0 %v527
      %v3075 = vpop.f32.mrf.mxu0
      %v3076 = vadd.f32 %v2692, %v3075
      %v3077 = vpop.f32.mrf.mxu0
      %3078 = vmatprep.mubr.f32.mxu0 %v532
      %3079 = vmatmul.mubr.f32.gmra.mxu0 %v531
      %v3080 = vpop.f32.mrf.mxu0
      %v3081 = vadd.f32 %v2697, %v3080
      %v3082 = vpop.f32.mrf.mxu0
      %3083 = vmatprep.mubr.f32.mxu0 %v536
      %3084 = vmatmul.mubr.f32.gmra.mxu0 %v535
      %v3085 = vpop.f32.mrf.mxu0
      %v3086 = vadd.f32 %v2702, %v3085
      %v3087 = vpop.f32.mrf.mxu0
      %3088 = vmatprep.mubr.f32.mxu0 %v540
      %3089 = vmatmul.mubr.f32.gmra.mxu0 %v539
      %v3090 = vpop.f32.mrf.mxu0
      %v3091 = vadd.f32 %v2707, %v3090
      %v3092 = vpop.f32.mrf.mxu0
      %3093 = vmatprep.mubr.f32.mxu0 %v544
      %3094 = vmatmul.mubr.f32.gmra.mxu0 %v543
      %v3095 = vpop.f32.mrf.mxu0
      %v3096 = vadd.f32 %v2712, %v3095
      %v3097 = vpop.f32.mrf.mxu0
      %3098 = vmatprep.mubr.f32.mxu0 %v548
      %3099 = vmatmul.mubr.f32.gmra.mxu0 %v547
      %v3100 = vpop.f32.mrf.mxu0
      %v3101 = vadd.f32 %v2717, %v3100
      %v3102 = vpop.f32.mrf.mxu0
      %3103 = vmatprep.mubr.f32.mxu0 %v552
      %3104 = vmatmul.mubr.f32.gmra.mxu0 %v551
      %v3105 = vpop.f32.mrf.mxu0
      %v3106 = vadd.f32 %v2722, %v3105
      %v3107 = vpop.f32.mrf.mxu0
      %3108 = vmatprep.mubr.f32.mxu0 %v556
      %3109 = vmatmul.mubr.f32.gmra.mxu0 %v555
      %v3110 = vpop.f32.mrf.mxu0
      %v3111 = vadd.f32 %v2727, %v3110
      %v3112 = vpop.f32.mrf.mxu0
      %3113 = vmatprep.mubr.f32.mxu0 %v560
      %3114 = vmatmul.mubr.f32.gmra.mxu0 %v559
      %v3115 = vpop.f32.mrf.mxu0
      %v3116 = vadd.f32 %v2732, %v3115
      %v3117 = vpop.f32.mrf.mxu0
      %3118 = vmatprep.mubr.f32.mxu0 %v564
      %3119 = vmatmul.mubr.f32.gmra.mxu0 %v563
      %v3120 = vpop.f32.mrf.mxu0
      %v3121 = vadd.f32 %v2737, %v3120
      %v3122 = vpop.f32.mrf.mxu0
      %3123 = vmatprep.mubr.f32.mxu0 %v568
      %3124 = vmatmul.mubr.f32.gmra.mxu0 %v567
      %v3125 = vpop.f32.mrf.mxu0
      %v3126 = vadd.f32 %v2742, %v3125
      %v3127 = vpop.f32.mrf.mxu0
      %3128 = vmatprep.mubr.f32.mxu0 %v572
      %3129 = vmatmul.mubr.f32.gmra.mxu0 %v571
      %v3130 = vpop.f32.mrf.mxu0
      %v3131 = vadd.f32 %v2747, %v3130
      %v3132 = vpop.f32.mrf.mxu0
      %3133 = vmatprep.mubr.f32.mxu0 %v576
      %3134 = vmatmul.mubr.f32.gmra.mxu0 %v575
      %v3135 = vpop.f32.mrf.mxu0
      %v3136 = vadd.f32 %v2752, %v3135
      %v3137 = vpop.f32.mrf.mxu0
      %3138 = vmatprep.mubr.f32.mxu0 %v580
      %3139 = vmatmul.mubr.f32.gmra.mxu0 %v579
      %v3140 = vpop.f32.mrf.mxu0
      %v3141 = vadd.f32 %v2757, %v3140
      %v3142 = vpop.f32.mrf.mxu0
      %3143 = vmatprep.mubr.f32.mxu0 %v584
      %3144 = vmatmul.mubr.f32.gmra.mxu0 %v583
      %v3145 = vpop.f32.mrf.mxu0
      %v3146 = vadd.f32 %v2762, %v3145
      %v3147 = vpop.f32.mrf.mxu0
      %3148 = vmatprep.mubr.f32.mxu0 %v588
      %3149 = vmatmul.mubr.f32.gmra.mxu0 %v587
      %v3150 = vpop.f32.mrf.mxu0
      %v3151 = vadd.f32 %v2767, %v3150
      %v3152 = vpop.f32.mrf.mxu0
      %3153 = vmatprep.mubr.f32.mxu0 %v592
      %3154 = vmatmul.mubr.f32.gmra.mxu0 %v591
      %v3155 = vpop.f32.mrf.mxu0
      %v3156 = vadd.f32 %v2772, %v3155
      %v3157 = vpop.f32.mrf.mxu0
      %3158 = vmatprep.mubr.f32.mxu0 %v596
      %3159 = vmatmul.mubr.f32.gmra.mxu0 %v595
      %v3160 = vpop.f32.mrf.mxu0
      %v3161 = vadd.f32 %v2777, %v3160
      %v3162 = vpop.f32.mrf.mxu0
      %3163 = vmatprep.mubr.f32.mxu0 %v600
      %3164 = vmatmul.mubr.f32.gmra.mxu0 %v599
      %v3165 = vpop.f32.mrf.mxu0
      %v3166 = vadd.f32 %v2782, %v3165
      %v3167 = vpop.f32.mrf.mxu0
      %3168 = vmatprep.mubr.f32.mxu0 %v604
      %3169 = vmatmul.mubr.f32.gmra.mxu0 %v603
      %v3170 = vpop.f32.mrf.mxu0
      %v3171 = vadd.f32 %v2787, %v3170
      %v3172 = vpop.f32.mrf.mxu0
      %3173 = vmatprep.mubr.f32.mxu0 %v608
      %3174 = vmatmul.mubr.f32.gmra.mxu0 %v607
      %v3175 = vpop.f32.mrf.mxu0
      %v3176 = vadd.f32 %v2792, %v3175
      %v3177 = vpop.f32.mrf.mxu0
      %3178 = vmatprep.mubr.f32.mxu0 %v612
      %3179 = vmatmul.mubr.f32.gmra.mxu0 %v611
      %v3180 = vpop.f32.mrf.mxu0
      %v3181 = vadd.f32 %v2797, %v3180
      %v3182 = vpop.f32.mrf.mxu0
      %3183 = vmatprep.mubr.f32.mxu0 %v616
      %3184 = vmatmul.mubr.f32.gmra.mxu0 %v615
      %v3185 = vpop.f32.mrf.mxu0
      %v3186 = vadd.f32 %v2802, %v3185
      %v3187 = vpop.f32.mrf.mxu0
      %3188 = vmatprep.mubr.f32.mxu0 %v620
      %3189 = vmatmul.mubr.f32.gmra.mxu0 %v619
      %v3190 = vpop.f32.mrf.mxu0
      %v3191 = vadd.f32 %v2807, %v3190
      %v3192 = vpop.f32.mrf.mxu0
      %3193 = vmatprep.mubr.f32.mxu0 %v624
      %3194 = vmatmul.mubr.f32.gmra.mxu0 %v623
      %v3195 = vpop.f32.mrf.mxu0
      %v3196 = vadd.f32 %v2812, %v3195
      %v3197 = vpop.f32.mrf.mxu0
      %3198 = vmatprep.mubr.f32.mxu0 %v628
      %3199 = vmatmul.mubr.f32.gmra.mxu0 %v627
      %v3200 = vpop.f32.mrf.mxu0
      %v3201 = vadd.f32 %v2817, %v3200
      %v3202 = vpop.f32.mrf.mxu0
      %3203 = vmatprep.mubr.f32.mxu0 %v632
      %3204 = vmatmul.mubr.f32.gmra.mxu0 %v631
      %v3205 = vpop.f32.mrf.mxu0
      %v3206 = vadd.f32 %v2822, %v3205
      %v3207 = vpop.f32.mrf.mxu0
      %3208 = vmatprep.mubr.f32.mxu0 %v636
      %3209 = vmatmul.mubr.f32.gmra.mxu0 %v635
      %v3210 = vpop.f32.mrf.mxu0
      %v3211 = vadd.f32 %v2827, %v3210
      %v3212 = vpop.f32.mrf.mxu0
      %3213 = vmatprep.mubr.f32.mxu0 %v640
      %3214 = vmatmul.mubr.f32.gmra.mxu0 %v639
      %v3215 = vpop.f32.mrf.mxu0
      %v3216 = vadd.f32 %v2832, %v3215
      %v3217 = vpop.f32.mrf.mxu0
      %3218 = vmatprep.mubr.f32.mxu0 %v644
      %3219 = vmatmul.mubr.f32.gmra.mxu0 %v643
      %v3220 = vpop.f32.mrf.mxu0
      %v3221 = vadd.f32 %v2837, %v3220
      %v3222 = vpop.f32.mrf.mxu0
      %3223 = vmatprep.mubr.f32.mxu0 %v648
      %3224 = vmatmul.mubr.f32.gmra.mxu0 %v647
      %v3225 = vpop.f32.mrf.mxu0
      %v3226 = vadd.f32 %v2842, %v3225
      %v3227 = vpop.f32.mrf.mxu0
      %3228 = vmatprep.mubr.f32.mxu0 %v652
      %3229 = vmatmul.mubr.f32.gmra.mxu0 %v651
      %v3230 = vpop.f32.mrf.mxu0
      %v3231 = vadd.f32 %v2847, %v3230
      %v3232 = vpop.f32.mrf.mxu0
      %3233 = vmatprep.mubr.f32.mxu0 %v656
      %3234 = vmatmul.mubr.f32.gmra.mxu0 %v655
      %v3235 = vpop.f32.mrf.mxu0
      %v3236 = vadd.f32 %v2852, %v3235
      %v3237 = vpop.f32.mrf.mxu0
      %3238 = vmatprep.mubr.f32.mxu0 %v660
      %3239 = vmatmul.mubr.f32.gmra.mxu0 %v659
      %v3240 = vpop.f32.mrf.mxu0
      %v3241 = vadd.f32 %v2857, %v3240
      %v3242 = vpop.f32.mrf.mxu0
      %3243 = vmatprep.mubr.f32.mxu0 %v664
      %3244 = vmatmul.mubr.f32.gmra.mxu0 %v663
      %v3245 = vpop.f32.mrf.mxu0
      %v3246 = vadd.f32 %v2862, %v3245
      %v3247 = vpop.f32.mrf.mxu0
      %3248 = vmatprep.mubr.f32.mxu0 %v668
      %3249 = vmatmul.mubr.f32.gmra.mxu0 %v667
      %v3250 = vpop.f32.mrf.mxu0
      %v3251 = vadd.f32 %v2867, %v3250
      %v3252 = vpop.f32.mrf.mxu0
      %3253 = vmatprep.mubr.f32.mxu0 %v672
      %3254 = vmatmul.mubr.f32.gmra.mxu0 %v671
      %v3255 = vpop.f32.mrf.mxu0
      %v3256 = vadd.f32 %v2872, %v3255
      %v3257 = vpop.f32.mrf.mxu0
      %3258 = vmatprep.mubr.f32.mxu0 %v676
      %3259 = vmatmul.mubr.f32.gmra.mxu0 %v675
      %v3260 = vpop.f32.mrf.mxu0
      %v3261 = vadd.f32 %v2877, %v3260
      %v3262 = vpop.f32.mrf.mxu0
      %3263 = vmatprep.mubr.f32.mxu0 %v680
      %3264 = vmatmul.mubr.f32.gmra.mxu0 %v679
      %v3265 = vpop.f32.mrf.mxu0
      %v3266 = vadd.f32 %v2882, %v3265
      %v3267 = vpop.f32.mrf.mxu0
      %3268 = vmatprep.mubr.f32.mxu0 %v684
      %3269 = vmatmul.mubr.f32.gmra.mxu0 %v683
      %v3270 = vpop.f32.mrf.mxu0
      %v3271 = vadd.f32 %v2887, %v3270
      %v3272 = vpop.f32.mrf.mxu0
      %3273 = vmatprep.mubr.f32.mxu0 %v688
      %3274 = vmatmul.mubr.f32.gmra.mxu0 %v687
      %v3275 = vpop.f32.mrf.mxu0
      %v3276 = vadd.f32 %v2892, %v3275
      %v3277 = vpop.f32.mrf.mxu0
      %3278 = vmatprep.mubr.f32.mxu0 %v692
      %3279 = vmatmul.mubr.f32.gmra.mxu0 %v691
      %v3280 = vpop.f32.mrf.mxu0
      %v3281 = vadd.f32 %v2897, %v3280
      %v3282 = vpop.f32.mrf.mxu0
      %3283 = vmatprep.mubr.f32.mxu0 %v696
      %3284 = vmatmul.mubr.f32.gmra.mxu0 %v695
      %v3285 = vpop.f32.mrf.mxu0
      %v3286 = vadd.f32 %v2902, %v3285
      %v3287 = vpop.f32.mrf.mxu0
      %3288 = vmatprep.mubr.f32.mxu0 %v700
      %3289 = vmatmul.mubr.f32.gmra.mxu0 %v699
      %v3290 = vpop.f32.mrf.mxu0
      %v3291 = vadd.f32 %v2907, %v3290
      %v3292 = vpop.f32.mrf.mxu0
      %3293 = vmatprep.mubr.f32.mxu0 %v704
      %3294 = vmatmul.mubr.f32.gmra.mxu0 %v703
      %v3295 = vpop.f32.mrf.mxu0
      %v3296 = vadd.f32 %v2912, %v3295
      %v3297 = vpop.f32.mrf.mxu0
      %3298 = vmatprep.mubr.f32.mxu0 %v708
      %3299 = vmatmul.mubr.f32.gmra.mxu0 %v707
      %v3300 = vpop.f32.mrf.mxu0
      %v3301 = vadd.f32 %v2917, %v3300
      %v3302 = vpop.f32.mrf.mxu0
      %3303 = vmatprep.mubr.f32.mxu0 %v712
      %3304 = vmatmul.mubr.f32.gmra.mxu0 %v711
      %v3305 = vpop.f32.mrf.mxu0
      %v3306 = vadd.f32 %v2922, %v3305
      %v3307 = vpop.f32.mrf.mxu0
      %3308 = vmatprep.mubr.f32.mxu0 %v716
      %3309 = vmatmul.mubr.f32.gmra.mxu0 %v715
      %v3310 = vpop.f32.mrf.mxu0
      %v3311 = vadd.f32 %v2927, %v3310
      %v3312 = vpop.f32.mrf.mxu0
      %3313 = vdwg.mxu0
      %3314 = vmatprep.subr.mxu0 0.0
      %3315 = vmatpush1.msra.mxu0 %v2592
      %3316 = vmatprep.subr.mxu0 0.0
      %3317 = vmatpush1.msra.mxu0 %v2591
      %3318 = vmatprep.subr.mxu0 0.0
      %3319 = vmatpush1.msra.mxu0 %v2590
      %3320 = vmatprep.subr.mxu0 0.0
      %3321 = vmatpush1.msra.mxu0 %v2589
      %3322 = vmatprep.subr.mxu0 0.0
      %3323 = vmatpush1.msra.mxu0 %v2588
      %3324 = vmatprep.subr.mxu0 0.0
      %3325 = vmatpush1.msra.mxu0 %v2587
      %3326 = vmatprep.subr.mxu0 0.0
      %3327 = vmatpush1.msra.mxu0 %v2586
      %3328 = vmatprep.subr.mxu0 0.0
      %3329 = vmatpush1.msra.mxu0 %v2585
      %3330 = vmatprep.subr.mxu0 0.0
      %3331 = vmatpush1.msra.mxu0 %v2584
      %3332 = vmatprep.subr.mxu0 0.0
      %3333 = vmatpush1.msra.mxu0 %v2583
      %3334 = vmatprep.subr.mxu0 0.0
      %3335 = vmatpush1.msra.mxu0 %v2582
      %3336 = vmatprep.subr.mxu0 0.0
      %3337 = vmatpush1.msra.mxu0 %v2581
      %3338 = vmatprep.subr.mxu0 0.0
      %3339 = vmatpush1.msra.mxu0 %v2580
      %3340 = vmatprep.subr.mxu0 0.0
      %3341 = vmatpush1.msra.mxu0 %v2579
      %3342 = vmatprep.subr.mxu0 0.0
      %3343 = vmatpush1.msra.mxu0 %v2578
      %3344 = vmatprep.subr.mxu0 0.0
      %3345 = vmatpush1.msra.mxu0 %v2577
      %3346 = vmatprep.subr.mxu0 0.0
      %3347 = vmatpush2.msra.mxu0 %v2608
      %3348 = vmatprep.subr.mxu0 0.0
      %3349 = vmatpush2.msra.mxu0 %v2607
      %3350 = vmatprep.subr.mxu0 0.0
      %3351 = vmatpush2.msra.mxu0 %v2606
      %3352 = vmatprep.subr.mxu0 0.0
      %3353 = vmatpush2.msra.mxu0 %v2605
      %3354 = vmatprep.subr.mxu0 0.0
      %3355 = vmatpush2.msra.mxu0 %v2604
      %3356 = vmatprep.subr.mxu0 0.0
      %3357 = vmatpush2.msra.mxu0 %v2603
      %3358 = vmatprep.subr.mxu0 0.0
      %3359 = vmatpush2.msra.mxu0 %v2602
      %3360 = vmatprep.subr.mxu0 0.0
      %3361 = vmatpush2.msra.mxu0 %v2601
      %3362 = vmatprep.subr.mxu0 0.0
      %3363 = vmatpush2.msra.mxu0 %v2600
      %3364 = vmatprep.subr.mxu0 0.0
      %3365 = vmatpush2.msra.mxu0 %v2599
      %3366 = vmatprep.subr.mxu0 0.0
      %3367 = vmatpush2.msra.mxu0 %v2598
      %3368 = vmatprep.subr.mxu0 0.0
      %3369 = vmatpush2.msra.mxu0 %v2597
      %3370 = vmatprep.subr.mxu0 0.0
      %3371 = vmatpush2.msra.mxu0 %v2596
      %3372 = vmatprep.subr.mxu0 0.0
      %3373 = vmatpush2.msra.mxu0 %v2595
      %3374 = vmatprep.subr.mxu0 0.0
      %3375 = vmatpush2.msra.mxu0 %v2594
      %3376 = vmatprep.subr.mxu0 0.0
      %3377 = vmatpush2.msra.mxu0 %v2593
      %3378 = vmatprep.mubr.f32.mxu0 %v466
      %3379 = vmatmul.mubr.f32.gmra.mxu0 %v465
      %v3380 = vpop.f32.mrf.mxu0
      %v3381 = vadd.f32 %v2996, %v3380
      %v3382 = vpop.f32.mrf.mxu0
      %3383 = vmatprep.mubr.f32.mxu0 %v470
      %3384 = vmatmul.mubr.f32.gmra.mxu0 %v469
      %v3385 = vpop.f32.mrf.mxu0
      %v3386 = vadd.f32 %v3001, %v3385
      %v3387 = vpop.f32.mrf.mxu0
      %3388 = vmatprep.mubr.f32.mxu0 %v474
      %3389 = vmatmul.mubr.f32.gmra.mxu0 %v473
      %v3390 = vpop.f32.mrf.mxu0
      %v3391 = vadd.f32 %v3006, %v3390
      %v3392 = vpop.f32.mrf.mxu0
      %3393 = vmatprep.mubr.f32.mxu0 %v478
      %3394 = vmatmul.mubr.f32.gmra.mxu0 %v477
      %v3395 = vpop.f32.mrf.mxu0
      %v3396 = vadd.f32 %v3011, %v3395
      %v3397 = vpop.f32.mrf.mxu0
      %3398 = vmatprep.mubr.f32.mxu0 %v482
      %3399 = vmatmul.mubr.f32.gmra.mxu0 %v481
      %v3400 = vpop.f32.mrf.mxu0
      %v3401 = vadd.f32 %v3016, %v3400
      %v3402 = vpop.f32.mrf.mxu0
      %3403 = vmatprep.mubr.f32.mxu0 %v486
      %3404 = vmatmul.mubr.f32.gmra.mxu0 %v485
      %v3405 = vpop.f32.mrf.mxu0
      %v3406 = vadd.f32 %v3021, %v3405
      %v3407 = vpop.f32.mrf.mxu0
      %3408 = vmatprep.mubr.f32.mxu0 %v490
      %3409 = vmatmul.mubr.f32.gmra.mxu0 %v489
      %v3410 = vpop.f32.mrf.mxu0
      %v3411 = vadd.f32 %v3026, %v3410
      %v3412 = vpop.f32.mrf.mxu0
      %3413 = vmatprep.mubr.f32.mxu0 %v494
      %3414 = vmatmul.mubr.f32.gmra.mxu0 %v493
      %v3415 = vpop.f32.mrf.mxu0
      %v3416 = vadd.f32 %v3031, %v3415
      %v3417 = vpop.f32.mrf.mxu0
      %3418 = vmatprep.mubr.f32.mxu0 %v498
      %3419 = vmatmul.mubr.f32.gmra.mxu0 %v497
      %v3420 = vpop.f32.mrf.mxu0
      %v3421 = vadd.f32 %v3036, %v3420
      %v3422 = vpop.f32.mrf.mxu0
      %3423 = vmatprep.mubr.f32.mxu0 %v502
      %3424 = vmatmul.mubr.f32.gmra.mxu0 %v501
      %v3425 = vpop.f32.mrf.mxu0
      %v3426 = vadd.f32 %v3041, %v3425
      %v3427 = vpop.f32.mrf.mxu0
      %3428 = vmatprep.mubr.f32.mxu0 %v506
      %3429 = vmatmul.mubr.f32.gmra.mxu0 %v505
      %v3430 = vpop.f32.mrf.mxu0
      %v3431 = vadd.f32 %v3046, %v3430
      %v3432 = vpop.f32.mrf.mxu0
      %3433 = vmatprep.mubr.f32.mxu0 %v510
      %3434 = vmatmul.mubr.f32.gmra.mxu0 %v509
      %v3435 = vpop.f32.mrf.mxu0
      %v3436 = vadd.f32 %v3051, %v3435
      %v3437 = vpop.f32.mrf.mxu0
      %3438 = vmatprep.mubr.f32.mxu0 %v514
      %3439 = vmatmul.mubr.f32.gmra.mxu0 %v513
      %v3440 = vpop.f32.mrf.mxu0
      %v3441 = vadd.f32 %v3056, %v3440
      %v3442 = vpop.f32.mrf.mxu0
      %3443 = vmatprep.mubr.f32.mxu0 %v518
      %3444 = vmatmul.mubr.f32.gmra.mxu0 %v517
      %v3445 = vpop.f32.mrf.mxu0
      %v3446 = vadd.f32 %v3061, %v3445
      %v3447 = vpop.f32.mrf.mxu0
      %3448 = vmatprep.mubr.f32.mxu0 %v522
      %3449 = vmatmul.mubr.f32.gmra.mxu0 %v521
      %v3450 = vpop.f32.mrf.mxu0
      %v3451 = vadd.f32 %v3066, %v3450
      %v3452 = vpop.f32.mrf.mxu0
      %3453 = vmatprep.mubr.f32.mxu0 %v526
      %3454 = vmatmul.mubr.f32.gmra.mxu0 %v525
      %v3455 = vpop.f32.mrf.mxu0
      %v3456 = vadd.f32 %v3071, %v3455
      %v3457 = vpop.f32.mrf.mxu0
      %3458 = vmatprep.mubr.f32.mxu0 %v530
      %3459 = vmatmul.mubr.f32.gmra.mxu0 %v529
      %v3460 = vpop.f32.mrf.mxu0
      %v3461 = vadd.f32 %v3076, %v3460
      %v3462 = vpop.f32.mrf.mxu0
      %3463 = vmatprep.mubr.f32.mxu0 %v534
      %3464 = vmatmul.mubr.f32.gmra.mxu0 %v533
      %v3465 = vpop.f32.mrf.mxu0
      %v3466 = vadd.f32 %v3081, %v3465
      %v3467 = vpop.f32.mrf.mxu0
      %3468 = vmatprep.mubr.f32.mxu0 %v538
      %3469 = vmatmul.mubr.f32.gmra.mxu0 %v537
      %v3470 = vpop.f32.mrf.mxu0
      %v3471 = vadd.f32 %v3086, %v3470
      %v3472 = vpop.f32.mrf.mxu0
      %3473 = vmatprep.mubr.f32.mxu0 %v542
      %3474 = vmatmul.mubr.f32.gmra.mxu0 %v541
      %v3475 = vpop.f32.mrf.mxu0
      %v3476 = vadd.f32 %v3091, %v3475
      %v3477 = vpop.f32.mrf.mxu0
      %3478 = vmatprep.mubr.f32.mxu0 %v546
      %3479 = vmatmul.mubr.f32.gmra.mxu0 %v545
      %v3480 = vpop.f32.mrf.mxu0
      %v3481 = vadd.f32 %v3096, %v3480
      %v3482 = vpop.f32.mrf.mxu0
      %3483 = vmatprep.mubr.f32.mxu0 %v550
      %3484 = vmatmul.mubr.f32.gmra.mxu0 %v549
      %v3485 = vpop.f32.mrf.mxu0
      %v3486 = vadd.f32 %v3101, %v3485
      %v3487 = vpop.f32.mrf.mxu0
      %3488 = vmatprep.mubr.f32.mxu0 %v554
      %3489 = vmatmul.mubr.f32.gmra.mxu0 %v553
      %v3490 = vpop.f32.mrf.mxu0
      %v3491 = vadd.f32 %v3106, %v3490
      %v3492 = vpop.f32.mrf.mxu0
      %3493 = vmatprep.mubr.f32.mxu0 %v558
      %3494 = vmatmul.mubr.f32.gmra.mxu0 %v557
      %v3495 = vpop.f32.mrf.mxu0
      %v3496 = vadd.f32 %v3111, %v3495
      %v3497 = vpop.f32.mrf.mxu0
      %3498 = vmatprep.mubr.f32.mxu0 %v562
      %3499 = vmatmul.mubr.f32.gmra.mxu0 %v561
      %v3500 = vpop.f32.mrf.mxu0
      %v3501 = vadd.f32 %v3116, %v3500
      %v3502 = vpop.f32.mrf.mxu0
      %3503 = vmatprep.mubr.f32.mxu0 %v566
      %3504 = vmatmul.mubr.f32.gmra.mxu0 %v565
      %v3505 = vpop.f32.mrf.mxu0
      %v3506 = vadd.f32 %v3121, %v3505
      %v3507 = vpop.f32.mrf.mxu0
      %3508 = vmatprep.mubr.f32.mxu0 %v570
      %3509 = vmatmul.mubr.f32.gmra.mxu0 %v569
      %v3510 = vpop.f32.mrf.mxu0
      %v3511 = vadd.f32 %v3126, %v3510
      %v3512 = vpop.f32.mrf.mxu0
      %3513 = vmatprep.mubr.f32.mxu0 %v574
      %3514 = vmatmul.mubr.f32.gmra.mxu0 %v573
      %v3515 = vpop.f32.mrf.mxu0
      %v3516 = vadd.f32 %v3131, %v3515
      %v3517 = vpop.f32.mrf.mxu0
      %3518 = vmatprep.mubr.f32.mxu0 %v578
      %3519 = vmatmul.mubr.f32.gmra.mxu0 %v577
      %v3520 = vpop.f32.mrf.mxu0
      %v3521 = vadd.f32 %v3136, %v3520
      %v3522 = vpop.f32.mrf.mxu0
      %3523 = vmatprep.mubr.f32.mxu0 %v582
      %3524 = vmatmul.mubr.f32.gmra.mxu0 %v581
      %v3525 = vpop.f32.mrf.mxu0
      %v3526 = vadd.f32 %v3141, %v3525
      %v3527 = vpop.f32.mrf.mxu0
      %3528 = vmatprep.mubr.f32.mxu0 %v586
      %3529 = vmatmul.mubr.f32.gmra.mxu0 %v585
      %v3530 = vpop.f32.mrf.mxu0
      %v3531 = vadd.f32 %v3146, %v3530
      %v3532 = vpop.f32.mrf.mxu0
      %3533 = vmatprep.mubr.f32.mxu0 %v590
      %3534 = vmatmul.mubr.f32.gmra.mxu0 %v589
      %v3535 = vpop.f32.mrf.mxu0
      %v3536 = vadd.f32 %v3151, %v3535
      %v3537 = vpop.f32.mrf.mxu0
      %3538 = vmatprep.mubr.f32.mxu0 %v594
      %3539 = vmatmul.mubr.f32.gmra.mxu0 %v593
      %v3540 = vpop.f32.mrf.mxu0
      %v3541 = vadd.f32 %v3156, %v3540
      %v3542 = vpop.f32.mrf.mxu0
      %3543 = vmatprep.mubr.f32.mxu0 %v598
      %3544 = vmatmul.mubr.f32.gmra.mxu0 %v597
      %v3545 = vpop.f32.mrf.mxu0
      %v3546 = vadd.f32 %v3161, %v3545
      %v3547 = vpop.f32.mrf.mxu0
      %3548 = vmatprep.mubr.f32.mxu0 %v602
      %3549 = vmatmul.mubr.f32.gmra.mxu0 %v601
      %v3550 = vpop.f32.mrf.mxu0
      %v3551 = vadd.f32 %v3166, %v3550
      %v3552 = vpop.f32.mrf.mxu0
      %3553 = vmatprep.mubr.f32.mxu0 %v606
      %3554 = vmatmul.mubr.f32.gmra.mxu0 %v605
      %v3555 = vpop.f32.mrf.mxu0
      %v3556 = vadd.f32 %v3171, %v3555
      %v3557 = vpop.f32.mrf.mxu0
      %3558 = vmatprep.mubr.f32.mxu0 %v610
      %3559 = vmatmul.mubr.f32.gmra.mxu0 %v609
      %v3560 = vpop.f32.mrf.mxu0
      %v3561 = vadd.f32 %v3176, %v3560
      %v3562 = vpop.f32.mrf.mxu0
      %3563 = vmatprep.mubr.f32.mxu0 %v614
      %3564 = vmatmul.mubr.f32.gmra.mxu0 %v613
      %v3565 = vpop.f32.mrf.mxu0
      %v3566 = vadd.f32 %v3181, %v3565
      %v3567 = vpop.f32.mrf.mxu0
      %3568 = vmatprep.mubr.f32.mxu0 %v618
      %3569 = vmatmul.mubr.f32.gmra.mxu0 %v617
      %v3570 = vpop.f32.mrf.mxu0
      %v3571 = vadd.f32 %v3186, %v3570
      %v3572 = vpop.f32.mrf.mxu0
      %3573 = vmatprep.mubr.f32.mxu0 %v622
      %3574 = vmatmul.mubr.f32.gmra.mxu0 %v621
      %v3575 = vpop.f32.mrf.mxu0
      %v3576 = vadd.f32 %v3191, %v3575
      %v3577 = vpop.f32.mrf.mxu0
      %3578 = vmatprep.mubr.f32.mxu0 %v626
      %3579 = vmatmul.mubr.f32.gmra.mxu0 %v625
      %v3580 = vpop.f32.mrf.mxu0
      %v3581 = vadd.f32 %v3196, %v3580
      %v3582 = vpop.f32.mrf.mxu0
      %3583 = vmatprep.mubr.f32.mxu0 %v630
      %3584 = vmatmul.mubr.f32.gmra.mxu0 %v629
      %v3585 = vpop.f32.mrf.mxu0
      %v3586 = vadd.f32 %v3201, %v3585
      %v3587 = vpop.f32.mrf.mxu0
      %3588 = vmatprep.mubr.f32.mxu0 %v634
      %3589 = vmatmul.mubr.f32.gmra.mxu0 %v633
      %v3590 = vpop.f32.mrf.mxu0
      %v3591 = vadd.f32 %v3206, %v3590
      %v3592 = vpop.f32.mrf.mxu0
      %3593 = vmatprep.mubr.f32.mxu0 %v638
      %3594 = vmatmul.mubr.f32.gmra.mxu0 %v637
      %v3595 = vpop.f32.mrf.mxu0
      %v3596 = vadd.f32 %v3211, %v3595
      %v3597 = vpop.f32.mrf.mxu0
      %3598 = vmatprep.mubr.f32.mxu0 %v642
      %3599 = vmatmul.mubr.f32.gmra.mxu0 %v641
      %v3600 = vpop.f32.mrf.mxu0
      %v3601 = vadd.f32 %v3216, %v3600
      %v3602 = vpop.f32.mrf.mxu0
      %3603 = vmatprep.mubr.f32.mxu0 %v646
      %3604 = vmatmul.mubr.f32.gmra.mxu0 %v645
      %v3605 = vpop.f32.mrf.mxu0
      %v3606 = vadd.f32 %v3221, %v3605
      %v3607 = vpop.f32.mrf.mxu0
      %3608 = vmatprep.mubr.f32.mxu0 %v650
      %3609 = vmatmul.mubr.f32.gmra.mxu0 %v649
      %v3610 = vpop.f32.mrf.mxu0
      %v3611 = vadd.f32 %v3226, %v3610
      %v3612 = vpop.f32.mrf.mxu0
      %3613 = vmatprep.mubr.f32.mxu0 %v654
      %3614 = vmatmul.mubr.f32.gmra.mxu0 %v653
      %v3615 = vpop.f32.mrf.mxu0
      %v3616 = vadd.f32 %v3231, %v3615
      %v3617 = vpop.f32.mrf.mxu0
      %3618 = vmatprep.mubr.f32.mxu0 %v658
      %3619 = vmatmul.mubr.f32.gmra.mxu0 %v657
      %v3620 = vpop.f32.mrf.mxu0
      %v3621 = vadd.f32 %v3236, %v3620
      %v3622 = vpop.f32.mrf.mxu0
      %3623 = vmatprep.mubr.f32.mxu0 %v662
      %3624 = vmatmul.mubr.f32.gmra.mxu0 %v661
      %v3625 = vpop.f32.mrf.mxu0
      %v3626 = vadd.f32 %v3241, %v3625
      %v3627 = vpop.f32.mrf.mxu0
      %3628 = vmatprep.mubr.f32.mxu0 %v666
      %3629 = vmatmul.mubr.f32.gmra.mxu0 %v665
      %v3630 = vpop.f32.mrf.mxu0
      %v3631 = vadd.f32 %v3246, %v3630
      %v3632 = vpop.f32.mrf.mxu0
      %3633 = vmatprep.mubr.f32.mxu0 %v670
      %3634 = vmatmul.mubr.f32.gmra.mxu0 %v669
      %v3635 = vpop.f32.mrf.mxu0
      %v3636 = vadd.f32 %v3251, %v3635
      %v3637 = vpop.f32.mrf.mxu0
      %3638 = vmatprep.mubr.f32.mxu0 %v674
      %3639 = vmatmul.mubr.f32.gmra.mxu0 %v673
      %v3640 = vpop.f32.mrf.mxu0
      %v3641 = vadd.f32 %v3256, %v3640
      %v3642 = vpop.f32.mrf.mxu0
      %3643 = vmatprep.mubr.f32.mxu0 %v678
      %3644 = vmatmul.mubr.f32.gmra.mxu0 %v677
      %v3645 = vpop.f32.mrf.mxu0
      %v3646 = vadd.f32 %v3261, %v3645
      %v3647 = vpop.f32.mrf.mxu0
      %3648 = vmatprep.mubr.f32.mxu0 %v682
      %3649 = vmatmul.mubr.f32.gmra.mxu0 %v681
      %v3650 = vpop.f32.mrf.mxu0
      %v3651 = vadd.f32 %v3266, %v3650
      %v3652 = vpop.f32.mrf.mxu0
      %3653 = vmatprep.mubr.f32.mxu0 %v686
      %3654 = vmatmul.mubr.f32.gmra.mxu0 %v685
      %v3655 = vpop.f32.mrf.mxu0
      %v3656 = vadd.f32 %v3271, %v3655
      %v3657 = vpop.f32.mrf.mxu0
      %3658 = vmatprep.mubr.f32.mxu0 %v690
      %3659 = vmatmul.mubr.f32.gmra.mxu0 %v689
      %v3660 = vpop.f32.mrf.mxu0
      %v3661 = vadd.f32 %v3276, %v3660
      %v3662 = vpop.f32.mrf.mxu0
      %3663 = vmatprep.mubr.f32.mxu0 %v694
      %3664 = vmatmul.mubr.f32.gmra.mxu0 %v693
      %v3665 = vpop.f32.mrf.mxu0
      %v3666 = vadd.f32 %v3281, %v3665
      %v3667 = vpop.f32.mrf.mxu0
      %3668 = vmatprep.mubr.f32.mxu0 %v698
      %3669 = vmatmul.mubr.f32.gmra.mxu0 %v697
      %v3670 = vpop.f32.mrf.mxu0
      %v3671 = vadd.f32 %v3286, %v3670
      %v3672 = vpop.f32.mrf.mxu0
      %3673 = vmatprep.mubr.f32.mxu0 %v702
      %3674 = vmatmul.mubr.f32.gmra.mxu0 %v701
      %v3675 = vpop.f32.mrf.mxu0
      %v3676 = vadd.f32 %v3291, %v3675
      %v3677 = vpop.f32.mrf.mxu0
      %3678 = vmatprep.mubr.f32.mxu0 %v706
      %3679 = vmatmul.mubr.f32.gmra.mxu0 %v705
      %v3680 = vpop.f32.mrf.mxu0
      %v3681 = vadd.f32 %v3296, %v3680
      %v3682 = vpop.f32.mrf.mxu0
      %3683 = vmatprep.mubr.f32.mxu0 %v710
      %3684 = vmatmul.mubr.f32.gmra.mxu0 %v709
      %v3685 = vpop.f32.mrf.mxu0
      %v3686 = vadd.f32 %v3301, %v3685
      %v3687 = vpop.f32.mrf.mxu0
      %3688 = vmatprep.mubr.f32.mxu0 %v714
      %3689 = vmatmul.mubr.f32.gmra.mxu0 %v713
      %v3690 = vpop.f32.mrf.mxu0
      %v3691 = vadd.f32 %v3306, %v3690
      %v3692 = vpop.f32.mrf.mxu0
      %3693 = vmatprep.mubr.f32.mxu0 %v718
      %3694 = vmatmul.mubr.f32.gmra.mxu0 %v717
      %v3695 = vpop.f32.mrf.mxu0
      %v3696 = vadd.f32 %v3311, %v3695
      %v3697 = vpop.f32.mrf.mxu0
      %3698 = vdwg.mxu0
      %v3699 = vmul.f32 %v3381, 0.5
      %v3700 = vmul.f32 %v3386, 0.5
      %v3701 = vmul.f32 %v3391, 0.5
      %v3702 = vmul.f32 %v3396, 0.5
      %v3703 = vmul.f32 %v3401, 0.5
      %v3704 = vmul.f32 %v3406, 0.5
      %v3705 = vmul.f32 %v3411, 0.5
      %v3706 = vmul.f32 %v3416, 0.5
      %v3707 = vmul.f32 %v3421, 0.5
      %v3708 = vmul.f32 %v3426, 0.5
      %v3709 = vmul.f32 %v3431, 0.5
      %v3710 = vmul.f32 %v3436, 0.5
      %v3711 = vmul.f32 %v3441, 0.5
      %v3712 = vmul.f32 %v3446, 0.5
      %v3713 = vmul.f32 %v3451, 0.5
      %v3714 = vmul.f32 %v3456, 0.5
      %v3715 = vmul.f32 %v3461, 0.5
      %v3716 = vmul.f32 %v3466, 0.5
      %v3717 = vmul.f32 %v3471, 0.5
      %v3718 = vmul.f32 %v3476, 0.5
      %v3719 = vmul.f32 %v3481, 0.5
      %v3720 = vmul.f32 %v3486, 0.5
      %v3721 = vmul.f32 %v3491, 0.5
      %v3722 = vmul.f32 %v3496, 0.5
      %v3723 = vmul.f32 %v3501, 0.5
      %v3724 = vmul.f32 %v3506, 0.5
      %v3725 = vmul.f32 %v3511, 0.5
      %v3726 = vmul.f32 %v3516, 0.5
      %v3727 = vmul.f32 %v3521, 0.5
      %v3728 = vmul.f32 %v3526, 0.5
      %v3729 = vmul.f32 %v3531, 0.5
      %v3730 = vmul.f32 %v3536, 0.5
      %v3731 = vmul.f32 %v3541, 0.5
      %v3732 = vmul.f32 %v3546, 0.5
      %v3733 = vmul.f32 %v3551, 0.5
      %v3734 = vmul.f32 %v3556, 0.5
      %v3735 = vmul.f32 %v3561, 0.5
      %v3736 = vmul.f32 %v3566, 0.5
      %v3737 = vmul.f32 %v3571, 0.5
      %v3738 = vmul.f32 %v3576, 0.5
      %v3739 = vmul.f32 %v3581, 0.5
      %v3740 = vmul.f32 %v3586, 0.5
      %v3741 = vmul.f32 %v3591, 0.5
      %v3742 = vmul.f32 %v3596, 0.5
      %v3743 = vmul.f32 %v3601, 0.5
      %v3744 = vmul.f32 %v3606, 0.5
      %v3745 = vmul.f32 %v3611, 0.5
      %v3746 = vmul.f32 %v3616, 0.5
      %v3747 = vmul.f32 %v3621, 0.5
      %v3748 = vmul.f32 %v3626, 0.5
      %v3749 = vmul.f32 %v3631, 0.5
      %v3750 = vmul.f32 %v3636, 0.5
      %v3751 = vmul.f32 %v3641, 0.5
      %v3752 = vmul.f32 %v3646, 0.5
      %v3753 = vmul.f32 %v3651, 0.5
      %v3754 = vmul.f32 %v3656, 0.5
      %v3755 = vmul.f32 %v3661, 0.5
      %v3756 = vmul.f32 %v3666, 0.5
      %v3757 = vmul.f32 %v3671, 0.5
      %v3758 = vmul.f32 %v3676, 0.5
      %v3759 = vmul.f32 %v3681, 0.5
      %v3760 = vmul.f32 %v3686, 0.5
      %v3761 = vmul.f32 %v3691, 0.5
      %v3762 = vmul.f32 %v3696, 0.5
      %v3763 = vmul.f32 %v3381, 0.70710677
      %v3764 = vmul.f32 %v3386, 0.70710677
      %v3765 = vmul.f32 %v3391, 0.70710677
      %v3766 = vmul.f32 %v3396, 0.70710677
      %v3767 = vmul.f32 %v3401, 0.70710677
      %v3768 = vmul.f32 %v3406, 0.70710677
      %v3769 = vmul.f32 %v3411, 0.70710677
      %v3770 = vmul.f32 %v3416, 0.70710677
      %v3771 = vmul.f32 %v3421, 0.70710677
      %v3772 = vmul.f32 %v3426, 0.70710677
      %v3773 = vmul.f32 %v3431, 0.70710677
      %v3774 = vmul.f32 %v3436, 0.70710677
      %v3775 = vmul.f32 %v3441, 0.70710677
      %v3776 = vmul.f32 %v3446, 0.70710677
      %v3777 = vmul.f32 %v3451, 0.70710677
      %v3778 = vmul.f32 %v3456, 0.70710677
      %v3779 = vmul.f32 %v3461, 0.70710677
      %v3780 = vmul.f32 %v3466, 0.70710677
      %v3781 = vmul.f32 %v3471, 0.70710677
      %v3782 = vmul.f32 %v3476, 0.70710677
      %v3783 = vmul.f32 %v3481, 0.70710677
      %v3784 = vmul.f32 %v3486, 0.70710677
      %v3785 = vmul.f32 %v3491, 0.70710677
      %v3786 = vmul.f32 %v3496, 0.70710677
      %v3787 = vmul.f32 %v3501, 0.70710677
      %v3788 = vmul.f32 %v3506, 0.70710677
      %v3789 = vmul.f32 %v3511, 0.70710677
      %v3790 = vmul.f32 %v3516, 0.70710677
      %v3791 = vmul.f32 %v3521, 0.70710677
      %v3792 = vmul.f32 %v3526, 0.70710677
      %v3793 = vmul.f32 %v3531, 0.70710677
      %v3794 = vmul.f32 %v3536, 0.70710677
      %v3795 = vmul.f32 %v3541, 0.70710677
      %v3796 = vmul.f32 %v3546, 0.70710677
      %v3797 = vmul.f32 %v3551, 0.70710677
      %v3798 = vmul.f32 %v3556, 0.70710677
      %v3799 = vmul.f32 %v3561, 0.70710677
      %v3800 = vmul.f32 %v3566, 0.70710677
      %v3801 = vmul.f32 %v3571, 0.70710677
      %v3802 = vmul.f32 %v3576, 0.70710677
      %v3803 = vmul.f32 %v3581, 0.70710677
      %v3804 = vmul.f32 %v3586, 0.70710677
      %v3805 = vmul.f32 %v3591, 0.70710677
      %v3806 = vmul.f32 %v3596, 0.70710677
      %v3807 = vmul.f32 %v3601, 0.70710677
      %v3808 = vmul.f32 %v3606, 0.70710677
      %v3809 = vmul.f32 %v3611, 0.70710677
      %v3810 = vmul.f32 %v3616, 0.70710677
      %v3811 = vmul.f32 %v3621, 0.70710677
      %v3812 = vmul.f32 %v3626, 0.70710677
      %v3813 = vmul.f32 %v3631, 0.70710677
      %v3814 = vmul.f32 %v3636, 0.70710677
      %v3815 = vmul.f32 %v3641, 0.70710677
      %v3816 = vmul.f32 %v3646, 0.70710677
      %v3817 = vmul.f32 %v3651, 0.70710677
      %v3818 = vmul.f32 %v3656, 0.70710677
      %v3819 = vmul.f32 %v3661, 0.70710677
      %v3820 = vmul.f32 %v3666, 0.70710677
      %v3821 = vmul.f32 %v3671, 0.70710677
      %v3822 = vmul.f32 %v3676, 0.70710677
      %v3823 = vmul.f32 %v3681, 0.70710677
      %v3824 = vmul.f32 %v3686, 0.70710677
      %v3825 = vmul.f32 %v3691, 0.70710677
      %v3826 = vmul.f32 %v3696, 0.70710677
      %v3827 = verf.f32.pop %v3763
      %v3828 = verf.f32.pop %v3764
      %v3829 = verf.f32.pop %v3765
      %v3830 = verf.f32.pop %v3766
      %v3831 = verf.f32.pop %v3767
      %v3832 = verf.f32.pop %v3768
      %v3833 = verf.f32.pop %v3769
      %v3834 = verf.f32.pop %v3770
      %v3835 = verf.f32.pop %v3771
      %v3836 = verf.f32.pop %v3772
      %v3837 = verf.f32.pop %v3773
      %v3838 = verf.f32.pop %v3774
      %v3839 = verf.f32.pop %v3775
      %v3840 = verf.f32.pop %v3776
      %v3841 = verf.f32.pop %v3777
      %v3842 = verf.f32.pop %v3778
      %v3843 = verf.f32.pop %v3779
      %v3844 = verf.f32.pop %v3780
      %v3845 = verf.f32.pop %v3781
      %v3846 = verf.f32.pop %v3782
      %v3847 = verf.f32.pop %v3783
      %v3848 = verf.f32.pop %v3784
      %v3849 = verf.f32.pop %v3785
      %v3850 = verf.f32.pop %v3786
      %v3851 = verf.f32.pop %v3787
      %v3852 = verf.f32.pop %v3788
      %v3853 = verf.f32.pop %v3789
      %v3854 = verf.f32.pop %v3790
      %v3855 = verf.f32.pop %v3791
      %v3856 = verf.f32.pop %v3792
      %v3857 = verf.f32.pop %v3793
      %v3858 = verf.f32.pop %v3794
      %v3859 = verf.f32.pop %v3795
      %v3860 = verf.f32.pop %v3796
      %v3861 = verf.f32.pop %v3797
      %v3862 = verf.f32.pop %v3798
      %v3863 = verf.f32.pop %v3799
      %v3864 = verf.f32.pop %v3800
      %v3865 = verf.f32.pop %v3801
      %v3866 = verf.f32.pop %v3802
      %v3867 = verf.f32.pop %v3803
      %v3868 = verf.f32.pop %v3804
      %v3869 = verf.f32.pop %v3805
      %v3870 = verf.f32.pop %v3806
      %v3871 = verf.f32.pop %v3807
      %v3872 = verf.f32.pop %v3808
      %v3873 = verf.f32.pop %v3809
      %v3874 = verf.f32.pop %v3810
      %v3875 = verf.f32.pop %v3811
      %v3876 = verf.f32.pop %v3812
      %v3877 = verf.f32.pop %v3813
      %v3878 = verf.f32.pop %v3814
      %v3879 = verf.f32.pop %v3815
      %v3880 = verf.f32.pop %v3816
      %v3881 = verf.f32.pop %v3817
      %v3882 = verf.f32.pop %v3818
      %v3883 = verf.f32.pop %v3819
      %v3884 = verf.f32.pop %v3820
      %v3885 = verf.f32.pop %v3821
      %v3886 = verf.f32.pop %v3822
      %v3887 = verf.f32.pop %v3823
      %v3888 = verf.f32.pop %v3824
      %v3889 = verf.f32.pop %v3825
      %v3890 = verf.f32.pop %v3826
      %v3891 = vadd.f32 %v3827, 1.0
      %v3892 = vadd.f32 %v3828, 1.0
      %v3893 = vadd.f32 %v3829, 1.0
      %v3894 = vadd.f32 %v3830, 1.0
      %v3895 = vadd.f32 %v3831, 1.0
      %v3896 = vadd.f32 %v3832, 1.0
      %v3897 = vadd.f32 %v3833, 1.0
      %v3898 = vadd.f32 %v3834, 1.0
      %v3899 = vadd.f32 %v3835, 1.0
      %v3900 = vadd.f32 %v3836, 1.0
      %v3901 = vadd.f32 %v3837, 1.0
      %v3902 = vadd.f32 %v3838, 1.0
      %v3903 = vadd.f32 %v3839, 1.0
      %v3904 = vadd.f32 %v3840, 1.0
      %v3905 = vadd.f32 %v3841, 1.0
      %v3906 = vadd.f32 %v3842, 1.0
      %v3907 = vadd.f32 %v3843, 1.0
      %v3908 = vadd.f32 %v3844, 1.0
      %v3909 = vadd.f32 %v3845, 1.0
      %v3910 = vadd.f32 %v3846, 1.0
      %v3911 = vadd.f32 %v3847, 1.0
      %v3912 = vadd.f32 %v3848, 1.0
      %v3913 = vadd.f32 %v3849, 1.0
      %v3914 = vadd.f32 %v3850, 1.0
      %v3915 = vadd.f32 %v3851, 1.0
      %v3916 = vadd.f32 %v3852, 1.0
      %v3917 = vadd.f32 %v3853, 1.0
      %v3918 = vadd.f32 %v3854, 1.0
      %v3919 = vadd.f32 %v3855, 1.0
      %v3920 = vadd.f32 %v3856, 1.0
      %v3921 = vadd.f32 %v3857, 1.0
      %v3922 = vadd.f32 %v3858, 1.0
      %v3923 = vadd.f32 %v3859, 1.0
      %v3924 = vadd.f32 %v3860, 1.0
      %v3925 = vadd.f32 %v3861, 1.0
      %v3926 = vadd.f32 %v3862, 1.0
      %v3927 = vadd.f32 %v3863, 1.0
      %v3928 = vadd.f32 %v3864, 1.0
      %v3929 = vadd.f32 %v3865, 1.0
      %v3930 = vadd.f32 %v3866, 1.0
      %v3931 = vadd.f32 %v3867, 1.0
      %v3932 = vadd.f32 %v3868, 1.0
      %v3933 = vadd.f32 %v3869, 1.0
      %v3934 = vadd.f32 %v3870, 1.0
      %v3935 = vadd.f32 %v3871, 1.0
      %v3936 = vadd.f32 %v3872, 1.0
      %v3937 = vadd.f32 %v3873, 1.0
      %v3938 = vadd.f32 %v3874, 1.0
      %v3939 = vadd.f32 %v3875, 1.0
      %v3940 = vadd.f32 %v3876, 1.0
      %v3941 = vadd.f32 %v3877, 1.0
      %v3942 = vadd.f32 %v3878, 1.0
      %v3943 = vadd.f32 %v3879, 1.0
      %v3944 = vadd.f32 %v3880, 1.0
      %v3945 = vadd.f32 %v3881, 1.0
      %v3946 = vadd.f32 %v3882, 1.0
      %v3947 = vadd.f32 %v3883, 1.0
      %v3948 = vadd.f32 %v3884, 1.0
      %v3949 = vadd.f32 %v3885, 1.0
      %v3950 = vadd.f32 %v3886, 1.0
      %v3951 = vadd.f32 %v3887, 1.0
      %v3952 = vadd.f32 %v3888, 1.0
      %v3953 = vadd.f32 %v3889, 1.0
      %v3954 = vadd.f32 %v3890, 1.0
      %v3955 = vmul.f32 %v3699, %v3891
      %v3956 = vmul.f32 %v3700, %v3892
      %v3957 = vmul.f32 %v3701, %v3893
      %v3958 = vmul.f32 %v3702, %v3894
      %v3959 = vmul.f32 %v3703, %v3895
      %v3960 = vmul.f32 %v3704, %v3896
      %v3961 = vmul.f32 %v3705, %v3897
      %v3962 = vmul.f32 %v3706, %v3898
      %v3963 = vmul.f32 %v3707, %v3899
      %v3964 = vmul.f32 %v3708, %v3900
      %v3965 = vmul.f32 %v3709, %v3901
      %v3966 = vmul.f32 %v3710, %v3902
      %v3967 = vmul.f32 %v3711, %v3903
      %v3968 = vmul.f32 %v3712, %v3904
      %v3969 = vmul.f32 %v3713, %v3905
      %v3970 = vmul.f32 %v3714, %v3906
      %v3971 = vmul.f32 %v3715, %v3907
      %v3972 = vmul.f32 %v3716, %v3908
      %v3973 = vmul.f32 %v3717, %v3909
      %v3974 = vmul.f32 %v3718, %v3910
      %v3975 = vmul.f32 %v3719, %v3911
      %v3976 = vmul.f32 %v3720, %v3912
      %v3977 = vmul.f32 %v3721, %v3913
      %v3978 = vmul.f32 %v3722, %v3914
      %v3979 = vmul.f32 %v3723, %v3915
      %v3980 = vmul.f32 %v3724, %v3916
      %v3981 = vmul.f32 %v3725, %v3917
      %v3982 = vmul.f32 %v3726, %v3918
      %v3983 = vmul.f32 %v3727, %v3919
      %v3984 = vmul.f32 %v3728, %v3920
      %v3985 = vmul.f32 %v3729, %v3921
      %v3986 = vmul.f32 %v3730, %v3922
      %v3987 = vmul.f32 %v3731, %v3923
      %v3988 = vmul.f32 %v3732, %v3924
      %v3989 = vmul.f32 %v3733, %v3925
      %v3990 = vmul.f32 %v3734, %v3926
      %v3991 = vmul.f32 %v3735, %v3927
      %v3992 = vmul.f32 %v3736, %v3928
      %v3993 = vmul.f32 %v3737, %v3929
      %v3994 = vmul.f32 %v3738, %v3930
      %v3995 = vmul.f32 %v3739, %v3931
      %v3996 = vmul.f32 %v3740, %v3932
      %v3997 = vmul.f32 %v3741, %v3933
      %v3998 = vmul.f32 %v3742, %v3934
      %v3999 = vmul.f32 %v3743, %v3935
      %v4000 = vmul.f32 %v3744, %v3936
      %v4001 = vmul.f32 %v3745, %v3937
      %v4002 = vmul.f32 %v3746, %v3938
      %v4003 = vmul.f32 %v3747, %v3939
      %v4004 = vmul.f32 %v3748, %v3940
      %v4005 = vmul.f32 %v3749, %v3941
      %v4006 = vmul.f32 %v3750, %v3942
      %v4007 = vmul.f32 %v3751, %v3943
      %v4008 = vmul.f32 %v3752, %v3944
      %v4009 = vmul.f32 %v3753, %v3945
      %v4010 = vmul.f32 %v3754, %v3946
      %v4011 = vmul.f32 %v3755, %v3947
      %v4012 = vmul.f32 %v3756, %v3948
      %v4013 = vmul.f32 %v3757, %v3949
      %v4014 = vmul.f32 %v3758, %v3950
      %v4015 = vmul.f32 %v3759, %v3951
      %v4016 = vmul.f32 %v3760, %v3952
      %v4017 = vmul.f32 %v3761, %v3953
      %v4018 = vmul.f32 %v3762, %v3954
      %4020 = vset.pattern.permute.xlu0 0
      %4021 = vperm.xlu0 %4020, %v947
      %v4022 = vpop.permute.xlu0 %4021
      %4025 = vset.pattern.permute.xlu0 0
      %4026 = vperm.xlu0 %4025, %v948
      %v4027 = vpop.permute.xlu0 %4026
      %4030 = vset.pattern.permute.xlu0 0
      %4031 = vperm.xlu0 %4030, %v949
      %v4032 = vpop.permute.xlu0 %4031
      %4035 = vset.pattern.permute.xlu0 0
      %4036 = vperm.xlu0 %4035, %v950
      %v4037 = vpop.permute.xlu0 %4036
      %4040 = vset.pattern.permute.xlu0 0
      %4041 = vperm.xlu0 %4040, %v951
      %v4042 = vpop.permute.xlu0 %4041
      %4045 = vset.pattern.permute.xlu0 0
      %4046 = vperm.xlu0 %4045, %v952
      %v4047 = vpop.permute.xlu0 %4046
      %4050 = vset.pattern.permute.xlu0 0
      %4051 = vperm.xlu0 %4050, %v953
      %v4052 = vpop.permute.xlu0 %4051
      %4055 = vset.pattern.permute.xlu0 0
      %4056 = vperm.xlu0 %4055, %v954
      %v4057 = vpop.permute.xlu0 %4056
      %4060 = vset.pattern.permute.xlu0 0
      %4061 = vperm.xlu0 %4060, %v955
      %v4062 = vpop.permute.xlu0 %4061
      %4065 = vset.pattern.permute.xlu0 0
      %4066 = vperm.xlu0 %4065, %v956
      %v4067 = vpop.permute.xlu0 %4066
      %4070 = vset.pattern.permute.xlu0 0
      %4071 = vperm.xlu0 %4070, %v957
      %v4072 = vpop.permute.xlu0 %4071
      %4075 = vset.pattern.permute.xlu0 0
      %4076 = vperm.xlu0 %4075, %v958
      %v4077 = vpop.permute.xlu0 %4076
      %4080 = vset.pattern.permute.xlu0 0
      %4081 = vperm.xlu0 %4080, %v959
      %v4082 = vpop.permute.xlu0 %4081
      %4085 = vset.pattern.permute.xlu0 0
      %4086 = vperm.xlu0 %4085, %v960
      %v4087 = vpop.permute.xlu0 %4086
      %4090 = vset.pattern.permute.xlu0 0
      %4091 = vperm.xlu0 %4090, %v961
      %v4092 = vpop.permute.xlu0 %4091
      %4095 = vset.pattern.permute.xlu0 0
      %4096 = vperm.xlu0 %4095, %v962
      %v4097 = vpop.permute.xlu0 %4096
      %4100 = vset.pattern.permute.xlu0 0
      %4101 = vperm.xlu0 %4100, %v963
      %v4102 = vpop.permute.xlu0 %4101
      %4105 = vset.pattern.permute.xlu0 0
      %4106 = vperm.xlu0 %4105, %v964
      %v4107 = vpop.permute.xlu0 %4106
      %4110 = vset.pattern.permute.xlu0 0
      %4111 = vperm.xlu0 %4110, %v965
      %v4112 = vpop.permute.xlu0 %4111
      %4115 = vset.pattern.permute.xlu0 0
      %4116 = vperm.xlu0 %4115, %v966
      %v4117 = vpop.permute.xlu0 %4116
      %4120 = vset.pattern.permute.xlu0 0
      %4121 = vperm.xlu0 %4120, %v967
      %v4122 = vpop.permute.xlu0 %4121
      %4125 = vset.pattern.permute.xlu0 0
      %4126 = vperm.xlu0 %4125, %v968
      %v4127 = vpop.permute.xlu0 %4126
      %4130 = vset.pattern.permute.xlu0 0
      %4131 = vperm.xlu0 %4130, %v969
      %v4132 = vpop.permute.xlu0 %4131
      %4135 = vset.pattern.permute.xlu0 0
      %4136 = vperm.xlu0 %4135, %v970
      %v4137 = vpop.permute.xlu0 %4136
      %4140 = vset.pattern.permute.xlu0 0
      %4141 = vperm.xlu0 %4140, %v971
      %v4142 = vpop.permute.xlu0 %4141
      %4144 = vmatprep.subr.mxu0 0.0
      %4145 = vmatpush1.msra.mxu0 %v3970
      %4146 = vmatprep.subr.mxu0 0.0
      %4147 = vmatpush1.msra.mxu0 %v3969
      %4148 = vmatprep.subr.mxu0 0.0
      %4149 = vmatpush1.msra.mxu0 %v3968
      %4150 = vmatprep.subr.mxu0 0.0
      %4151 = vmatpush1.msra.mxu0 %v3967
      %4152 = vmatprep.subr.mxu0 0.0
      %4153 = vmatpush1.msra.mxu0 %v3966
      %4154 = vmatprep.subr.mxu0 0.0
      %4155 = vmatpush1.msra.mxu0 %v3965
      %4156 = vmatprep.subr.mxu0 0.0
      %4157 = vmatpush1.msra.mxu0 %v3964
      %4158 = vmatprep.subr.mxu0 0.0
      %4159 = vmatpush1.msra.mxu0 %v3963
      %4160 = vmatprep.subr.mxu0 0.0
      %4161 = vmatpush1.msra.mxu0 %v3962
      %4162 = vmatprep.subr.mxu0 0.0
      %4163 = vmatpush1.msra.mxu0 %v3961
      %4164 = vmatprep.subr.mxu0 0.0
      %4165 = vmatpush1.msra.mxu0 %v3960
      %4166 = vmatprep.subr.mxu0 0.0
      %4167 = vmatpush1.msra.mxu0 %v3959
      %4168 = vmatprep.subr.mxu0 0.0
      %4169 = vmatpush1.msra.mxu0 %v3958
      %4170 = vmatprep.subr.mxu0 0.0
      %4171 = vmatpush1.msra.mxu0 %v3957
      %4172 = vmatprep.subr.mxu0 0.0
      %4173 = vmatpush1.msra.mxu0 %v3956
      %4174 = vmatprep.subr.mxu0 0.0
      %4175 = vmatpush1.msra.mxu0 %v3955
      %4176 = vmatprep.subr.mxu0 0.0
      %4177 = vmatpush2.msra.mxu0 %v3986
      %4178 = vmatprep.subr.mxu0 0.0
      %4179 = vmatpush2.msra.mxu0 %v3985
      %4180 = vmatprep.subr.mxu0 0.0
      %4181 = vmatpush2.msra.mxu0 %v3984
      %4182 = vmatprep.subr.mxu0 0.0
      %4183 = vmatpush2.msra.mxu0 %v3983
      %4184 = vmatprep.subr.mxu0 0.0
      %4185 = vmatpush2.msra.mxu0 %v3982
      %4186 = vmatprep.subr.mxu0 0.0
      %4187 = vmatpush2.msra.mxu0 %v3981
      %4188 = vmatprep.subr.mxu0 0.0
      %4189 = vmatpush2.msra.mxu0 %v3980
      %4190 = vmatprep.subr.mxu0 0.0
      %4191 = vmatpush2.msra.mxu0 %v3979
      %4192 = vmatprep.subr.mxu0 0.0
      %4193 = vmatpush2.msra.mxu0 %v3978
      %4194 = vmatprep.subr.mxu0 0.0
      %4195 = vmatpush2.msra.mxu0 %v3977
      %4196 = vmatprep.subr.mxu0 0.0
      %4197 = vmatpush2.msra.mxu0 %v3976
      %4198 = vmatprep.subr.mxu0 0.0
      %4199 = vmatpush2.msra.mxu0 %v3975
      %4200 = vmatprep.subr.mxu0 0.0
      %4201 = vmatpush2.msra.mxu0 %v3974
      %4202 = vmatprep.subr.mxu0 0.0
      %4203 = vmatpush2.msra.mxu0 %v3973
      %4204 = vmatprep.subr.mxu0 0.0
      %4205 = vmatpush2.msra.mxu0 %v3972
      %4206 = vmatprep.subr.mxu0 0.0
      %4207 = vmatpush2.msra.mxu0 %v3971
      %4208 = vmatprep.mubr.f32.mxu0 %v720
      %4209 = vmatmul.mubr.f32.gmra.mxu0 %v719
      %v4210 = vpop.f32.mrf.mxu0
      %v4211 = vadd.f32 %v4022, %v4210
      %v4212 = vpop.f32.mrf.mxu0
      %4213 = vmatprep.mubr.f32.mxu0 %v724
      %4214 = vmatmul.mubr.f32.gmra.mxu0 %v723
      %v4215 = vpop.f32.mrf.mxu0
      %v4216 = vadd.f32 %v4027, %v4215
      %v4217 = vpop.f32.mrf.mxu0
      %4218 = vmatprep.mubr.f32.mxu0 %v728
      %4219 = vmatmul.mubr.f32.gmra.mxu0 %v727
      %v4220 = vpop.f32.mrf.mxu0
      %v4221 = vadd.f32 %v4032, %v4220
      %v4222 = vpop.f32.mrf.mxu0
      %4223 = vmatprep.mubr.f32.mxu0 %v732
      %4224 = vmatmul.mubr.f32.gmra.mxu0 %v731
      %v4225 = vpop.f32.mrf.mxu0
      %v4226 = vadd.f32 %v4037, %v4225
      %v4227 = vpop.f32.mrf.mxu0
      %4228 = vmatprep.mubr.f32.mxu0 %v736
      %4229 = vmatmul.mubr.f32.gmra.mxu0 %v735
      %v4230 = vpop.f32.mrf.mxu0
      %v4231 = vadd.f32 %v4042, %v4230
      %v4232 = vpop.f32.mrf.mxu0
      %4233 = vmatprep.mubr.f32.mxu0 %v740
      %4234 = vmatmul.mubr.f32.gmra.mxu0 %v739
      %v4235 = vpop.f32.mrf.mxu0
      %v4236 = vadd.f32 %v4047, %v4235
      %v4237 = vpop.f32.mrf.mxu0
      %4238 = vmatprep.mubr.f32.mxu0 %v744
      %4239 = vmatmul.mubr.f32.gmra.mxu0 %v743
      %v4240 = vpop.f32.mrf.mxu0
      %v4241 = vadd.f32 %v4052, %v4240
      %v4242 = vpop.f32.mrf.mxu0
      %4243 = vmatprep.mubr.f32.mxu0 %v748
      %4244 = vmatmul.mubr.f32.gmra.mxu0 %v747
      %v4245 = vpop.f32.mrf.mxu0
      %v4246 = vadd.f32 %v4057, %v4245
      %v4247 = vpop.f32.mrf.mxu0
      %4248 = vmatprep.mubr.f32.mxu0 %v752
      %4249 = vmatmul.mubr.f32.gmra.mxu0 %v751
      %v4250 = vpop.f32.mrf.mxu0
      %v4251 = vadd.f32 %v4062, %v4250
      %v4252 = vpop.f32.mrf.mxu0
      %4253 = vmatprep.mubr.f32.mxu0 %v756
      %4254 = vmatmul.mubr.f32.gmra.mxu0 %v755
      %v4255 = vpop.f32.mrf.mxu0
      %v4256 = vadd.f32 %v4067, %v4255
      %v4257 = vpop.f32.mrf.mxu0
      %4258 = vmatprep.mubr.f32.mxu0 %v760
      %4259 = vmatmul.mubr.f32.gmra.mxu0 %v759
      %v4260 = vpop.f32.mrf.mxu0
      %v4261 = vadd.f32 %v4072, %v4260
      %v4262 = vpop.f32.mrf.mxu0
      %4263 = vmatprep.mubr.f32.mxu0 %v764
      %4264 = vmatmul.mubr.f32.gmra.mxu0 %v763
      %v4265 = vpop.f32.mrf.mxu0
      %v4266 = vadd.f32 %v4077, %v4265
      %v4267 = vpop.f32.mrf.mxu0
      %4268 = vmatprep.mubr.f32.mxu0 %v768
      %4269 = vmatmul.mubr.f32.gmra.mxu0 %v767
      %v4270 = vpop.f32.mrf.mxu0
      %v4271 = vadd.f32 %v4082, %v4270
      %v4272 = vpop.f32.mrf.mxu0
      %4273 = vmatprep.mubr.f32.mxu0 %v772
      %4274 = vmatmul.mubr.f32.gmra.mxu0 %v771
      %v4275 = vpop.f32.mrf.mxu0
      %v4276 = vadd.f32 %v4087, %v4275
      %v4277 = vpop.f32.mrf.mxu0
      %4278 = vmatprep.mubr.f32.mxu0 %v776
      %4279 = vmatmul.mubr.f32.gmra.mxu0 %v775
      %v4280 = vpop.f32.mrf.mxu0
      %v4281 = vadd.f32 %v4092, %v4280
      %v4282 = vpop.f32.mrf.mxu0
      %4283 = vmatprep.mubr.f32.mxu0 %v780
      %4284 = vmatmul.mubr.f32.gmra.mxu0 %v779
      %v4285 = vpop.f32.mrf.mxu0
      %v4286 = vadd.f32 %v4097, %v4285
      %v4287 = vpop.f32.mrf.mxu0
      %4288 = vmatprep.mubr.f32.mxu0 %v784
      %4289 = vmatmul.mubr.f32.gmra.mxu0 %v783
      %v4290 = vpop.f32.mrf.mxu0
      %v4291 = vadd.f32 %v4102, %v4290
      %v4292 = vpop.f32.mrf.mxu0
      %4293 = vmatprep.mubr.f32.mxu0 %v788
      %4294 = vmatmul.mubr.f32.gmra.mxu0 %v787
      %v4295 = vpop.f32.mrf.mxu0
      %v4296 = vadd.f32 %v4107, %v4295
      %v4297 = vpop.f32.mrf.mxu0
      %4298 = vmatprep.mubr.f32.mxu0 %v792
      %4299 = vmatmul.mubr.f32.gmra.mxu0 %v791
      %v4300 = vpop.f32.mrf.mxu0
      %v4301 = vadd.f32 %v4112, %v4300
      %v4302 = vpop.f32.mrf.mxu0
      %4303 = vmatprep.mubr.f32.mxu0 %v796
      %4304 = vmatmul.mubr.f32.gmra.mxu0 %v795
      %v4305 = vpop.f32.mrf.mxu0
      %v4306 = vadd.f32 %v4117, %v4305
      %v4307 = vpop.f32.mrf.mxu0
      %4308 = vmatprep.mubr.f32.mxu0 %v800
      %4309 = vmatmul.mubr.f32.gmra.mxu0 %v799
      %v4310 = vpop.f32.mrf.mxu0
      %v4311 = vadd.f32 %v4122, %v4310
      %v4312 = vpop.f32.mrf.mxu0
      %4313 = vmatprep.mubr.f32.mxu0 %v804
      %4314 = vmatmul.mubr.f32.gmra.mxu0 %v803
      %v4315 = vpop.f32.mrf.mxu0
      %v4316 = vadd.f32 %v4127, %v4315
      %v4317 = vpop.f32.mrf.mxu0
      %4318 = vmatprep.mubr.f32.mxu0 %v808
      %4319 = vmatmul.mubr.f32.gmra.mxu0 %v807
      %v4320 = vpop.f32.mrf.mxu0
      %v4321 = vadd.f32 %v4132, %v4320
      %v4322 = vpop.f32.mrf.mxu0
      %4323 = vmatprep.mubr.f32.mxu0 %v812
      %4324 = vmatmul.mubr.f32.gmra.mxu0 %v811
      %v4325 = vpop.f32.mrf.mxu0
      %v4326 = vadd.f32 %v4137, %v4325
      %v4327 = vpop.f32.mrf.mxu0
      %4328 = vmatprep.mubr.f32.mxu0 %v816
      %4329 = vmatmul.mubr.f32.gmra.mxu0 %v815
      %v4330 = vpop.f32.mrf.mxu0
      %v4331 = vadd.f32 %v4142, %v4330
      %v4332 = vpop.f32.mrf.mxu0
      %4333 = vdwg.mxu0
      %4334 = vmatprep.subr.mxu0 0.0
      %4335 = vmatpush1.msra.mxu0 %v4002
      %4336 = vmatprep.subr.mxu0 0.0
      %4337 = vmatpush1.msra.mxu0 %v4001
      %4338 = vmatprep.subr.mxu0 0.0
      %4339 = vmatpush1.msra.mxu0 %v4000
      %4340 = vmatprep.subr.mxu0 0.0
      %4341 = vmatpush1.msra.mxu0 %v3999
      %4342 = vmatprep.subr.mxu0 0.0
      %4343 = vmatpush1.msra.mxu0 %v3998
      %4344 = vmatprep.subr.mxu0 0.0
      %4345 = vmatpush1.msra.mxu0 %v3997
      %4346 = vmatprep.subr.mxu0 0.0
      %4347 = vmatpush1.msra.mxu0 %v3996
      %4348 = vmatprep.subr.mxu0 0.0
      %4349 = vmatpush1.msra.mxu0 %v3995
      %4350 = vmatprep.subr.mxu0 0.0
      %4351 = vmatpush1.msra.mxu0 %v3994
      %4352 = vmatprep.subr.mxu0 0.0
      %4353 = vmatpush1.msra.mxu0 %v3993
      %4354 = vmatprep.subr.mxu0 0.0
      %4355 = vmatpush1.msra.mxu0 %v3992
      %4356 = vmatprep.subr.mxu0 0.0
      %4357 = vmatpush1.msra.mxu0 %v3991
      %4358 = vmatprep.subr.mxu0 0.0
      %4359 = vmatpush1.msra.mxu0 %v3990
      %4360 = vmatprep.subr.mxu0 0.0
      %4361 = vmatpush1.msra.mxu0 %v3989
      %4362 = vmatprep.subr.mxu0 0.0
      %4363 = vmatpush1.msra.mxu0 %v3988
      %4364 = vmatprep.subr.mxu0 0.0
      %4365 = vmatpush1.msra.mxu0 %v3987
      %4366 = vmatprep.subr.mxu0 0.0
      %4367 = vmatpush2.msra.mxu0 %v4018
      %4368 = vmatprep.subr.mxu0 0.0
      %4369 = vmatpush2.msra.mxu0 %v4017
      %4370 = vmatprep.subr.mxu0 0.0
      %4371 = vmatpush2.msra.mxu0 %v4016
      %4372 = vmatprep.subr.mxu0 0.0
      %4373 = vmatpush2.msra.mxu0 %v4015
      %4374 = vmatprep.subr.mxu0 0.0
      %4375 = vmatpush2.msra.mxu0 %v4014
      %4376 = vmatprep.subr.mxu0 0.0
      %4377 = vmatpush2.msra.mxu0 %v4013
      %4378 = vmatprep.subr.mxu0 0.0
      %4379 = vmatpush2.msra.mxu0 %v4012
      %4380 = vmatprep.subr.mxu0 0.0
      %4381 = vmatpush2.msra.mxu0 %v4011
      %4382 = vmatprep.subr.mxu0 0.0
      %4383 = vmatpush2.msra.mxu0 %v4010
      %4384 = vmatprep.subr.mxu0 0.0
      %4385 = vmatpush2.msra.mxu0 %v4009
      %4386 = vmatprep.subr.mxu0 0.0
      %4387 = vmatpush2.msra.mxu0 %v4008
      %4388 = vmatprep.subr.mxu0 0.0
      %4389 = vmatpush2.msra.mxu0 %v4007
      %4390 = vmatprep.subr.mxu0 0.0
      %4391 = vmatpush2.msra.mxu0 %v4006
      %4392 = vmatprep.subr.mxu0 0.0
      %4393 = vmatpush2.msra.mxu0 %v4005
      %4394 = vmatprep.subr.mxu0 0.0
      %4395 = vmatpush2.msra.mxu0 %v4004
      %4396 = vmatprep.subr.mxu0 0.0
      %4397 = vmatpush2.msra.mxu0 %v4003
      %4398 = vmatprep.mubr.f32.mxu0 %v722
      %4399 = vmatmul.mubr.f32.gmra.mxu0 %v721
      %v4400 = vpop.f32.mrf.mxu0
      %v4401 = vadd.f32 %v4211, %v4400
      %v4402 = vpop.f32.mrf.mxu0
      %4403 = vmatprep.mubr.f32.mxu0 %v726
      %4404 = vmatmul.mubr.f32.gmra.mxu0 %v725
      %v4405 = vpop.f32.mrf.mxu0
      %v4406 = vadd.f32 %v4216, %v4405
      %v4407 = vpop.f32.mrf.mxu0
      %4408 = vmatprep.mubr.f32.mxu0 %v730
      %4409 = vmatmul.mubr.f32.gmra.mxu0 %v729
      %v4410 = vpop.f32.mrf.mxu0
      %v4411 = vadd.f32 %v4221, %v4410
      %v4412 = vpop.f32.mrf.mxu0
      %4413 = vmatprep.mubr.f32.mxu0 %v734
      %4414 = vmatmul.mubr.f32.gmra.mxu0 %v733
      %v4415 = vpop.f32.mrf.mxu0
      %v4416 = vadd.f32 %v4226, %v4415
      %v4417 = vpop.f32.mrf.mxu0
      %4418 = vmatprep.mubr.f32.mxu0 %v738
      %4419 = vmatmul.mubr.f32.gmra.mxu0 %v737
      %v4420 = vpop.f32.mrf.mxu0
      %v4421 = vadd.f32 %v4231, %v4420
      %v4422 = vpop.f32.mrf.mxu0
      %4423 = vmatprep.mubr.f32.mxu0 %v742
      %4424 = vmatmul.mubr.f32.gmra.mxu0 %v741
      %v4425 = vpop.f32.mrf.mxu0
      %v4426 = vadd.f32 %v4236, %v4425
      %v4427 = vpop.f32.mrf.mxu0
      %4428 = vmatprep.mubr.f32.mxu0 %v746
      %4429 = vmatmul.mubr.f32.gmra.mxu0 %v745
      %v4430 = vpop.f32.mrf.mxu0
      %v4431 = vadd.f32 %v4241, %v4430
      %v4432 = vpop.f32.mrf.mxu0
      %4433 = vmatprep.mubr.f32.mxu0 %v750
      %4434 = vmatmul.mubr.f32.gmra.mxu0 %v749
      %v4435 = vpop.f32.mrf.mxu0
      %v4436 = vadd.f32 %v4246, %v4435
      %v4437 = vpop.f32.mrf.mxu0
      %4438 = vmatprep.mubr.f32.mxu0 %v754
      %4439 = vmatmul.mubr.f32.gmra.mxu0 %v753
      %v4440 = vpop.f32.mrf.mxu0
      %v4441 = vadd.f32 %v4251, %v4440
      %v4442 = vpop.f32.mrf.mxu0
      %4443 = vmatprep.mubr.f32.mxu0 %v758
      %4444 = vmatmul.mubr.f32.gmra.mxu0 %v757
      %v4445 = vpop.f32.mrf.mxu0
      %v4446 = vadd.f32 %v4256, %v4445
      %v4447 = vpop.f32.mrf.mxu0
      %4448 = vmatprep.mubr.f32.mxu0 %v762
      %4449 = vmatmul.mubr.f32.gmra.mxu0 %v761
      %v4450 = vpop.f32.mrf.mxu0
      %v4451 = vadd.f32 %v4261, %v4450
      %v4452 = vpop.f32.mrf.mxu0
      %4453 = vmatprep.mubr.f32.mxu0 %v766
      %4454 = vmatmul.mubr.f32.gmra.mxu0 %v765
      %v4455 = vpop.f32.mrf.mxu0
      %v4456 = vadd.f32 %v4266, %v4455
      %v4457 = vpop.f32.mrf.mxu0
      %4458 = vmatprep.mubr.f32.mxu0 %v770
      %4459 = vmatmul.mubr.f32.gmra.mxu0 %v769
      %v4460 = vpop.f32.mrf.mxu0
      %v4461 = vadd.f32 %v4271, %v4460
      %v4462 = vpop.f32.mrf.mxu0
      %4463 = vmatprep.mubr.f32.mxu0 %v774
      %4464 = vmatmul.mubr.f32.gmra.mxu0 %v773
      %v4465 = vpop.f32.mrf.mxu0
      %v4466 = vadd.f32 %v4276, %v4465
      %v4467 = vpop.f32.mrf.mxu0
      %4468 = vmatprep.mubr.f32.mxu0 %v778
      %4469 = vmatmul.mubr.f32.gmra.mxu0 %v777
      %v4470 = vpop.f32.mrf.mxu0
      %v4471 = vadd.f32 %v4281, %v4470
      %v4472 = vpop.f32.mrf.mxu0
      %4473 = vmatprep.mubr.f32.mxu0 %v782
      %4474 = vmatmul.mubr.f32.gmra.mxu0 %v781
      %v4475 = vpop.f32.mrf.mxu0
      %v4476 = vadd.f32 %v4286, %v4475
      %v4477 = vpop.f32.mrf.mxu0
      %4478 = vmatprep.mubr.f32.mxu0 %v786
      %4479 = vmatmul.mubr.f32.gmra.mxu0 %v785
      %v4480 = vpop.f32.mrf.mxu0
      %v4481 = vadd.f32 %v4291, %v4480
      %v4482 = vpop.f32.mrf.mxu0
      %4483 = vmatprep.mubr.f32.mxu0 %v790
      %4484 = vmatmul.mubr.f32.gmra.mxu0 %v789
      %v4485 = vpop.f32.mrf.mxu0
      %v4486 = vadd.f32 %v4296, %v4485
      %v4487 = vpop.f32.mrf.mxu0
      %4488 = vmatprep.mubr.f32.mxu0 %v794
      %4489 = vmatmul.mubr.f32.gmra.mxu0 %v793
      %v4490 = vpop.f32.mrf.mxu0
      %v4491 = vadd.f32 %v4301, %v4490
      %v4492 = vpop.f32.mrf.mxu0
      %4493 = vmatprep.mubr.f32.mxu0 %v798
      %4494 = vmatmul.mubr.f32.gmra.mxu0 %v797
      %v4495 = vpop.f32.mrf.mxu0
      %v4496 = vadd.f32 %v4306, %v4495
      %v4497 = vpop.f32.mrf.mxu0
      %4498 = vmatprep.mubr.f32.mxu0 %v802
      %4499 = vmatmul.mubr.f32.gmra.mxu0 %v801
      %v4500 = vpop.f32.mrf.mxu0
      %v4501 = vadd.f32 %v4311, %v4500
      %v4502 = vpop.f32.mrf.mxu0
      %4503 = vmatprep.mubr.f32.mxu0 %v806
      %4504 = vmatmul.mubr.f32.gmra.mxu0 %v805
      %v4505 = vpop.f32.mrf.mxu0
      %v4506 = vadd.f32 %v4316, %v4505
      %v4507 = vpop.f32.mrf.mxu0
      %4508 = vmatprep.mubr.f32.mxu0 %v810
      %4509 = vmatmul.mubr.f32.gmra.mxu0 %v809
      %v4510 = vpop.f32.mrf.mxu0
      %v4511 = vadd.f32 %v4321, %v4510
      %v4512 = vpop.f32.mrf.mxu0
      %4513 = vmatprep.mubr.f32.mxu0 %v814
      %4514 = vmatmul.mubr.f32.gmra.mxu0 %v813
      %v4515 = vpop.f32.mrf.mxu0
      %v4516 = vadd.f32 %v4326, %v4515
      %v4517 = vpop.f32.mrf.mxu0
      %4518 = vmatprep.mubr.f32.mxu0 %v818
      %4519 = vmatmul.mubr.f32.gmra.mxu0 %v817
      %v4520 = vpop.f32.mrf.mxu0
      %v4521 = vadd.f32 %v4331, %v4520
      %v4522 = vpop.f32.mrf.mxu0
      %4523 = vdwg.mxu0
      %v4524 = vadd.f32 %v972, %v4401
      %v4525 = vadd.f32 %v973, %v4406
      %v4526 = vadd.f32 %v974, %v4411
      %v4527 = vadd.f32 %v975, %v4416
      %v4528 = vadd.f32 %v976, %v4421
      %v4529 = vadd.f32 %v977, %v4426
      %v4530 = vadd.f32 %v978, %v4431
      %v4531 = vadd.f32 %v979, %v4436
      %v4532 = vadd.f32 %v980, %v4441
      %v4533 = vadd.f32 %v981, %v4446
      %v4534 = vadd.f32 %v982, %v4451
      %v4535 = vadd.f32 %v983, %v4456
      %v4536 = vadd.f32 %v984, %v4461
      %v4537 = vadd.f32 %v985, %v4466
      %v4538 = vadd.f32 %v986, %v4471
      %v4539 = vadd.f32 %v987, %v4476
      %v4540 = vadd.f32 %v988, %v4481
      %v4541 = vadd.f32 %v989, %v4486
      %v4542 = vadd.f32 %v990, %v4491
      %v4543 = vadd.f32 %v991, %v4496
      %v4544 = vadd.f32 %v992, %v4501
      %v4545 = vadd.f32 %v993, %v4506
      %v4546 = vadd.f32 %v994, %v4511
      %v4547 = vadd.f32 %v995, %v4516
      %v4548 = vadd.f32 %v996, %v4521
      %4549 = vst.msk [vmem:[%s332] sm:$0xff] %vm997, %v4524
      %4550 = vst.msk [vmem:[%s332 + $0x8] sm:$0xff] %vm997, %v4525
      %4551 = vst.msk [vmem:[%s332 + $0x10] sm:$0xff] %vm997, %v4526
      %4552 = vst.msk [vmem:[%s332 + $0x18] sm:$0xff] %vm997, %v4527
      %4553 = vst.msk [vmem:[%s332 + $0x20] sm:$0xff] %vm997, %v4528
      %4554 = vst.msk [vmem:[%s332 + $0x28] sm:$0xff] %vm997, %v4529
      %4555 = vst.msk [vmem:[%s332 + $0x30] sm:$0xff] %vm997, %v4530
      %4556 = vst.msk [vmem:[%s332 + $0x38] sm:$0xff] %vm997, %v4531
      %4557 = vst.msk [vmem:[%s332 + $0x40] sm:$0xff] %vm997, %v4532
      %4558 = vst.msk [vmem:[%s332 + $0x48] sm:$0xff] %vm997, %v4533
      %4559 = vst.msk [vmem:[%s332 + $0x50] sm:$0xff] %vm997, %v4534
      %4560 = vst.msk [vmem:[%s332 + $0x58] sm:$0xff] %vm997, %v4535
      %4561 = vst.msk [vmem:[%s332 + $0x60] sm:$0xff] %vm997, %v4536
      %4562 = vst.msk [vmem:[%s332 + $0x68] sm:$0xff] %vm997, %v4537
      %4563 = vst.msk [vmem:[%s332 + $0x70] sm:$0xff] %vm997, %v4538
      %4564 = vst.msk [vmem:[%s332 + $0x78] sm:$0xff] %vm997, %v4539
      %4565 = vst.msk [vmem:[%s332 + $0x80] sm:$0xff] %vm997, %v4540
      %4566 = vst.msk [vmem:[%s332 + $0x88] sm:$0xff] %vm997, %v4541
      %4567 = vst.msk [vmem:[%s332 + $0x90] sm:$0xff] %vm997, %v4542
      %4568 = vst.msk [vmem:[%s332 + $0x98] sm:$0xff] %vm997, %v4543
      %4569 = vst.msk [vmem:[%s332 + $0xa0] sm:$0xff] %vm997, %v4544
      %4570 = vst.msk [vmem:[%s332 + $0xa8] sm:$0xff] %vm997, %v4545
      %4571 = vst.msk [vmem:[%s332 + $0xb0] sm:$0xff] %vm997, %v4546
      %4572 = vst.msk [vmem:[%s332 + $0xb8] sm:$0xff] %vm997, %v4547
      %4573 = vst.msk [vmem:[%s332 + $0xc0] sm:$0xf] %vm1070, %v4548
      %p4574 = scmp.lt.s32.totalorder %s20, 1
      %s4575 = scalar_select %p4574, %s20, 1
      %s4576 = smul.addr %s4575, 25
      %s4577 = smul.addr %s4576, 8
      %s4578 = scalar_lea.vmem %s9, %s4577
      // Predicated region
      $region57: #{tpu_custom_call.1} parent=55 // pred_check
        %p4579 = pneg %p232
      $region58: #{tpu_custom_call.1} parent=55 // pred_check_branch
        %4581 = sbr.rel (%p4579) target = $region60
      $region59: #{tpu_custom_call.1} parent=55 // pred_region
        _
      $region60: #{tpu_custom_call.1} parent=55 // pred_fallthru
        _
    $region56: #{tpu_custom_call.1} parent=5 // pred_fallthru
      _
    %p4582 = scmp.le.s32.totalorder 2, %s15
    // Predicated region
    $region61: #{tpu_custom_call.1} parent=5 // pred_check
      %p4583 = pneg %p4582
    $region62: #{tpu_custom_call.1} parent=5 // pred_check_branch
      %4585 = sbr.rel (%p4583) target = $region64
    $region63: #{tpu_custom_call.1} parent=5 // pred_region
      %s4586 = ssub.s32 %s15, 2
      // Predicated region
      $region65: #{tpu_custom_call.1} parent=63 // pred_check
        %p4587 = pneg %p238
      $region66: #{tpu_custom_call.1} parent=63 // pred_check_branch
        %4589 = sbr.rel (%p4587) target = $region68
      $region67: #{tpu_custom_call.1} parent=63 // pred_region
        %p4590 = scmp.lt.s32.totalorder %s21, 1
        %s4591 = scalar_select %p4590, %s21, 1
        %s4592 = smul.addr %s4591, 25
        %s4593 = smul.addr %s4592, 8
        %s4594 = scalar_lea.vmem %s9, %s4593
      $region68: #{tpu_custom_call.1} parent=63 // pred_fallthru
        _
    $region64: #{tpu_custom_call.1} parent=5 // pred_fallthru
      _
  $region6: #{tpu_custom_call.1} parent=0 // loop_footer
    %s19 = sadd.s32 1, %s15
  $region7: #{tpu_custom_call.1} parent=0 // loop_footer_branch
    %14 = sbr.rel target = $region3
  $region8: #{tpu_custom_call.1} parent=0 // loop_exit
    _

</llo_original>
